<compile_context>
chip_gen: v7x
topology: tpu7x:2x2x1
jax: 0.10.0
libtpu: 0.0.40
codegen_flags: <defaults>
</compile_context>

<pallas_src>
import math

import jax
import jax.numpy as jnp
from jax import lax
from jax.experimental import pallas as pl
from jax.experimental.pallas import tpu as pltpu

# ----------------------------- config (small) -------------------------------
VOCAB = 128        # config.vocab_size
BLOCK_SIZE = 16    # config.block_size
N_LAYER = 2        # config.n_layer
N_HEAD = 2         # config.n_head
N_EMBD = 32        # config.n_embd
HEAD_DIM = N_EMBD // N_HEAD
LN_EPS = 1e-5      # torch.nn.LayerNorm default

# Packed per-layer small-param rows (one (8, 128) slab per layer).
PK_WIDTH = 128
PK_LN1W, PK_LN1B, PK_BQKV, PK_BAP, PK_LN2W, PK_LN2B, PK_BFC, PK_BMP = range(8)
assert 3 * N_EMBD <= PK_WIDTH, "b_qkv row would be truncated; widen PK_WIDTH"
assert 4 * N_EMBD <= PK_WIDTH, "b_fc row would be truncated; widen PK_WIDTH"


# ------------------------------ kernel helpers -------------------------------
def _layer_norm(x, w, b):
    # x: (N, C), w/b: (1, C).  Matches torch LayerNorm (biased var, eps in sqrt).
    mu = jnp.mean(x, axis=-1, keepdims=True)
    xc = x - mu
    var = jnp.mean(xc * xc, axis=-1, keepdims=True)
    return xc * lax.rsqrt(var + LN_EPS) * w + b


def _gelu_tanh(x):
    # tanh-form GELU: transcendental lands on the EUP slot (VALU stays free).
    # Max abs deviation vs exact erf-GELU ~3e-4 at |x|~2; negligible at these scales.
    c = math.sqrt(2.0 / math.pi)
    return 0.5 * x * (1.0 + jnp.tanh(c * (x + 0.044715 * x * x * x)))


# ------------------------- fused full-forward kernel --------------------------
def gpt_fused_kernel(idx_ref, wqkv_ref, wap_ref, wfc_ref, wmp_ref,
                     pk_ref, lnf_ref, wte_ref, wteT_ref, wpe_ref, out_ref):
    # One grid step == one batch chunk of Bb sequences (Bb = B by default).
    Bb, V = out_ref.shape
    N = idx_ref.shape[0]          # Bb * T flattened token rows
    T = N // Bb
    C = wte_ref.shape[1]
    nh, hd = N_HEAD, HEAD_DIM
    scale = 1.0 / math.sqrt(hd)

    # ---- fused embedding: one-hot(idx) @ wte  +  wpe, dropout(p=0) = identity ----
    ids = idx_ref[...]                                             # (N, 1) int32
    vocab_iota = lax.broadcasted_iota(jnp.int32, (N, V), 1)
    onehot = (vocab_iota == ids).astype(jnp.float32)               # (N, V)
    tok = jnp.dot(onehot, wte_ref[...],
                  preferred_element_type=jnp.float32)              # (N, C)
    pos = wpe_ref[0:T, :]                                          # (T, C)
    x = tok + jnp.concatenate([pos] * Bb, axis=0)                  # (N, C)

    # Causal mask: built ONCE, reused by every layer / head.
    row = lax.broadcasted_iota(jnp.int32, (T, T), 0)
    col = lax.broadcasted_iota(jnp.int32, (T, T), 1)
    causal = (row >= col)[None, :, :]                              # (1, T, T)

    for li in range(N_LAYER):                                      # static, unrolled
        pk = pk_ref[li]                                            # (8, 128)
        ln1w = pk[PK_LN1W:PK_LN1W + 1, :C]
        ln1b = pk[PK_LN1B:PK_LN1B + 1, :C]
        b_ap = pk[PK_BAP:PK_BAP + 1, :C]
        ln2w = pk[PK_LN2W:PK_LN2W + 1, :C]
        ln2b = pk[PK_LN2B:PK_LN2B + 1, :C]
        b_fc = pk[PK_BFC:PK_BFC + 1, :4 * C]
        b_mp = pk[PK_BMP:PK_BMP + 1, :C]

        # ---- x + attn(ln_1(x)) : per-head weights, no activation lane-splits ----
        h1 = _layer_norm(x, ln1w, ln1b)                            # (N, C)
        acc = None
        for hh in range(nh):                                       # static, nh small
            wq = wqkv_ref[(li * 3 + 0) * nh + hh]                  # (C, hd)
            wk = wqkv_ref[(li * 3 + 1) * nh + hh]
            wv = wqkv_ref[(li * 3 + 2) * nh + hh]
            bq = pk[PK_BQKV:PK_BQKV + 1, 0 * C + hh * hd:0 * C + (hh + 1) * hd]
            bk = pk[PK_BQKV:PK_BQKV + 1, 1 * C + hh * hd:1 * C + (hh + 1) * hd]
            bv = pk[PK_BQKV:PK_BQKV + 1, 2 * C + hh * hd:2 * C + (hh + 1) * hd]

            q = jnp.dot(h1, wq, preferred_element_type=jnp.float32) + bq   # (N, hd)
            k = jnp.dot(h1, wk, preferred_element_type=jnp.float32) + bk
            v = jnp.dot(h1, wv, preferred_element_type=jnp.float32) + bv

            # (N, hd) -> (Bb, T, hd): split of the sublane axis at the native
            # 8-row tile boundary (T == 8); no lane movement.
            q3 = q.reshape(Bb, T, hd)
            k3 = k.reshape(Bb, T, hd)
            v3 = v.reshape(Bb, T, hd)

            s = jnp.einsum('bqd,bkd->bqk', q3, k3,
                           preferred_element_type=jnp.float32) * scale     # (Bb,T,T)
            s = jnp.where(causal, s, -1e30)
            m = jnp.max(s, axis=-1, keepdims=True)
            e = jnp.exp(s - m)
            denom = jnp.sum(e, axis=-1, keepdims=True)
            p_attn = e * pl.reciprocal(denom, approx=True)                 # EUP slot
            y3 = jnp.einsum('bqk,bkd->bqd', p_attn, v3,
                            preferred_element_type=jnp.float32)            # (Bb,T,hd)

            # Merge heads by accumulating y_h @ Wproj_h (no concat needed).
            part = jnp.dot(y3.reshape(N, hd), wap_ref[li * nh + hh],
                           preferred_element_type=jnp.float32)             # (N, C)
            acc = part if acc is None else acc + part
        x = x + acc + b_ap

        # ---- x + mlp(ln_2(x)) ----
        h2 = _layer_norm(x, ln2w, ln2b)
        f = jnp.dot(h2, wfc_ref[li],
                    preferred_element_type=jnp.float32) + b_fc             # (N, 4C)
        g = _gelu_tanh(f)
        x = x + jnp.dot(g, wmp_ref[li],
                        preferred_element_type=jnp.float32) + b_mp

    # ---- final LayerNorm (last token of each sequence) + tied lm_head ----
    x_last = jnp.concatenate(
        [x[b * T + T - 1:b * T + T, :] for b in range(Bb)], axis=0)        # (Bb, C)
    hf = _layer_norm(x_last, lnf_ref[0:1, :], lnf_ref[1:2, :])
    # logits = hf @ wte^T; wte^T is passed pre-transposed (C, V), so this is a
    # plain MXU matmul and one dense (Bb, 128) store.
    out_ref[...] = jnp.dot(hf, wteT_ref[...], preferred_element_type=jnp.float32)


def gpt_forward(idx, params, *, batch_grid=1):
    # idx: (B, T) int32 token ids.  Returns logits (B, 1, VOCAB) for the last
    # position (the targets=None inference path of GPT.forward).
    # batch_grid=1 folds the whole batch into one grid step (best on v5e/v6e);
    # batch_grid=2 splits the batch across v7x's two TensorCores.
    B, T = idx.shape
    C = N_EMBD
    L = N_LAYER
    assert T <= BLOCK_SIZE, f"sequence length {T} > block_size {BLOCK_SIZE}"
    assert B % batch_grid == 0
    Bb = B // batch_grid

    idx_col = idx.reshape(B * T, 1).astype(jnp.int32)
    wte_t = params['wte'].T                       # tied lm_head weight, (C, V)

    def full(shape):
        nd = len(shape)
        return pl.BlockSpec(shape, lambda g, _nd=nd: (0,) * _nd)

    in_specs = [
        pl.BlockSpec((Bb * T, 1), lambda g: (g, 0)),      # idx rows (per chunk)
        full((L * 3 * N_HEAD, C, HEAD_DIM)),              # per-head qkv weights
        full((L * N_HEAD, HEAD_DIM, C)),                  # per-head attn out-proj
        full((L, C, 4 * C)),                              # w_fc
        full((L, 4 * C, C)),                              # w_mproj
        full((L, 8, PK_WIDTH)),                           # packed LN/bias slab
        full((2, C)),                                     # lnf (w; b)
        full((VOCAB, C)),                                 # wte (embedding)
        full((C, VOCAB)),                                 # wte^T (lm_head)
        full((BLOCK_SIZE, C)),                            # wpe
    ]
    out_spec = pl.BlockSpec((Bb, VOCAB), lambda g: (g, 0))

    logits = pl.pallas_call(
        gpt_fused_kernel,
        grid=(batch_grid,),
        out_shape=jax.ShapeDtypeStruct((B, VOCAB), jnp.float32),
        in_specs=in_specs,
        out_specs=out_spec,
        compiler_params=pltpu.CompilerParams(
            dimension_semantics=("parallel",)),           # batch chunks -> 2 TCs on v7x
    )(idx_col, params['w_qkv_h'], params['w_aproj_h'], params['w_fc'],
      params['w_mproj'], params['pk'], params['lnf'],
      params['wte'], wte_t, params['wpe'])
    return logits[:, None, :]                             # (B, 1, V)
    # TODO(synk): targets/cross-entropy branch and generate() sampling are not
    # implemented (inference targets=None path only).
    # TODO(synk): for scaled-up configs, stream per-layer weights via a layer
    # grid axis / emit_pipeline and feed bf16 to the MXU (kept f32 at toy size).


# ------------------------------ parameter init -------------------------------
def init_params(key):
    C = N_EMBD
    L = N_LAYER
    nh, hd = N_HEAD, HEAD_DIM
    std = 0.02
    proj_std = 0.02 / math.sqrt(2 * L)                    # c_proj.weight special init
    ks = iter(jax.random.split(key, 2 + 4 * L))

    wte = std * jax.random.normal(next(ks), (VOCAB, C), jnp.float32)
    wpe = std * jax.random.normal(next(ks), (BLOCK_SIZE, C), jnp.float32)

    w_qkv, w_ap, w_fc, w_mp, pk = [], [], [], [], []
    for _ in range(L):
        # torch Linear weights are (out, in); store transposed (in, out).
        w_qkv.append((std * jax.random.normal(next(ks), (3 * C, C), jnp.float32)).T)
        w_ap.append((proj_std * jax.random.normal(next(ks), (C, C), jnp.float32)).T)
        w_fc.append((std * jax.random.normal(next(ks), (4 * C, C), jnp.float32)).T)
        w_mp.append((proj_std * jax.random.normal(next(ks), (C, 4 * C), jnp.float32)).T)
        rows = [
            jnp.ones((C,), jnp.float32),        # ln1_w
            jnp.zeros((C,), jnp.float32),       # ln1_b
            jnp.zeros((3 * C,), jnp.float32),   # b_qkv
            jnp.zeros((C,), jnp.float32),       # b_aproj
            jnp.ones((C,), jnp.float32),        # ln2_w
            jnp.zeros((C,), jnp.float32),       # ln2_b
            jnp.zeros((4 * C,), jnp.float32),   # b_fc
            jnp.zeros((C,), jnp.float32),       # b_mproj
        ]
        pk.append(jnp.stack([jnp.pad(r, (0, PK_WIDTH - r.shape[0])) for r in rows]))

    w_qkv = jnp.stack(w_qkv)                    # (L, C, 3C), column = qkv*C + h*hd + d
    w_ap = jnp.stack(w_ap)                      # (L, C, C)

    # Kernel layouts: per-head q/k/v projections and per-head out-projection rows.
    w_qkv_h = (w_qkv.reshape(L, C, 3, nh, hd)
                     .transpose(0, 2, 3, 1, 4)
                     .reshape(L * 3 * nh, C, hd))
    w_ap_h = w_ap.reshape(L * nh, hd, C)

    return {
        'wte': wte, 'wpe': wpe,
        'w_qkv': w_qkv, 'w_aproj': w_ap,                  # canonical (reference)
        'w_qkv_h': w_qkv_h, 'w_aproj_h': w_ap_h,          # kernel layouts
        'w_fc': jnp.stack(w_fc), 'w_mproj': jnp.stack(w_mp),
        'pk': jnp.stack(pk),                              # (L, 8, 128)
        'lnf': jnp.stack([jnp.ones((C,), jnp.float32),
                          jnp.zeros((C,), jnp.float32)]),  # (2, C)
    }


# ------------------------------ pure-JAX reference ---------------------------
def _ref_ln(x, w, b):
    mu = jnp.mean(x, axis=-1, keepdims=True)
    var = jnp.mean((x - mu) ** 2, axis=-1, keepdims=True)
    return (x - mu) / jnp.sqrt(var + LN_EPS) * w + b


def reference_forward(idx, params):
    B, T = idx.shape
    C, nh, hd = N_EMBD, N_HEAD, HEAD_DIM
    x = params['wte'][idx] + params['wpe'][:T][None]
    for li in range(N_LAYER):
        pk = params['pk'][li]
        ln1w, ln1b = pk[PK_LN1W, :C], pk[PK_LN1B, :C]
        b_qkv, b_ap = pk[PK_BQKV, :3 * C], pk[PK_BAP, :C]
        ln2w, ln2b = pk[PK_LN2W, :C], pk[PK_LN2B, :C]
        b_fc, b_mp = pk[PK_BFC, :4 * C], pk[PK_BMP, :C]

        h = _ref_ln(x, ln1w, ln1b)
        qkv = h @ params['w_qkv'][li] + b_qkv
        q, k, v = jnp.split(qkv, 3, axis=-1)
        q = q.reshape(B, T, nh, hd).transpose(0, 2, 1, 3)
        k = k.reshape(B, T, nh, hd).transpose(0, 2, 1, 3)
        v = v.reshape(B, T, nh, hd).transpose(0, 2, 1, 3)
        s = jnp.einsum('bhqd,bhkd->bhqk', q, k) / math.sqrt(hd)
        causal = jnp.tril(jnp.ones((T, T), bool))
        s = jnp.where(causal[None, None], s, -jnp.inf)
        a = jax.nn.softmax(s, axis=-1)
        y = jnp.einsum('bhqk,bhkd->bhqd', a, v)
        y = y.transpose(0, 2, 1, 3).reshape(B, T, C)
        x = x + (y @ params['w_aproj'][li] + b_ap)

        h2 = _ref_ln(x, ln2w, ln2b)
        f = jax.nn.gelu(h2 @ params['w_fc'][li] + b_fc, approximate=False)
        x = x + (f @ params['w_mproj'][li] + b_mp)
    xf = _ref_ln(x, params['lnf'][0], params['lnf'][1])
    logits = xf[:, -1:, :] @ params['wte'].T
    return logits


# ----------------------------------- main ------------------------------------
if __name__ == "__main__":
    key = jax.random.PRNGKey(0)
    k_param, k_idx = jax.random.split(key)
    params = init_params(k_param)

    B, T = 2, 8
    idx = jax.random.randint(k_idx, (B, T), 0, VOCAB, dtype=jnp.int32)

    fwd = jax.jit(gpt_forward)
    logits = jax.block_until_ready(fwd(idx, params))
    assert logits.shape == (B, 1, VOCAB), logits.shape

    ref = reference_forward(idx, params)
    max_err = float(jnp.max(jnp.abs(logits - ref)))
    assert max_err < 1e-3, f"mismatch vs reference: {max_err}"

    print("KERNEL_OK")
</pallas_src>

<mosaic_0001>
module attributes {stable_mosaic.version = 11 : i64} {
  func.func @gpt_fused_kernel(%arg0: i32, %arg1: memref<16x1xi32, #tpu.memory_space<vmem>>, %arg2: memref<12x32x16xf32, #tpu.memory_space<vmem>>, %arg3: memref<4x16x32xf32, #tpu.memory_space<vmem>>, %arg4: memref<2x32x128xf32, #tpu.memory_space<vmem>>, %arg5: memref<2x128x32xf32, #tpu.memory_space<vmem>>, %arg6: memref<2x8x128xf32, #tpu.memory_space<vmem>>, %arg7: memref<2x32xf32, #tpu.memory_space<vmem>>, %arg8: memref<128x32xf32, #tpu.memory_space<vmem>>, %arg9: memref<32x128xf32, #tpu.memory_space<vmem>>, %arg10: memref<16x32xf32, #tpu.memory_space<vmem>>, %arg11: memref<2x128xf32, #tpu.memory_space<vmem>>) attributes {dimension_semantics = [#tpu.dimension_semantics<parallel>], iteration_bounds = array<i64: 1>, scalar_prefetch = 0 : i64, scratch_operands = 0 : i64, tpu.core_type = #tpu.core_type<tc>, window_params = [{transform_indices = @transform_0, window_bounds = array<i64: 16, 1>}, {pipeline_mode = #tpu.pipeline_mode<synchronous>, transform_indices = @transform_1, window_bounds = array<i64: 12, 32, 16>}, {pipeline_mode = #tpu.pipeline_mode<synchronous>, transform_indices = @transform_2, window_bounds = array<i64: 4, 16, 32>}, {pipeline_mode = #tpu.pipeline_mode<synchronous>, transform_indices = @transform_3, window_bounds = array<i64: 2, 32, 128>}, {pipeline_mode = #tpu.pipeline_mode<synchronous>, transform_indices = @transform_4, window_bounds = array<i64: 2, 128, 32>}, {pipeline_mode = #tpu.pipeline_mode<synchronous>, transform_indices = @transform_5, window_bounds = array<i64: 2, 8, 128>}, {pipeline_mode = #tpu.pipeline_mode<synchronous>, transform_indices = @transform_6, window_bounds = array<i64: 2, 32>}, {pipeline_mode = #tpu.pipeline_mode<synchronous>, transform_indices = @transform_7, window_bounds = array<i64: 128, 32>}, {pipeline_mode = #tpu.pipeline_mode<synchronous>, transform_indices = @transform_8, window_bounds = array<i64: 32, 128>}, {pipeline_mode = #tpu.pipeline_mode<synchronous>, transform_indices = @transform_9, window_bounds = array<i64: 16, 32>}, {transform_indices = @transform_10, window_bounds = array<i64: 2, 128>}]} {
    %c0 = arith.constant 0 : index
    %c0_0 = arith.constant 0 : index
    %0 = vector.load %arg1[%c0, %c0_0] : memref<16x1xi32, #tpu.memory_space<vmem>>, vector<16x1xi32>
    %1 = tpu.iota {dimensions = array<i32: 1>} : vector<16x128xi32>
    %2 = vector.broadcast %0 : vector<16x1xi32> to vector<16x128xi32>
    %3 = arith.cmpi eq, %1, %2 : vector<16x128xi32>
    %4 = arith.extui %3 : vector<16x128xi1> to vector<16x128xi32>
    %5 = arith.sitofp %4 : vector<16x128xi32> to vector<16x128xf32>
    %c0_1 = arith.constant 0 : index
    %c0_2 = arith.constant 0 : index
    %6 = vector.load %arg8[%c0_1, %c0_2] : memref<128x32xf32, #tpu.memory_space<vmem>>, vector<128x32xf32>
    %cst = arith.constant dense<0.000000e+00> : vector<16x32xf32>
    %7 = tpu.matmul %5, %6, %cst {dimension_numbers = #tpu.dot_dimension_numbers<[1], [0], [0], [1], [0, 0, 1, 1], [], []>} : vector<16x128xf32>, vector<128x32xf32>, vector<16x32xf32> -> vector<16x32xf32>
    %c0_3 = arith.constant 0 : index
    %c0_4 = arith.constant 0 : index
    %8 = vector.load %arg10[%c0_3, %c0_4] : memref<16x32xf32, #tpu.memory_space<vmem>>, vector<8x32xf32>
    %9 = tpu.concatenate %8, %8 in 0 : vector<8x32xf32>, vector<8x32xf32> -> vector<16x32xf32>
    %10 = arith.addf %7, %9 : vector<16x32xf32>
    %11 = tpu.iota {dimensions = array<i32: 0>} : vector<8x8xi32>
    %12 = tpu.iota {dimensions = array<i32: 1>} : vector<8x8xi32>
    %13 = arith.cmpi sge, %11, %12 : vector<8x8xi32>
    %14 = vector.shape_cast %13 : vector<8x8xi1> to vector<1x8x8xi1>
    %c0_5 = arith.constant 0 : index
    %c0_6 = arith.constant 0 : index
    %c0_7 = arith.constant 0 : index
    %15 = vector.load %arg6[%c0_5, %c0_6, %c0_7] : memref<2x8x128xf32, #tpu.memory_space<vmem>>, vector<1x8x128xf32>
    %16 = vector.shape_cast %15 : vector<1x8x128xf32> to vector<8x128xf32>
    %17 = vector.extract_strided_slice %16 {offsets = [0, 0], sizes = [1, 32], strides = [1, 1]} : vector<8x128xf32> to vector<1x32xf32>
    %18 = vector.extract_strided_slice %16 {offsets = [1, 0], sizes = [1, 32], strides = [1, 1]} : vector<8x128xf32> to vector<1x32xf32>
    %19 = vector.extract_strided_slice %16 {offsets = [3, 0], sizes = [1, 32], strides = [1, 1]} : vector<8x128xf32> to vector<1x32xf32>
    %20 = vector.extract_strided_slice %16 {offsets = [4, 0], sizes = [1, 32], strides = [1, 1]} : vector<8x128xf32> to vector<1x32xf32>
    %21 = vector.extract_strided_slice %16 {offsets = [5, 0], sizes = [1, 32], strides = [1, 1]} : vector<8x128xf32> to vector<1x32xf32>
    %22 = vector.extract_strided_slice %16 {offsets = [6, 0], sizes = [1, 128], strides = [1, 1]} : vector<8x128xf32> to vector<1x128xf32>
    %23 = vector.extract_strided_slice %16 {offsets = [7, 0], sizes = [1, 32], strides = [1, 1]} : vector<8x128xf32> to vector<1x32xf32>
    %cst_8 = arith.constant dense<0.000000e+00> : vector<16xf32>
    %24 = vector.multi_reduction <add>, %10, %cst_8 [1] : vector<16x32xf32> to vector<16xf32>
    %25 = vector.shape_cast %24 : vector<16xf32> to vector<16x1xf32>
    %cst_9 = arith.constant 3.200000e+01 : f32
    %26 = vector.broadcast %cst_9 : f32 to vector<16x1xf32>
    %27 = arith.divf %25, %26 : vector<16x1xf32>
    %28 = vector.broadcast %27 : vector<16x1xf32> to vector<16x32xf32>
    %29 = arith.subf %10, %28 : vector<16x32xf32>
    %30 = arith.mulf %29, %29 : vector<16x32xf32>
    %cst_10 = arith.constant dense<0.000000e+00> : vector<16xf32>
    %31 = vector.multi_reduction <add>, %30, %cst_10 [1] : vector<16x32xf32> to vector<16xf32>
    %32 = vector.shape_cast %31 : vector<16xf32> to vector<16x1xf32>
    %cst_11 = arith.constant 3.200000e+01 : f32
    %33 = vector.broadcast %cst_11 : f32 to vector<16x1xf32>
    %34 = arith.divf %32, %33 : vector<16x1xf32>
    %cst_12 = arith.constant 9.99999974E-6 : f32
    %35 = vector.broadcast %cst_12 : f32 to vector<16x1xf32>
    %36 = arith.addf %34, %35 : vector<16x1xf32>
    %37 = math.rsqrt %36 : vector<16x1xf32>
    %38 = vector.broadcast %37 : vector<16x1xf32> to vector<16x32xf32>
    %39 = arith.mulf %29, %38 : vector<16x32xf32>
    %40 = vector.broadcast %17 : vector<1x32xf32> to vector<16x32xf32>
    %41 = arith.mulf %39, %40 : vector<16x32xf32>
    %42 = vector.broadcast %18 : vector<1x32xf32> to vector<16x32xf32>
    %43 = arith.addf %41, %42 : vector<16x32xf32>
    %c0_13 = arith.constant 0 : index
    %c0_14 = arith.constant 0 : index
    %c0_15 = arith.constant 0 : index
    %44 = vector.load %arg2[%c0_13, %c0_14, %c0_15] : memref<12x32x16xf32, #tpu.memory_space<vmem>>, vector<1x32x16xf32>
    %45 = vector.shape_cast %44 : vector<1x32x16xf32> to vector<32x16xf32>
    %c2 = arith.constant 2 : index
    %c0_16 = arith.constant 0 : index
    %c0_17 = arith.constant 0 : index
    %46 = vector.load %arg2[%c2, %c0_16, %c0_17] : memref<12x32x16xf32, #tpu.memory_space<vmem>>, vector<1x32x16xf32>
    %47 = vector.shape_cast %46 : vector<1x32x16xf32> to vector<32x16xf32>
    %c4 = arith.constant 4 : index
    %c0_18 = arith.constant 0 : index
    %c0_19 = arith.constant 0 : index
    %48 = vector.load %arg2[%c4, %c0_18, %c0_19] : memref<12x32x16xf32, #tpu.memory_space<vmem>>, vector<1x32x16xf32>
    %49 = vector.shape_cast %48 : vector<1x32x16xf32> to vector<32x16xf32>
    %50 = vector.extract_strided_slice %16 {offsets = [2, 0], sizes = [1, 16], strides = [1, 1]} : vector<8x128xf32> to vector<1x16xf32>
    %51 = vector.extract_strided_slice %16 {offsets = [2, 32], sizes = [1, 16], strides = [1, 1]} : vector<8x128xf32> to vector<1x16xf32>
    %52 = vector.extract_strided_slice %16 {offsets = [2, 64], sizes = [1, 16], strides = [1, 1]} : vector<8x128xf32> to vector<1x16xf32>
    %cst_20 = arith.constant dense<0.000000e+00> : vector<16x16xf32>
    %53 = tpu.matmul %43, %45, %cst_20 {dimension_numbers = #tpu.dot_dimension_numbers<[1], [0], [0], [1], [0, 0, 1, 1], [], []>} : vector<16x32xf32>, vector<32x16xf32>, vector<16x16xf32> -> vector<16x16xf32>
    %54 = vector.broadcast %50 : vector<1x16xf32> to vector<16x16xf32>
    %55 = arith.addf %53, %54 : vector<16x16xf32>
    %cst_21 = arith.constant dense<0.000000e+00> : vector<16x16xf32>
    %56 = tpu.matmul %43, %47, %cst_21 {dimension_numbers = #tpu.dot_dimension_numbers<[1], [0], [0], [1], [0, 0, 1, 1], [], []>} : vector<16x32xf32>, vector<32x16xf32>, vector<16x16xf32> -> vector<16x16xf32>
    %57 = vector.broadcast %51 : vector<1x16xf32> to vector<16x16xf32>
    %58 = arith.addf %56, %57 : vector<16x16xf32>
    %cst_22 = arith.constant dense<0.000000e+00> : vector<16x16xf32>
    %59 = tpu.matmul %43, %49, %cst_22 {dimension_numbers = #tpu.dot_dimension_numbers<[1], [0], [0], [1], [0, 0, 1, 1], [], []>} : vector<16x32xf32>, vector<32x16xf32>, vector<16x16xf32> -> vector<16x16xf32>
    %60 = vector.broadcast %52 : vector<1x16xf32> to vector<16x16xf32>
    %61 = arith.addf %59, %60 : vector<16x16xf32>
    %62 = vector.shape_cast %55 : vector<16x16xf32> to vector<2x8x16xf32>
    %63 = vector.shape_cast %58 : vector<16x16xf32> to vector<2x8x16xf32>
    %64 = vector.shape_cast %61 : vector<16x16xf32> to vector<2x8x16xf32>
    "tpu.trace_start"() <{level = 10 : i32, message = "bqd,bkd->bqk"}> : () -> ()
    %cst_23 = arith.constant dense<0.000000e+00> : vector<2x8x8xf32>
    %65 = tpu.matmul %62, %63, %cst_23 {dimension_numbers = #tpu.dot_dimension_numbers<[2], [2], [1], [1], [0, 0, 0, 1, 1, 1], [0], [0]>} : vector<2x8x16xf32>, vector<2x8x16xf32>, vector<2x8x8xf32> -> vector<2x8x8xf32>
    "tpu.trace_stop"() : () -> ()
    %cst_24 = arith.constant 2.500000e-01 : f32
    %66 = vector.broadcast %cst_24 : f32 to vector<2x8x8xf32>
    %67 = arith.mulf %65, %66 : vector<2x8x8xf32>
    %cst_25 = arith.constant -1.000000e+30 : f32
    %68 = vector.shape_cast %14 : vector<1x8x8xi1> to vector<1x8x8xi1>
    %69 = vector.broadcast %68 : vector<1x8x8xi1> to vector<2x8x8xi1>
    %70 = vector.broadcast %cst_25 : f32 to vector<2x8x8xf32>
    %71 = arith.select %69, %67, %70 : vector<2x8x8xi1>, vector<2x8x8xf32>
    %cst_26 = arith.constant dense<0xFF800000> : vector<2x8xf32>
    %72 = vector.multi_reduction <maximumf>, %71, %cst_26 [2] : vector<2x8x8xf32> to vector<2x8xf32>
    %73 = vector.shape_cast %72 : vector<2x8xf32> to vector<2x8x1xf32>
    %74 = vector.broadcast %73 : vector<2x8x1xf32> to vector<2x8x8xf32>
    %75 = arith.subf %71, %74 : vector<2x8x8xf32>
    %76 = math.exp %75 : vector<2x8x8xf32>
    %cst_27 = arith.constant dense<0.000000e+00> : vector<2x8xf32>
    %77 = vector.multi_reduction <add>, %76, %cst_27 [2] : vector<2x8x8xf32> to vector<2x8xf32>
    %78 = vector.shape_cast %77 : vector<2x8xf32> to vector<2x8x1xf32>
    %79 = tpu.reciprocal %78 {approx = true} : vector<2x8x1xf32> -> vector<2x8x1xf32>
    %80 = vector.broadcast %79 : vector<2x8x1xf32> to vector<2x8x8xf32>
    %81 = arith.mulf %76, %80 : vector<2x8x8xf32>
    "tpu.trace_start"() <{level = 10 : i32, message = "bqk,bkd->bqd"}> : () -> ()
    %cst_28 = arith.constant dense<0.000000e+00> : vector<2x8x16xf32>
    %82 = tpu.matmul %81, %64, %cst_28 {dimension_numbers = #tpu.dot_dimension_numbers<[2], [1], [1], [2], [0, 0, 0, 1, 1, 2], [0], [0]>} : vector<2x8x8xf32>, vector<2x8x16xf32>, vector<2x8x16xf32> -> vector<2x8x16xf32>
    "tpu.trace_stop"() : () -> ()
    %83 = vector.shape_cast %82 : vector<2x8x16xf32> to vector<16x16xf32>
    %c0_29 = arith.constant 0 : index
    %c0_30 = arith.constant 0 : index
    %c0_31 = arith.constant 0 : index
    %84 = vector.load %arg3[%c0_29, %c0_30, %c0_31] : memref<4x16x32xf32, #tpu.memory_space<vmem>>, vector<1x16x32xf32>
    %85 = vector.shape_cast %84 : vector<1x16x32xf32> to vector<16x32xf32>
    %cst_32 = arith.constant dense<0.000000e+00> : vector<16x32xf32>
    %86 = tpu.matmul %83, %85, %cst_32 {dimension_numbers = #tpu.dot_dimension_numbers<[1], [0], [0], [1], [0, 0, 1, 1], [], []>} : vector<16x16xf32>, vector<16x32xf32>, vector<16x32xf32> -> vector<16x32xf32>
    %c1 = arith.constant 1 : index
    %c0_33 = arith.constant 0 : index
    %c0_34 = arith.constant 0 : index
    %87 = vector.load %arg2[%c1, %c0_33, %c0_34] : memref<12x32x16xf32, #tpu.memory_space<vmem>>, vector<1x32x16xf32>
    %88 = vector.shape_cast %87 : vector<1x32x16xf32> to vector<32x16xf32>
    %c3 = arith.constant 3 : index
    %c0_35 = arith.constant 0 : index
    %c0_36 = arith.constant 0 : index
    %89 = vector.load %arg2[%c3, %c0_35, %c0_36] : memref<12x32x16xf32, #tpu.memory_space<vmem>>, vector<1x32x16xf32>
    %90 = vector.shape_cast %89 : vector<1x32x16xf32> to vector<32x16xf32>
    %c5 = arith.constant 5 : index
    %c0_37 = arith.constant 0 : index
    %c0_38 = arith.constant 0 : index
    %91 = vector.load %arg2[%c5, %c0_37, %c0_38] : memref<12x32x16xf32, #tpu.memory_space<vmem>>, vector<1x32x16xf32>
    %92 = vector.shape_cast %91 : vector<1x32x16xf32> to vector<32x16xf32>
    %93 = vector.extract_strided_slice %16 {offsets = [2, 16], sizes = [1, 16], strides = [1, 1]} : vector<8x128xf32> to vector<1x16xf32>
    %94 = vector.extract_strided_slice %16 {offsets = [2, 48], sizes = [1, 16], strides = [1, 1]} : vector<8x128xf32> to vector<1x16xf32>
    %95 = vector.extract_strided_slice %16 {offsets = [2, 80], sizes = [1, 16], strides = [1, 1]} : vector<8x128xf32> to vector<1x16xf32>
    %cst_39 = arith.constant dense<0.000000e+00> : vector<16x16xf32>
    %96 = tpu.matmul %43, %88, %cst_39 {dimension_numbers = #tpu.dot_dimension_numbers<[1], [0], [0], [1], [0, 0, 1, 1], [], []>} : vector<16x32xf32>, vector<32x16xf32>, vector<16x16xf32> -> vector<16x16xf32>
    %97 = vector.broadcast %93 : vector<1x16xf32> to vector<16x16xf32>
    %98 = arith.addf %96, %97 : vector<16x16xf32>
    %cst_40 = arith.constant dense<0.000000e+00> : vector<16x16xf32>
    %99 = tpu.matmul %43, %90, %cst_40 {dimension_numbers = #tpu.dot_dimension_numbers<[1], [0], [0], [1], [0, 0, 1, 1], [], []>} : vector<16x32xf32>, vector<32x16xf32>, vector<16x16xf32> -> vector<16x16xf32>
    %100 = vector.broadcast %94 : vector<1x16xf32> to vector<16x16xf32>
    %101 = arith.addf %99, %100 : vector<16x16xf32>
    %cst_41 = arith.constant dense<0.000000e+00> : vector<16x16xf32>
    %102 = tpu.matmul %43, %92, %cst_41 {dimension_numbers = #tpu.dot_dimension_numbers<[1], [0], [0], [1], [0, 0, 1, 1], [], []>} : vector<16x32xf32>, vector<32x16xf32>, vector<16x16xf32> -> vector<16x16xf32>
    %103 = vector.broadcast %95 : vector<1x16xf32> to vector<16x16xf32>
    %104 = arith.addf %102, %103 : vector<16x16xf32>
    %105 = vector.shape_cast %98 : vector<16x16xf32> to vector<2x8x16xf32>
    %106 = vector.shape_cast %101 : vector<16x16xf32> to vector<2x8x16xf32>
    %107 = vector.shape_cast %104 : vector<16x16xf32> to vector<2x8x16xf32>
    "tpu.trace_start"() <{level = 10 : i32, message = "bqd,bkd->bqk"}> : () -> ()
    %cst_42 = arith.constant dense<0.000000e+00> : vector<2x8x8xf32>
    %108 = tpu.matmul %105, %106, %cst_42 {dimension_numbers = #tpu.dot_dimension_numbers<[2], [2], [1], [1], [0, 0, 0, 1, 1, 1], [0], [0]>} : vector<2x8x16xf32>, vector<2x8x16xf32>, vector<2x8x8xf32> -> vector<2x8x8xf32>
    "tpu.trace_stop"() : () -> ()
    %cst_43 = arith.constant 2.500000e-01 : f32
    %109 = vector.broadcast %cst_43 : f32 to vector<2x8x8xf32>
    %110 = arith.mulf %108, %109 : vector<2x8x8xf32>
    %cst_44 = arith.constant -1.000000e+30 : f32
    %111 = vector.shape_cast %14 : vector<1x8x8xi1> to vector<1x8x8xi1>
    %112 = vector.broadcast %111 : vector<1x8x8xi1> to vector<2x8x8xi1>
    %113 = vector.broadcast %cst_44 : f32 to vector<2x8x8xf32>
    %114 = arith.select %112, %110, %113 : vector<2x8x8xi1>, vector<2x8x8xf32>
    %cst_45 = arith.constant dense<0xFF800000> : vector<2x8xf32>
    %115 = vector.multi_reduction <maximumf>, %114, %cst_45 [2] : vector<2x8x8xf32> to vector<2x8xf32>
    %116 = vector.shape_cast %115 : vector<2x8xf32> to vector<2x8x1xf32>
    %117 = vector.broadcast %116 : vector<2x8x1xf32> to vector<2x8x8xf32>
    %118 = arith.subf %114, %117 : vector<2x8x8xf32>
    %119 = math.exp %118 : vector<2x8x8xf32>
    %cst_46 = arith.constant dense<0.000000e+00> : vector<2x8xf32>
    %120 = vector.multi_reduction <add>, %119, %cst_46 [2] : vector<2x8x8xf32> to vector<2x8xf32>
    %121 = vector.shape_cast %120 : vector<2x8xf32> to vector<2x8x1xf32>
    %122 = tpu.reciprocal %121 {approx = true} : vector<2x8x1xf32> -> vector<2x8x1xf32>
    %123 = vector.broadcast %122 : vector<2x8x1xf32> to vector<2x8x8xf32>
    %124 = arith.mulf %119, %123 : vector<2x8x8xf32>
    "tpu.trace_start"() <{level = 10 : i32, message = "bqk,bkd->bqd"}> : () -> ()
    %cst_47 = arith.constant dense<0.000000e+00> : vector<2x8x16xf32>
    %125 = tpu.matmul %124, %107, %cst_47 {dimension_numbers = #tpu.dot_dimension_numbers<[2], [1], [1], [2], [0, 0, 0, 1, 1, 2], [0], [0]>} : vector<2x8x8xf32>, vector<2x8x16xf32>, vector<2x8x16xf32> -> vector<2x8x16xf32>
    "tpu.trace_stop"() : () -> ()
    %126 = vector.shape_cast %125 : vector<2x8x16xf32> to vector<16x16xf32>
    %c1_48 = arith.constant 1 : index
    %c0_49 = arith.constant 0 : index
    %c0_50 = arith.constant 0 : index
    %127 = vector.load %arg3[%c1_48, %c0_49, %c0_50] : memref<4x16x32xf32, #tpu.memory_space<vmem>>, vector<1x16x32xf32>
    %128 = vector.shape_cast %127 : vector<1x16x32xf32> to vector<16x32xf32>
    %cst_51 = arith.constant dense<0.000000e+00> : vector<16x32xf32>
    %129 = tpu.matmul %126, %128, %cst_51 {dimension_numbers = #tpu.dot_dimension_numbers<[1], [0], [0], [1], [0, 0, 1, 1], [], []>} : vector<16x16xf32>, vector<16x32xf32>, vector<16x32xf32> -> vector<16x32xf32>
    %130 = arith.addf %86, %129 : vector<16x32xf32>
    %131 = arith.addf %10, %130 : vector<16x32xf32>
    %132 = vector.broadcast %19 : vector<1x32xf32> to vector<16x32xf32>
    %133 = arith.addf %131, %132 : vector<16x32xf32>
    %cst_52 = arith.constant dense<0.000000e+00> : vector<16xf32>
    %134 = vector.multi_reduction <add>, %133, %cst_52 [1] : vector<16x32xf32> to vector<16xf32>
    %135 = vector.shape_cast %134 : vector<16xf32> to vector<16x1xf32>
    %cst_53 = arith.constant 3.200000e+01 : f32
    %136 = vector.broadcast %cst_53 : f32 to vector<16x1xf32>
    %137 = arith.divf %135, %136 : vector<16x1xf32>
    %138 = vector.broadcast %137 : vector<16x1xf32> to vector<16x32xf32>
    %139 = arith.subf %133, %138 : vector<16x32xf32>
    %140 = arith.mulf %139, %139 : vector<16x32xf32>
    %cst_54 = arith.constant dense<0.000000e+00> : vector<16xf32>
    %141 = vector.multi_reduction <add>, %140, %cst_54 [1] : vector<16x32xf32> to vector<16xf32>
    %142 = vector.shape_cast %141 : vector<16xf32> to vector<16x1xf32>
    %cst_55 = arith.constant 3.200000e+01 : f32
    %143 = vector.broadcast %cst_55 : f32 to vector<16x1xf32>
    %144 = arith.divf %142, %143 : vector<16x1xf32>
    %cst_56 = arith.constant 9.99999974E-6 : f32
    %145 = vector.broadcast %cst_56 : f32 to vector<16x1xf32>
    %146 = arith.addf %144, %145 : vector<16x1xf32>
    %147 = math.rsqrt %146 : vector<16x1xf32>
    %148 = vector.broadcast %147 : vector<16x1xf32> to vector<16x32xf32>
    %149 = arith.mulf %139, %148 : vector<16x32xf32>
    %150 = vector.broadcast %20 : vector<1x32xf32> to vector<16x32xf32>
    %151 = arith.mulf %149, %150 : vector<16x32xf32>
    %152 = vector.broadcast %21 : vector<1x32xf32> to vector<16x32xf32>
    %153 = arith.addf %151, %152 : vector<16x32xf32>
    %c0_57 = arith.constant 0 : index
    %c0_58 = arith.constant 0 : index
    %c0_59 = arith.constant 0 : index
    %154 = vector.load %arg4[%c0_57, %c0_58, %c0_59] : memref<2x32x128xf32, #tpu.memory_space<vmem>>, vector<1x32x128xf32>
    %155 = vector.shape_cast %154 : vector<1x32x128xf32> to vector<32x128xf32>
    %cst_60 = arith.constant dense<0.000000e+00> : vector<16x128xf32>
    %156 = tpu.matmul %153, %155, %cst_60 {dimension_numbers = #tpu.dot_dimension_numbers<[1], [0], [0], [1], [0, 0, 1, 1], [], []>} : vector<16x32xf32>, vector<32x128xf32>, vector<16x128xf32> -> vector<16x128xf32>
    %157 = vector.broadcast %22 : vector<1x128xf32> to vector<16x128xf32>
    %158 = arith.addf %156, %157 : vector<16x128xf32>
    %cst_61 = arith.constant 5.000000e-01 : f32
    %159 = vector.broadcast %cst_61 : f32 to vector<16x128xf32>
    %160 = arith.mulf %159, %158 : vector<16x128xf32>
    %cst_62 = arith.constant 4.471500e-02 : f32
    %161 = vector.broadcast %cst_62 : f32 to vector<16x128xf32>
    %162 = arith.mulf %161, %158 : vector<16x128xf32>
    %163 = arith.mulf %162, %158 : vector<16x128xf32>
    %164 = arith.mulf %163, %158 : vector<16x128xf32>
    %165 = arith.addf %158, %164 : vector<16x128xf32>
    %cst_63 = arith.constant 0.797884583 : f32
    %166 = vector.broadcast %cst_63 : f32 to vector<16x128xf32>
    %167 = arith.mulf %166, %165 : vector<16x128xf32>
    %168 = math.tanh %167 : vector<16x128xf32>
    %cst_64 = arith.constant 1.000000e+00 : f32
    %169 = vector.broadcast %cst_64 : f32 to vector<16x128xf32>
    %170 = arith.addf %169, %168 : vector<16x128xf32>
    %171 = arith.mulf %160, %170 : vector<16x128xf32>
    %c0_65 = arith.constant 0 : index
    %c0_66 = arith.constant 0 : index
    %c0_67 = arith.constant 0 : index
    %172 = vector.load %arg5[%c0_65, %c0_66, %c0_67] : memref<2x128x32xf32, #tpu.memory_space<vmem>>, vector<1x128x32xf32>
    %173 = vector.shape_cast %172 : vector<1x128x32xf32> to vector<128x32xf32>
    %cst_68 = arith.constant dense<0.000000e+00> : vector<16x32xf32>
    %174 = tpu.matmul %171, %173, %cst_68 {dimension_numbers = #tpu.dot_dimension_numbers<[1], [0], [0], [1], [0, 0, 1, 1], [], []>} : vector<16x128xf32>, vector<128x32xf32>, vector<16x32xf32> -> vector<16x32xf32>
    %175 = arith.addf %133, %174 : vector<16x32xf32>
    %176 = vector.broadcast %23 : vector<1x32xf32> to vector<16x32xf32>
    %177 = arith.addf %175, %176 : vector<16x32xf32>
    %c1_69 = arith.constant 1 : index
    %c0_70 = arith.constant 0 : index
    %c0_71 = arith.constant 0 : index
    %178 = vector.load %arg6[%c1_69, %c0_70, %c0_71] : memref<2x8x128xf32, #tpu.memory_space<vmem>>, vector<1x8x128xf32>
    %179 = vector.shape_cast %178 : vector<1x8x128xf32> to vector<8x128xf32>
    %180 = vector.extract_strided_slice %179 {offsets = [0, 0], sizes = [1, 32], strides = [1, 1]} : vector<8x128xf32> to vector<1x32xf32>
    %181 = vector.extract_strided_slice %179 {offsets = [1, 0], sizes = [1, 32], strides = [1, 1]} : vector<8x128xf32> to vector<1x32xf32>
    %182 = vector.extract_strided_slice %179 {offsets = [3, 0], sizes = [1, 32], strides = [1, 1]} : vector<8x128xf32> to vector<1x32xf32>
    %183 = vector.extract_strided_slice %179 {offsets = [4, 0], sizes = [1, 32], strides = [1, 1]} : vector<8x128xf32> to vector<1x32xf32>
    %184 = vector.extract_strided_slice %179 {offsets = [5, 0], sizes = [1, 32], strides = [1, 1]} : vector<8x128xf32> to vector<1x32xf32>
    %185 = vector.extract_strided_slice %179 {offsets = [6, 0], sizes = [1, 128], strides = [1, 1]} : vector<8x128xf32> to vector<1x128xf32>
    %186 = vector.extract_strided_slice %179 {offsets = [7, 0], sizes = [1, 32], strides = [1, 1]} : vector<8x128xf32> to vector<1x32xf32>
    %cst_72 = arith.constant dense<0.000000e+00> : vector<16xf32>
    %187 = vector.multi_reduction <add>, %177, %cst_72 [1] : vector<16x32xf32> to vector<16xf32>
    %188 = vector.shape_cast %187 : vector<16xf32> to vector<16x1xf32>
    %cst_73 = arith.constant 3.200000e+01 : f32
    %189 = vector.broadcast %cst_73 : f32 to vector<16x1xf32>
    %190 = arith.divf %188, %189 : vector<16x1xf32>
    %191 = vector.broadcast %190 : vector<16x1xf32> to vector<16x32xf32>
    %192 = arith.subf %177, %191 : vector<16x32xf32>
    %193 = arith.mulf %192, %192 : vector<16x32xf32>
    %cst_74 = arith.constant dense<0.000000e+00> : vector<16xf32>
    %194 = vector.multi_reduction <add>, %193, %cst_74 [1] : vector<16x32xf32> to vector<16xf32>
    %195 = vector.shape_cast %194 : vector<16xf32> to vector<16x1xf32>
    %cst_75 = arith.constant 3.200000e+01 : f32
    %196 = vector.broadcast %cst_75 : f32 to vector<16x1xf32>
    %197 = arith.divf %195, %196 : vector<16x1xf32>
    %cst_76 = arith.constant 9.99999974E-6 : f32
    %198 = vector.broadcast %cst_76 : f32 to vector<16x1xf32>
    %199 = arith.addf %197, %198 : vector<16x1xf32>
    %200 = math.rsqrt %199 : vector<16x1xf32>
    %201 = vector.broadcast %200 : vector<16x1xf32> to vector<16x32xf32>
    %202 = arith.mulf %192, %201 : vector<16x32xf32>
    %203 = vector.broadcast %180 : vector<1x32xf32> to vector<16x32xf32>
    %204 = arith.mulf %202, %203 : vector<16x32xf32>
    %205 = vector.broadcast %181 : vector<1x32xf32> to vector<16x32xf32>
    %206 = arith.addf %204, %205 : vector<16x32xf32>
    %c6 = arith.constant 6 : index
    %c0_77 = arith.constant 0 : index
    %c0_78 = arith.constant 0 : index
    %207 = vector.load %arg2[%c6, %c0_77, %c0_78] : memref<12x32x16xf32, #tpu.memory_space<vmem>>, vector<1x32x16xf32>
    %208 = vector.shape_cast %207 : vector<1x32x16xf32> to vector<32x16xf32>
    %c8 = arith.constant 8 : index
    %c0_79 = arith.constant 0 : index
    %c0_80 = arith.constant 0 : index
    %209 = vector.load %arg2[%c8, %c0_79, %c0_80] : memref<12x32x16xf32, #tpu.memory_space<vmem>>, vector<1x32x16xf32>
    %210 = vector.shape_cast %209 : vector<1x32x16xf32> to vector<32x16xf32>
    %c10 = arith.constant 10 : index
    %c0_81 = arith.constant 0 : index
    %c0_82 = arith.constant 0 : index
    %211 = vector.load %arg2[%c10, %c0_81, %c0_82] : memref<12x32x16xf32, #tpu.memory_space<vmem>>, vector<1x32x16xf32>
    %212 = vector.shape_cast %211 : vector<1x32x16xf32> to vector<32x16xf32>
    %213 = vector.extract_strided_slice %179 {offsets = [2, 0], sizes = [1, 16], strides = [1, 1]} : vector<8x128xf32> to vector<1x16xf32>
    %214 = vector.extract_strided_slice %179 {offsets = [2, 32], sizes = [1, 16], strides = [1, 1]} : vector<8x128xf32> to vector<1x16xf32>
    %215 = vector.extract_strided_slice %179 {offsets = [2, 64], sizes = [1, 16], strides = [1, 1]} : vector<8x128xf32> to vector<1x16xf32>
    %cst_83 = arith.constant dense<0.000000e+00> : vector<16x16xf32>
    %216 = tpu.matmul %206, %208, %cst_83 {dimension_numbers = #tpu.dot_dimension_numbers<[1], [0], [0], [1], [0, 0, 1, 1], [], []>} : vector<16x32xf32>, vector<32x16xf32>, vector<16x16xf32> -> vector<16x16xf32>
    %217 = vector.broadcast %213 : vector<1x16xf32> to vector<16x16xf32>
    %218 = arith.addf %216, %217 : vector<16x16xf32>
    %cst_84 = arith.constant dense<0.000000e+00> : vector<16x16xf32>
    %219 = tpu.matmul %206, %210, %cst_84 {dimension_numbers = #tpu.dot_dimension_numbers<[1], [0], [0], [1], [0, 0, 1, 1], [], []>} : vector<16x32xf32>, vector<32x16xf32>, vector<16x16xf32> -> vector<16x16xf32>
    %220 = vector.broadcast %214 : vector<1x16xf32> to vector<16x16xf32>
    %221 = arith.addf %219, %220 : vector<16x16xf32>
    %cst_85 = arith.constant dense<0.000000e+00> : vector<16x16xf32>
    %222 = tpu.matmul %206, %212, %cst_85 {dimension_numbers = #tpu.dot_dimension_numbers<[1], [0], [0], [1], [0, 0, 1, 1], [], []>} : vector<16x32xf32>, vector<32x16xf32>, vector<16x16xf32> -> vector<16x16xf32>
    %223 = vector.broadcast %215 : vector<1x16xf32> to vector<16x16xf32>
    %224 = arith.addf %222, %223 : vector<16x16xf32>
    %225 = vector.shape_cast %218 : vector<16x16xf32> to vector<2x8x16xf32>
    %226 = vector.shape_cast %221 : vector<16x16xf32> to vector<2x8x16xf32>
    %227 = vector.shape_cast %224 : vector<16x16xf32> to vector<2x8x16xf32>
    "tpu.trace_start"() <{level = 10 : i32, message = "bqd,bkd->bqk"}> : () -> ()
    %cst_86 = arith.constant dense<0.000000e+00> : vector<2x8x8xf32>
    %228 = tpu.matmul %225, %226, %cst_86 {dimension_numbers = #tpu.dot_dimension_numbers<[2], [2], [1], [1], [0, 0, 0, 1, 1, 1], [0], [0]>} : vector<2x8x16xf32>, vector<2x8x16xf32>, vector<2x8x8xf32> -> vector<2x8x8xf32>
    "tpu.trace_stop"() : () -> ()
    %cst_87 = arith.constant 2.500000e-01 : f32
    %229 = vector.broadcast %cst_87 : f32 to vector<2x8x8xf32>
    %230 = arith.mulf %228, %229 : vector<2x8x8xf32>
    %cst_88 = arith.constant -1.000000e+30 : f32
    %231 = vector.shape_cast %14 : vector<1x8x8xi1> to vector<1x8x8xi1>
    %232 = vector.broadcast %231 : vector<1x8x8xi1> to vector<2x8x8xi1>
    %233 = vector.broadcast %cst_88 : f32 to vector<2x8x8xf32>
    %234 = arith.select %232, %230, %233 : vector<2x8x8xi1>, vector<2x8x8xf32>
    %cst_89 = arith.constant dense<0xFF800000> : vector<2x8xf32>
    %235 = vector.multi_reduction <maximumf>, %234, %cst_89 [2] : vector<2x8x8xf32> to vector<2x8xf32>
    %236 = vector.shape_cast %235 : vector<2x8xf32> to vector<2x8x1xf32>
    %237 = vector.broadcast %236 : vector<2x8x1xf32> to vector<2x8x8xf32>
    %238 = arith.subf %234, %237 : vector<2x8x8xf32>
    %239 = math.exp %238 : vector<2x8x8xf32>
    %cst_90 = arith.constant dense<0.000000e+00> : vector<2x8xf32>
    %240 = vector.multi_reduction <add>, %239, %cst_90 [2] : vector<2x8x8xf32> to vector<2x8xf32>
    %241 = vector.shape_cast %240 : vector<2x8xf32> to vector<2x8x1xf32>
    %242 = tpu.reciprocal %241 {approx = true} : vector<2x8x1xf32> -> vector<2x8x1xf32>
    %243 = vector.broadcast %242 : vector<2x8x1xf32> to vector<2x8x8xf32>
    %244 = arith.mulf %239, %243 : vector<2x8x8xf32>
    "tpu.trace_start"() <{level = 10 : i32, message = "bqk,bkd->bqd"}> : () -> ()
    %cst_91 = arith.constant dense<0.000000e+00> : vector<2x8x16xf32>
    %245 = tpu.matmul %244, %227, %cst_91 {dimension_numbers = #tpu.dot_dimension_numbers<[2], [1], [1], [2], [0, 0, 0, 1, 1, 2], [0], [0]>} : vector<2x8x8xf32>, vector<2x8x16xf32>, vector<2x8x16xf32> -> vector<2x8x16xf32>
    "tpu.trace_stop"() : () -> ()
    %246 = vector.shape_cast %245 : vector<2x8x16xf32> to vector<16x16xf32>
    %c2_92 = arith.constant 2 : index
    %c0_93 = arith.constant 0 : index
    %c0_94 = arith.constant 0 : index
    %247 = vector.load %arg3[%c2_92, %c0_93, %c0_94] : memref<4x16x32xf32, #tpu.memory_space<vmem>>, vector<1x16x32xf32>
    %248 = vector.shape_cast %247 : vector<1x16x32xf32> to vector<16x32xf32>
    %cst_95 = arith.constant dense<0.000000e+00> : vector<16x32xf32>
    %249 = tpu.matmul %246, %248, %cst_95 {dimension_numbers = #tpu.dot_dimension_numbers<[1], [0], [0], [1], [0, 0, 1, 1], [], []>} : vector<16x16xf32>, vector<16x32xf32>, vector<16x32xf32> -> vector<16x32xf32>
    %c7 = arith.constant 7 : index
    %c0_96 = arith.constant 0 : index
    %c0_97 = arith.constant 0 : index
    %250 = vector.load %arg2[%c7, %c0_96, %c0_97] : memref<12x32x16xf32, #tpu.memory_space<vmem>>, vector<1x32x16xf32>
    %251 = vector.shape_cast %250 : vector<1x32x16xf32> to vector<32x16xf32>
    %c9 = arith.constant 9 : index
    %c0_98 = arith.constant 0 : index
    %c0_99 = arith.constant 0 : index
    %252 = vector.load %arg2[%c9, %c0_98, %c0_99] : memref<12x32x16xf32, #tpu.memory_space<vmem>>, vector<1x32x16xf32>
    %253 = vector.shape_cast %252 : vector<1x32x16xf32> to vector<32x16xf32>
    %c11 = arith.constant 11 : index
    %c0_100 = arith.constant 0 : index
    %c0_101 = arith.constant 0 : index
    %254 = vector.load %arg2[%c11, %c0_100, %c0_101] : memref<12x32x16xf32, #tpu.memory_space<vmem>>, vector<1x32x16xf32>
    %255 = vector.shape_cast %254 : vector<1x32x16xf32> to vector<32x16xf32>
    %256 = vector.extract_strided_slice %179 {offsets = [2, 16], sizes = [1, 16], strides = [1, 1]} : vector<8x128xf32> to vector<1x16xf32>
    %257 = vector.extract_strided_slice %179 {offsets = [2, 48], sizes = [1, 16], strides = [1, 1]} : vector<8x128xf32> to vector<1x16xf32>
    %258 = vector.extract_strided_slice %179 {offsets = [2, 80], sizes = [1, 16], strides = [1, 1]} : vector<8x128xf32> to vector<1x16xf32>
    %cst_102 = arith.constant dense<0.000000e+00> : vector<16x16xf32>
    %259 = tpu.matmul %206, %251, %cst_102 {dimension_numbers = #tpu.dot_dimension_numbers<[1], [0], [0], [1], [0, 0, 1, 1], [], []>} : vector<16x32xf32>, vector<32x16xf32>, vector<16x16xf32> -> vector<16x16xf32>
    %260 = vector.broadcast %256 : vector<1x16xf32> to vector<16x16xf32>
    %261 = arith.addf %259, %260 : vector<16x16xf32>
    %cst_103 = arith.constant dense<0.000000e+00> : vector<16x16xf32>
    %262 = tpu.matmul %206, %253, %cst_103 {dimension_numbers = #tpu.dot_dimension_numbers<[1], [0], [0], [1], [0, 0, 1, 1], [], []>} : vector<16x32xf32>, vector<32x16xf32>, vector<16x16xf32> -> vector<16x16xf32>
    %263 = vector.broadcast %257 : vector<1x16xf32> to vector<16x16xf32>
    %264 = arith.addf %262, %263 : vector<16x16xf32>
    %cst_104 = arith.constant dense<0.000000e+00> : vector<16x16xf32>
    %265 = tpu.matmul %206, %255, %cst_104 {dimension_numbers = #tpu.dot_dimension_numbers<[1], [0], [0], [1], [0, 0, 1, 1], [], []>} : vector<16x32xf32>, vector<32x16xf32>, vector<16x16xf32> -> vector<16x16xf32>
    %266 = vector.broadcast %258 : vector<1x16xf32> to vector<16x16xf32>
    %267 = arith.addf %265, %266 : vector<16x16xf32>
    %268 = vector.shape_cast %261 : vector<16x16xf32> to vector<2x8x16xf32>
    %269 = vector.shape_cast %264 : vector<16x16xf32> to vector<2x8x16xf32>
    %270 = vector.shape_cast %267 : vector<16x16xf32> to vector<2x8x16xf32>
    "tpu.trace_start"() <{level = 10 : i32, message = "bqd,bkd->bqk"}> : () -> ()
    %cst_105 = arith.constant dense<0.000000e+00> : vector<2x8x8xf32>
    %271 = tpu.matmul %268, %269, %cst_105 {dimension_numbers = #tpu.dot_dimension_numbers<[2], [2], [1], [1], [0, 0, 0, 1, 1, 1], [0], [0]>} : vector<2x8x16xf32>, vector<2x8x16xf32>, vector<2x8x8xf32> -> vector<2x8x8xf32>
    "tpu.trace_stop"() : () -> ()
    %cst_106 = arith.constant 2.500000e-01 : f32
    %272 = vector.broadcast %cst_106 : f32 to vector<2x8x8xf32>
    %273 = arith.mulf %271, %272 : vector<2x8x8xf32>
    %cst_107 = arith.constant -1.000000e+30 : f32
    %274 = vector.shape_cast %14 : vector<1x8x8xi1> to vector<1x8x8xi1>
    %275 = vector.broadcast %274 : vector<1x8x8xi1> to vector<2x8x8xi1>
    %276 = vector.broadcast %cst_107 : f32 to vector<2x8x8xf32>
    %277 = arith.select %275, %273, %276 : vector<2x8x8xi1>, vector<2x8x8xf32>
    %cst_108 = arith.constant dense<0xFF800000> : vector<2x8xf32>
    %278 = vector.multi_reduction <maximumf>, %277, %cst_108 [2] : vector<2x8x8xf32> to vector<2x8xf32>
    %279 = vector.shape_cast %278 : vector<2x8xf32> to vector<2x8x1xf32>
    %280 = vector.broadcast %279 : vector<2x8x1xf32> to vector<2x8x8xf32>
    %281 = arith.subf %277, %280 : vector<2x8x8xf32>
    %282 = math.exp %281 : vector<2x8x8xf32>
    %cst_109 = arith.constant dense<0.000000e+00> : vector<2x8xf32>
    %283 = vector.multi_reduction <add>, %282, %cst_109 [2] : vector<2x8x8xf32> to vector<2x8xf32>
    %284 = vector.shape_cast %283 : vector<2x8xf32> to vector<2x8x1xf32>
    %285 = tpu.reciprocal %284 {approx = true} : vector<2x8x1xf32> -> vector<2x8x1xf32>
    %286 = vector.broadcast %285 : vector<2x8x1xf32> to vector<2x8x8xf32>
    %287 = arith.mulf %282, %286 : vector<2x8x8xf32>
    "tpu.trace_start"() <{level = 10 : i32, message = "bqk,bkd->bqd"}> : () -> ()
    %cst_110 = arith.constant dense<0.000000e+00> : vector<2x8x16xf32>
    %288 = tpu.matmul %287, %270, %cst_110 {dimension_numbers = #tpu.dot_dimension_numbers<[2], [1], [1], [2], [0, 0, 0, 1, 1, 2], [0], [0]>} : vector<2x8x8xf32>, vector<2x8x16xf32>, vector<2x8x16xf32> -> vector<2x8x16xf32>
    "tpu.trace_stop"() : () -> ()
    %289 = vector.shape_cast %288 : vector<2x8x16xf32> to vector<16x16xf32>
    %c3_111 = arith.constant 3 : index
    %c0_112 = arith.constant 0 : index
    %c0_113 = arith.constant 0 : index
    %290 = vector.load %arg3[%c3_111, %c0_112, %c0_113] : memref<4x16x32xf32, #tpu.memory_space<vmem>>, vector<1x16x32xf32>
    %291 = vector.shape_cast %290 : vector<1x16x32xf32> to vector<16x32xf32>
    %cst_114 = arith.constant dense<0.000000e+00> : vector<16x32xf32>
    %292 = tpu.matmul %289, %291, %cst_114 {dimension_numbers = #tpu.dot_dimension_numbers<[1], [0], [0], [1], [0, 0, 1, 1], [], []>} : vector<16x16xf32>, vector<16x32xf32>, vector<16x32xf32> -> vector<16x32xf32>
    %293 = arith.addf %249, %292 : vector<16x32xf32>
    %294 = arith.addf %177, %293 : vector<16x32xf32>
    %295 = vector.broadcast %182 : vector<1x32xf32> to vector<16x32xf32>
    %296 = arith.addf %294, %295 : vector<16x32xf32>
    %cst_115 = arith.constant dense<0.000000e+00> : vector<16xf32>
    %297 = vector.multi_reduction <add>, %296, %cst_115 [1] : vector<16x32xf32> to vector<16xf32>
    %298 = vector.shape_cast %297 : vector<16xf32> to vector<16x1xf32>
    %cst_116 = arith.constant 3.200000e+01 : f32
    %299 = vector.broadcast %cst_116 : f32 to vector<16x1xf32>
    %300 = arith.divf %298, %299 : vector<16x1xf32>
    %301 = vector.broadcast %300 : vector<16x1xf32> to vector<16x32xf32>
    %302 = arith.subf %296, %301 : vector<16x32xf32>
    %303 = arith.mulf %302, %302 : vector<16x32xf32>
    %cst_117 = arith.constant dense<0.000000e+00> : vector<16xf32>
    %304 = vector.multi_reduction <add>, %303, %cst_117 [1] : vector<16x32xf32> to vector<16xf32>
    %305 = vector.shape_cast %304 : vector<16xf32> to vector<16x1xf32>
    %cst_118 = arith.constant 3.200000e+01 : f32
    %306 = vector.broadcast %cst_118 : f32 to vector<16x1xf32>
    %307 = arith.divf %305, %306 : vector<16x1xf32>
    %cst_119 = arith.constant 9.99999974E-6 : f32
    %308 = vector.broadcast %cst_119 : f32 to vector<16x1xf32>
    %309 = arith.addf %307, %308 : vector<16x1xf32>
    %310 = math.rsqrt %309 : vector<16x1xf32>
    %311 = vector.broadcast %310 : vector<16x1xf32> to vector<16x32xf32>
    %312 = arith.mulf %302, %311 : vector<16x32xf32>
    %313 = vector.broadcast %183 : vector<1x32xf32> to vector<16x32xf32>
    %314 = arith.mulf %312, %313 : vector<16x32xf32>
    %315 = vector.broadcast %184 : vector<1x32xf32> to vector<16x32xf32>
    %316 = arith.addf %314, %315 : vector<16x32xf32>
    %c1_120 = arith.constant 1 : index
    %c0_121 = arith.constant 0 : index
    %c0_122 = arith.constant 0 : index
    %317 = vector.load %arg4[%c1_120, %c0_121, %c0_122] : memref<2x32x128xf32, #tpu.memory_space<vmem>>, vector<1x32x128xf32>
    %318 = vector.shape_cast %317 : vector<1x32x128xf32> to vector<32x128xf32>
    %cst_123 = arith.constant dense<0.000000e+00> : vector<16x128xf32>
    %319 = tpu.matmul %316, %318, %cst_123 {dimension_numbers = #tpu.dot_dimension_numbers<[1], [0], [0], [1], [0, 0, 1, 1], [], []>} : vector<16x32xf32>, vector<32x128xf32>, vector<16x128xf32> -> vector<16x128xf32>
    %320 = vector.broadcast %185 : vector<1x128xf32> to vector<16x128xf32>
    %321 = arith.addf %319, %320 : vector<16x128xf32>
    %cst_124 = arith.constant 5.000000e-01 : f32
    %322 = vector.broadcast %cst_124 : f32 to vector<16x128xf32>
    %323 = arith.mulf %322, %321 : vector<16x128xf32>
    %cst_125 = arith.constant 4.471500e-02 : f32
    %324 = vector.broadcast %cst_125 : f32 to vector<16x128xf32>
    %325 = arith.mulf %324, %321 : vector<16x128xf32>
    %326 = arith.mulf %325, %321 : vector<16x128xf32>
    %327 = arith.mulf %326, %321 : vector<16x128xf32>
    %328 = arith.addf %321, %327 : vector<16x128xf32>
    %cst_126 = arith.constant 0.797884583 : f32
    %329 = vector.broadcast %cst_126 : f32 to vector<16x128xf32>
    %330 = arith.mulf %329, %328 : vector<16x128xf32>
    %331 = math.tanh %330 : vector<16x128xf32>
    %cst_127 = arith.constant 1.000000e+00 : f32
    %332 = vector.broadcast %cst_127 : f32 to vector<16x128xf32>
    %333 = arith.addf %332, %331 : vector<16x128xf32>
    %334 = arith.mulf %323, %333 : vector<16x128xf32>
    %c1_128 = arith.constant 1 : index
    %c0_129 = arith.constant 0 : index
    %c0_130 = arith.constant 0 : index
    %335 = vector.load %arg5[%c1_128, %c0_129, %c0_130] : memref<2x128x32xf32, #tpu.memory_space<vmem>>, vector<1x128x32xf32>
    %336 = vector.shape_cast %335 : vector<1x128x32xf32> to vector<128x32xf32>
    %cst_131 = arith.constant dense<0.000000e+00> : vector<16x32xf32>
    %337 = tpu.matmul %334, %336, %cst_131 {dimension_numbers = #tpu.dot_dimension_numbers<[1], [0], [0], [1], [0, 0, 1, 1], [], []>} : vector<16x128xf32>, vector<128x32xf32>, vector<16x32xf32> -> vector<16x32xf32>
    %338 = arith.addf %296, %337 : vector<16x32xf32>
    %339 = vector.broadcast %186 : vector<1x32xf32> to vector<16x32xf32>
    %340 = arith.addf %338, %339 : vector<16x32xf32>
    %341 = vector.extract_strided_slice %340 {offsets = [7, 0], sizes = [1, 32], strides = [1, 1]} : vector<16x32xf32> to vector<1x32xf32>
    %342 = vector.extract_strided_slice %340 {offsets = [15, 0], sizes = [1, 32], strides = [1, 1]} : vector<16x32xf32> to vector<1x32xf32>
    %343 = tpu.concatenate %341, %342 in 0 : vector<1x32xf32>, vector<1x32xf32> -> vector<2x32xf32>
    %c0_132 = arith.constant 0 : index
    %c0_133 = arith.constant 0 : index
    %344 = vector.load %arg7[%c0_132, %c0_133] : memref<2x32xf32, #tpu.memory_space<vmem>>, vector<1x32xf32>
    %c1_134 = arith.constant 1 : index
    %c0_135 = arith.constant 0 : index
    %345 = vector.load %arg7[%c1_134, %c0_135] : memref<2x32xf32, #tpu.memory_space<vmem>>, vector<1x32xf32>
    %cst_136 = arith.constant dense<0.000000e+00> : vector<2xf32>
    %346 = vector.multi_reduction <add>, %343, %cst_136 [1] : vector<2x32xf32> to vector<2xf32>
    %347 = vector.shape_cast %346 : vector<2xf32> to vector<2x1xf32>
    %cst_137 = arith.constant 3.200000e+01 : f32
    %348 = vector.broadcast %cst_137 : f32 to vector<2x1xf32>
    %349 = arith.divf %347, %348 : vector<2x1xf32>
    %350 = vector.broadcast %349 : vector<2x1xf32> to vector<2x32xf32>
    %351 = arith.subf %343, %350 : vector<2x32xf32>
    %352 = arith.mulf %351, %351 : vector<2x32xf32>
    %cst_138 = arith.constant dense<0.000000e+00> : vector<2xf32>
    %353 = vector.multi_reduction <add>, %352, %cst_138 [1] : vector<2x32xf32> to vector<2xf32>
    %354 = vector.shape_cast %353 : vector<2xf32> to vector<2x1xf32>
    %cst_139 = arith.constant 3.200000e+01 : f32
    %355 = vector.broadcast %cst_139 : f32 to vector<2x1xf32>
    %356 = arith.divf %354, %355 : vector<2x1xf32>
    %cst_140 = arith.constant 9.99999974E-6 : f32
    %357 = vector.broadcast %cst_140 : f32 to vector<2x1xf32>
    %358 = arith.addf %356, %357 : vector<2x1xf32>
    %359 = math.rsqrt %358 : vector<2x1xf32>
    %360 = vector.broadcast %359 : vector<2x1xf32> to vector<2x32xf32>
    %361 = arith.mulf %351, %360 : vector<2x32xf32>
    %362 = vector.broadcast %344 : vector<1x32xf32> to vector<2x32xf32>
    %363 = arith.mulf %361, %362 : vector<2x32xf32>
    %364 = vector.broadcast %345 : vector<1x32xf32> to vector<2x32xf32>
    %365 = arith.addf %363, %364 : vector<2x32xf32>
    %c0_141 = arith.constant 0 : index
    %c0_142 = arith.constant 0 : index
    %366 = vector.load %arg9[%c0_141, %c0_142] : memref<32x128xf32, #tpu.memory_space<vmem>>, vector<32x128xf32>
    %cst_143 = arith.constant dense<0.000000e+00> : vector<2x128xf32>
    %367 = tpu.matmul %365, %366, %cst_143 {dimension_numbers = #tpu.dot_dimension_numbers<[1], [0], [0], [1], [0, 0, 1, 1], [], []>} : vector<2x32xf32>, vector<32x128xf32>, vector<2x128xf32> -> vector<2x128xf32>
    %c0_144 = arith.constant 0 : index
    %c0_145 = arith.constant 0 : index
    %368 = vector.load %arg11[%c0_144, %c0_145] : memref<2x128xf32, #tpu.memory_space<vmem>>, vector<2x128xf32>
    tpu.vector_store %arg11[%c0_144, %c0_145], %367 {strides = array<i32>} : memref<2x128xf32, #tpu.memory_space<vmem>>, vector<2x128xf32>,
    return
  }
  func.func @transform_0(%arg0: i32) -> (i32, i32) {
    %c0_i32 = arith.constant 0 : i32
    %c0_i32_0 = arith.constant 0 : i32
    return %arg0, %c0_i32 : i32, i32
  }
  func.func @transform_1(%arg0: i32) -> (i32, i32, i32) {
    %c0_i32 = arith.constant 0 : i32
    %c0_i32_0 = arith.constant 0 : i32
    %c0_i32_1 = arith.constant 0 : i32
    %c0_i32_2 = arith.constant 0 : i32
    return %c0_i32, %c0_i32_0, %c0_i32_1 : i32, i32, i32
  }
  func.func @transform_2(%arg0: i32) -> (i32, i32, i32) {
    %c0_i32 = arith.constant 0 : i32
    %c0_i32_0 = arith.constant 0 : i32
    %c0_i32_1 = arith.constant 0 : i32
    %c0_i32_2 = arith.constant 0 : i32
    return %c0_i32, %c0_i32_0, %c0_i32_1 : i32, i32, i32
  }
  func.func @transform_3(%arg0: i32) -> (i32, i32, i32) {
    %c0_i32 = arith.constant 0 : i32
    %c0_i32_0 = arith.constant 0 : i32
    %c0_i32_1 = arith.constant 0 : i32
    %c0_i32_2 = arith.constant 0 : i32
    return %c0_i32, %c0_i32_0, %c0_i32_1 : i32, i32, i32
  }
  func.func @transform_4(%arg0: i32) -> (i32, i32, i32) {
    %c0_i32 = arith.constant 0 : i32
    %c0_i32_0 = arith.constant 0 : i32
    %c0_i32_1 = arith.constant 0 : i32
    %c0_i32_2 = arith.constant 0 : i32
    return %c0_i32, %c0_i32_0, %c0_i32_1 : i32, i32, i32
  }
  func.func @transform_5(%arg0: i32) -> (i32, i32, i32) {
    %c0_i32 = arith.constant 0 : i32
    %c0_i32_0 = arith.constant 0 : i32
    %c0_i32_1 = arith.constant 0 : i32
    %c0_i32_2 = arith.constant 0 : i32
    return %c0_i32, %c0_i32_0, %c0_i32_1 : i32, i32, i32
  }
  func.func @transform_6(%arg0: i32) -> (i32, i32) {
    %c0_i32 = arith.constant 0 : i32
    %c0_i32_0 = arith.constant 0 : i32
    %c0_i32_1 = arith.constant 0 : i32
    return %c0_i32, %c0_i32_0 : i32, i32
  }
  func.func @transform_7(%arg0: i32) -> (i32, i32) {
    %c0_i32 = arith.constant 0 : i32
    %c0_i32_0 = arith.constant 0 : i32
    %c0_i32_1 = arith.constant 0 : i32
    return %c0_i32, %c0_i32_0 : i32, i32
  }
  func.func @transform_8(%arg0: i32) -> (i32, i32) {
    %c0_i32 = arith.constant 0 : i32
    %c0_i32_0 = arith.constant 0 : i32
    %c0_i32_1 = arith.constant 0 : i32
    return %c0_i32, %c0_i32_0 : i32, i32
  }
  func.func @transform_9(%arg0: i32) -> (i32, i32) {
    %c0_i32 = arith.constant 0 : i32
    %c0_i32_0 = arith.constant 0 : i32
    %c0_i32_1 = arith.constant 0 : i32
    return %c0_i32, %c0_i32_0 : i32, i32
  }
  func.func @transform_10(%arg0: i32) -> (i32, i32) {
    %c0_i32 = arith.constant 0 : i32
    %c0_i32_0 = arith.constant 0 : i32
    return %arg0, %c0_i32 : i32, i32
  }
}

</mosaic_0001>

<llo_original>
// kernel: gpt_forward.1
$region0: #{gpt_forward.1}
  #allocation0 [shape = 'u32[]', space=smem, size = 0x4, offset = 0x4, fixed_abs, tag = 'smem constant byte address 0x4 - core index']
  #allocation1 [shape = 'u32[144,128]{1,0:T(1,128)}', space=vmem, size = 0x12000, scoped, tag = 'internal scratch']
  %s0 = inlined_call_operand.vmem [shape: s32[16,1], index: 0, kind: input, shape index: {}]
  %s1 = inlined_call_operand.vmem [shape: f32[12,32,16], index: 1, kind: input, shape index: {}]
  %s2 = inlined_call_operand.vmem [shape: f32[4,16,32], index: 2, kind: input, shape index: {}]
  %s3 = inlined_call_operand.vmem [shape: f32[2,32,128], index: 3, kind: input, shape index: {}]
  %s4 = inlined_call_operand.vmem [shape: f32[2,128,32], index: 4, kind: input, shape index: {}]
  %s5 = inlined_call_operand.vmem [shape: f32[2,8,128], index: 5, kind: input, shape index: {}]
  %s6 = inlined_call_operand.vmem [shape: f32[2,32], index: 6, kind: input, shape index: {}]
  %s7 = inlined_call_operand.vmem [shape: f32[128,32], index: 7, kind: input, shape index: {}]
  %s8 = inlined_call_operand.vmem [shape: f32[32,128], index: 8, kind: input, shape index: {}]
  %s9 = inlined_call_operand.vmem [shape: f32[16,32], index: 9, kind: input, shape index: {}]
  %s10 = inlined_call_operand.hbm [shape: f32[2,128], index: 10, kind: output, shape index: {}]
  %s11 = sld [smem:[#allocation0]]
  $region50: #{gpt_forward.1} parent=0
    _
  %s13 = ssub.s32 1, %s11
  %s14 = scalar_select 0, %s13, %s11
  $region1: #{gpt_forward.1} parent=0
    #allocation2 [shape = 'u8[1024]{0}', space=vmem, size = 0x400, scoped, tag = 'output window, operand 0, single buffered']
    #allocation3 [shape = 's32[1]{0}', space=sflag, size = 0x4, scoped, tag = 'scoped memory for gpt_forward.1']
    %15 = vsyncpa [#allocation3], 0
    // Predicated region
    $region2: #{gpt_forward.1} parent=1 // pred_check
      _
    $region3: #{gpt_forward.1} parent=1 // pred_check_branch
      %17 = sbr.rel (0) target = $region5
    $region4: #{gpt_forward.1} parent=1 // pred_region
      _
    $region5: #{gpt_forward.1} parent=1 // pred_fallthru
      _
    // Predicated region
    $region6: #{gpt_forward.1} parent=1 // pred_check
      _
    $region7: #{gpt_forward.1} parent=1 // pred_check_branch
      %19 = sbr.rel (0) target = $region9
    $region8: #{gpt_forward.1} parent=1 // pred_region
      _
    $region9: #{gpt_forward.1} parent=1 // pred_fallthru
      _
    // Predicated region
    $region10: #{gpt_forward.1} parent=1 // pred_check
      _
    $region11: #{gpt_forward.1} parent=1 // pred_check_branch
      %21 = sbr.rel (0) target = $region13
    $region12: #{gpt_forward.1} parent=1 // pred_region
      _
    $region13: #{gpt_forward.1} parent=1 // pred_fallthru
      _
    // Predicated region
    $region14: #{gpt_forward.1} parent=1 // pred_check
      _
    $region15: #{gpt_forward.1} parent=1 // pred_check_branch
      %23 = sbr.rel (0) target = $region17
    $region16: #{gpt_forward.1} parent=1 // pred_region
      _
    $region17: #{gpt_forward.1} parent=1 // pred_fallthru
      _
    // Predicated region
    $region18: #{gpt_forward.1} parent=1 // pred_check
      _
    $region19: #{gpt_forward.1} parent=1 // pred_check_branch
      %25 = sbr.rel (0) target = $region21
    $region20: #{gpt_forward.1} parent=1 // pred_region
      _
    $region21: #{gpt_forward.1} parent=1 // pred_fallthru
      _
    // Predicated region
    $region22: #{gpt_forward.1} parent=1 // pred_check
      _
    $region23: #{gpt_forward.1} parent=1 // pred_check_branch
      %27 = sbr.rel (0) target = $region25
    $region24: #{gpt_forward.1} parent=1 // pred_region
      _
    $region25: #{gpt_forward.1} parent=1 // pred_fallthru
      _
    // Predicated region
    $region26: #{gpt_forward.1} parent=1 // pred_check
      _
    $region27: #{gpt_forward.1} parent=1 // pred_check_branch
      %29 = sbr.rel (0) target = $region29
    $region28: #{gpt_forward.1} parent=1 // pred_region
      _
    $region29: #{gpt_forward.1} parent=1 // pred_fallthru
      _
    // Predicated region
    $region30: #{gpt_forward.1} parent=1 // pred_check
      _
    $region31: #{gpt_forward.1} parent=1 // pred_check_branch
      %31 = sbr.rel (0) target = $region33
    $region32: #{gpt_forward.1} parent=1 // pred_region
      _
    $region33: #{gpt_forward.1} parent=1 // pred_fallthru
      _
    // Predicated region
    $region34: #{gpt_forward.1} parent=1 // pred_check
      _
    $region35: #{gpt_forward.1} parent=1 // pred_check_branch
      %33 = sbr.rel (0) target = $region37
    $region36: #{gpt_forward.1} parent=1 // pred_region
      _
    $region37: #{gpt_forward.1} parent=1 // pred_fallthru
      _
    // Predicated region
    $region38: #{gpt_forward.1} parent=1 // pred_check
      _
    $region39: #{gpt_forward.1} parent=1 // pred_check_branch
      %35 = sbr.rel (0) target = $region41
    $region40: #{gpt_forward.1} parent=1 // pred_region
      _
    $region41: #{gpt_forward.1} parent=1 // pred_fallthru
      _
    %v36 = vld [vmem:[%s0] sm:$0xff]
    %v37 = vld [vmem:[%s0 + $0x8] sm:$0xff]
    %v38 = vlaneseq
    %v39 = vand.u32 %v38, 127
    %40 = vset.pattern.permute.xlu0 0
    %41 = vperm.xlu0 %40, %v36
    %v42 = vpop.permute.xlu0 %41
    %43 = vset.pattern.permute.xlu0 0
    %44 = vperm.xlu0 %43, %v37
    %v45 = vpop.permute.xlu0 %44
    %vm46 = vcmp.eq.s32.totalorder %v39, %v42
    %vm47 = vcmp.eq.s32.totalorder %v39, %v45
    %v48 = vsel %vm46, 1, 0
    %v49 = vsel %vm47, 1, 0
    %v50 = vcvt.s32.f32 %v48
    %v51 = vcvt.s32.f32 %v49
    %v52 = vld [vmem:[%s7] sm:$0xff]
    %v53 = vld [vmem:[%s7 + $0x8] sm:$0xff]
    %v54 = vld [vmem:[%s7 + $0x10] sm:$0xff]
    %v55 = vld [vmem:[%s7 + $0x18] sm:$0xff]
    %v56 = vld [vmem:[%s7 + $0x20] sm:$0xff]
    %v57 = vld [vmem:[%s7 + $0x28] sm:$0xff]
    %v58 = vld [vmem:[%s7 + $0x30] sm:$0xff]
    %v59 = vld [vmem:[%s7 + $0x38] sm:$0xff]
    %v60 = vld [vmem:[%s7 + $0x40] sm:$0xff]
    %v61 = vld [vmem:[%s7 + $0x48] sm:$0xff]
    %v62 = vld [vmem:[%s7 + $0x50] sm:$0xff]
    %v63 = vld [vmem:[%s7 + $0x58] sm:$0xff]
    %v64 = vld [vmem:[%s7 + $0x60] sm:$0xff]
    %v65 = vld [vmem:[%s7 + $0x68] sm:$0xff]
    %v66 = vld [vmem:[%s7 + $0x70] sm:$0xff]
    %v67 = vld [vmem:[%s7 + $0x78] sm:$0xff]
    %v68 = vld [vmem:[%s9] sm:$0xff]
    %69 = vmatprep.subr.mxu0 0.0
    %70 = vmatpush1.msra.mxu0 %v52
    %71 = vmatprep.subr.mxu0 0.0
    %72 = vmatpush1.msra.mxu0 %v53
    %73 = vmatprep.subr.mxu0 0.0
    %74 = vmatpush1.msra.mxu0 %v54
    %75 = vmatprep.subr.mxu0 0.0
    %76 = vmatpush1.msra.mxu0 %v55
    %77 = vmatprep.subr.mxu0 0.0
    %78 = vmatpush1.msra.mxu0 %v56
    %79 = vmatprep.subr.mxu0 0.0
    %80 = vmatpush1.msra.mxu0 %v57
    %81 = vmatprep.subr.mxu0 0.0
    %82 = vmatpush1.msra.mxu0 %v58
    %83 = vmatprep.subr.mxu0 0.0
    %84 = vmatpush1.msra.mxu0 %v59
    %85 = vmatprep.subr.mxu0 0.0
    %86 = vmatpush1.msra.mxu0 %v60
    %87 = vmatprep.subr.mxu0 0.0
    %88 = vmatpush1.msra.mxu0 %v61
    %89 = vmatprep.subr.mxu0 0.0
    %90 = vmatpush1.msra.mxu0 %v62
    %91 = vmatprep.subr.mxu0 0.0
    %92 = vmatpush1.msra.mxu0 %v63
    %93 = vmatprep.subr.mxu0 0.0
    %94 = vmatpush1.msra.mxu0 %v64
    %95 = vmatprep.subr.mxu0 0.0
    %96 = vmatpush1.msra.mxu0 %v65
    %97 = vmatprep.subr.mxu0 0.0
    %98 = vmatpush1.msra.mxu0 %v66
    %99 = vmatprep.subr.mxu0 0.0
    %100 = vmatpush1.msra.mxu0 %v67
    %101 = vmatprep.subr.mxu0 0.0
    %102 = vmatpush1.msra.mxu0 0.0
    %103 = vmatprep.subr.mxu0 0.0
    %104 = vmatpush1.msra.mxu0 0.0
    %105 = vmatprep.subr.mxu0 0.0
    %106 = vmatpush1.msra.mxu0 0.0
    %107 = vmatprep.subr.mxu0 0.0
    %108 = vmatpush1.msra.mxu0 0.0
    %109 = vmatprep.subr.mxu0 0.0
    %110 = vmatpush1.msra.mxu0 0.0
    %111 = vmatprep.subr.mxu0 0.0
    %112 = vmatpush1.msra.mxu0 0.0
    %113 = vmatprep.subr.mxu0 0.0
    %114 = vmatpush1.msra.mxu0 0.0
    %115 = vmatprep.subr.mxu0 0.0
    %116 = vmatpush1.msra.mxu0 0.0
    %117 = vmatprep.subr.mxu0 0.0
    %118 = vmatpush1.msra.mxu0 0.0
    %119 = vmatprep.subr.mxu0 0.0
    %120 = vmatpush1.msra.mxu0 0.0
    %121 = vmatprep.subr.mxu0 0.0
    %122 = vmatpush1.msra.mxu0 0.0
    %123 = vmatprep.subr.mxu0 0.0
    %124 = vmatpush1.msra.mxu0 0.0
    %125 = vmatprep.subr.mxu0 0.0
    %126 = vmatpush1.msra.mxu0 0.0
    %127 = vmatprep.subr.mxu0 0.0
    %128 = vmatpush1.msra.mxu0 0.0
    %129 = vmatprep.subr.mxu0 0.0
    %130 = vmatpush1.msra.mxu0 0.0
    %131 = vmatprep.subr.mxu0 0.0
    %132 = vmatpush1.msra.mxu0 0.0
    %133 = vmatprep.mubr.f32.mxu0 0.0
    %134 = vmatmul.mubr.f32.gmra.mrb[0].mxu0 %v50
    %v135 = vpop.f32.mrb[0].mxu0
    %v136 = vadd.f32 %v68, %v135
    %v137 = vpop.f32.mrb[0].mxu0
    %138 = vmatprep.mubr.f32.mxu0 0.0
    %139 = vmatmul.mubr.f32.gmra.mrb[0].mxu0 %v51
    %v140 = vpop.f32.mrb[0].mxu0
    %v141 = vadd.f32 %v68, %v140
    %v142 = vpop.f32.mrb[0].mxu0
    %143 = vdwg.mxu0
    %v144 = vlaneseq
    %v145 = vshrl.u32 %v144, 7
    %vm146 = vcmp.ge.s32.totalorder %v145, %v39
    %v147 = vld [vmem:[%s5] sm:$0xff]
    %vm148 = vcmask 261120
    %v149 = vsel %vm148, %v136, 0.0
    %150 = vadd.xlane.f32.xlu0 %v149
    %v151 = vpop.xlane.xlu0 %150
    %v152 = vsel %vm148, %v141, 0.0
    %153 = vadd.xlane.f32.xlu0 %v152
    %v154 = vpop.xlane.xlu0 %153
    %v155 = vrcp.pop 32.0
    %v156 = vmul.f32 %v151, %v155
    %v157 = vmul.f32 %v154, %v155
    %v158 = vsub.f32 %v136, %v156
    %v159 = vsub.f32 %v141, %v157
    %v160 = vmul.f32 %v158, %v158
    %v161 = vmul.f32 %v159, %v159
    %v162 = vsel %vm148, %v160, 0.0
    %163 = vadd.xlane.f32.xlu0 %v162
    %v164 = vpop.xlane.xlu0 %163
    %v165 = vsel %vm148, %v161, 0.0
    %166 = vadd.xlane.f32.xlu0 %v165
    %v167 = vpop.xlane.xlu0 %166
    %v168 = vmul.f32 %v164, %v155
    %v169 = vmul.f32 %v167, %v155
    %v170 = vadd.f32 %v168, 1e-05
    %v171 = vadd.f32 %v169, 1e-05
    %v172 = vrsqrt.pop %v170
    %v173 = vrsqrt.pop %v171
    %v174 = vmul.f32 %v158, %v172
    %v175 = vmul.f32 %v159, %v173
    %v176 = vlaneseq
    %v177 = vshrl.u32 %v176, 7
    %v178 = vsub.s32 0, %v177
    %v179 = vrot.slane %v147, %v178
    %v180 = vmul.f32 %v174, %v179
    %v181 = vmul.f32 %v175, %v179
    %v182 = vlaneseq
    %v183 = vshrl.u32 %v182, 7
    %v184 = vsub.s32 1, %v183
    %v185 = vrot.slane %v147, %v184
    %v186 = vadd.f32 %v180, %v185
    %v187 = vadd.f32 %v181, %v185
    %v188 = vld [vmem:[%s1] sm:$0xff]
    %v189 = vld [vmem:[%s1 + $0x8] sm:$0xff]
    %v190 = vld [vmem:[%s1 + $0x10] sm:$0xff]
    %v191 = vld [vmem:[%s1 + $0x18] sm:$0xff]
    %s192 = scalar_lea.vmem %s1, 64
    %v193 = vld [vmem:[%s192] sm:$0xff]
    %v194 = vld [vmem:[%s192 + $0x8] sm:$0xff]
    %v195 = vld [vmem:[%s192 + $0x10] sm:$0xff]
    %v196 = vld [vmem:[%s192 + $0x18] sm:$0xff]
    %s197 = scalar_lea.vmem %s1, 128
    %v198 = vld [vmem:[%s197] sm:$0xff]
    %v199 = vld [vmem:[%s197 + $0x8] sm:$0xff]
    %v200 = vld [vmem:[%s197 + $0x10] sm:$0xff]
    %v201 = vld [vmem:[%s197 + $0x18] sm:$0xff]
    %v202 = vlaneseq
    %v203 = vshrl.u32 %v202, 7
    %v204 = vsub.s32 2, %v203
    %v205 = vrot.slane %v147, %v204
    %v207 = vsel %vm148, %v186, 0
    %v210 = vsel %vm148, %v187, 0
    %212 = vmatprep.subr.mxu0 0.0
    %213 = vmatpush1.msra.mxu0 %v188
    %214 = vmatprep.subr.mxu0 0.0
    %215 = vmatpush1.msra.mxu0 %v189
    %216 = vmatprep.subr.mxu0 0.0
    %217 = vmatpush1.msra.mxu0 %v190
    %218 = vmatprep.subr.mxu0 0.0
    %219 = vmatpush1.msra.mxu0 %v191
    %220 = vmatprep.subr.mxu0 0.0
    %221 = vmatpush1.msra.mxu0 0.0
    %222 = vmatprep.subr.mxu0 0.0
    %223 = vmatpush1.msra.mxu0 0.0
    %224 = vmatprep.subr.mxu0 0.0
    %225 = vmatpush1.msra.mxu0 0.0
    %226 = vmatprep.subr.mxu0 0.0
    %227 = vmatpush1.msra.mxu0 0.0
    %228 = vmatprep.subr.mxu0 0.0
    %229 = vmatpush1.msra.mxu0 0.0
    %230 = vmatprep.subr.mxu0 0.0
    %231 = vmatpush1.msra.mxu0 0.0
    %232 = vmatprep.subr.mxu0 0.0
    %233 = vmatpush1.msra.mxu0 0.0
    %234 = vmatprep.subr.mxu0 0.0
    %235 = vmatpush1.msra.mxu0 0.0
    %236 = vmatprep.subr.mxu0 0.0
    %237 = vmatpush1.msra.mxu0 0.0
    %238 = vmatprep.subr.mxu0 0.0
    %239 = vmatpush1.msra.mxu0 0.0
    %240 = vmatprep.subr.mxu0 0.0
    %241 = vmatpush1.msra.mxu0 0.0
    %242 = vmatprep.subr.mxu0 0.0
    %243 = vmatpush1.msra.mxu0 0.0
    %244 = vmatprep.subr.mxu0 0.0
    %245 = vmatpush1.msra.mxu0 0.0
    %246 = vmatprep.subr.mxu0 0.0
    %247 = vmatpush1.msra.mxu0 0.0
    %248 = vmatprep.subr.mxu0 0.0
    %249 = vmatpush1.msra.mxu0 0.0
    %250 = vmatprep.subr.mxu0 0.0
    %251 = vmatpush1.msra.mxu0 0.0
    %252 = vmatprep.subr.mxu0 0.0
    %253 = vmatpush1.msra.mxu0 0.0
    %254 = vmatprep.subr.mxu0 0.0
    %255 = vmatpush1.msra.mxu0 0.0
    %256 = vmatprep.subr.mxu0 0.0
    %257 = vmatpush1.msra.mxu0 0.0
    %258 = vmatprep.subr.mxu0 0.0
    %259 = vmatpush1.msra.mxu0 0.0
    %260 = vmatprep.subr.mxu0 0.0
    %261 = vmatpush1.msra.mxu0 0.0
    %262 = vmatprep.subr.mxu0 0.0
    %263 = vmatpush1.msra.mxu0 0.0
    %264 = vmatprep.subr.mxu0 0.0
    %265 = vmatpush1.msra.mxu0 0.0
    %266 = vmatprep.subr.mxu0 0.0
    %267 = vmatpush1.msra.mxu0 0.0
    %268 = vmatprep.subr.mxu0 0.0
    %269 = vmatpush1.msra.mxu0 0.0
    %270 = vmatprep.subr.mxu0 0.0
    %271 = vmatpush1.msra.mxu0 0.0
    %272 = vmatprep.subr.mxu0 0.0
    %273 = vmatpush1.msra.mxu0 0.0
    %274 = vmatprep.subr.mxu0 0.0
    %275 = vmatpush1.msra.mxu0 0.0
    %276 = vmatprep.mubr.f32.mxu0 0.0
    %277 = vmatmul.mubr.f32.gmra.mrb[0].mxu0 %v207
    %v278 = vpop.f32.mrb[0].mxu0
    %v279 = vadd.f32 %v205, %v278
    %v280 = vpop.f32.mrb[0].mxu0
    %281 = vmatprep.mubr.f32.mxu0 0.0
    %282 = vmatmul.mubr.f32.gmra.mrb[0].mxu0 %v210
    %v283 = vpop.f32.mrb[0].mxu0
    %v284 = vadd.f32 %v205, %v283
    %v285 = vpop.f32.mrb[0].mxu0
    %286 = vdwg.mxu0
    %288 = vrot.lane.b32.xlu0 %v205, 96
    %v289 = vpop.permute.xlu0 %288
    %291 = vmatprep.subr.mxu0 0.0
    %292 = vmatpush1.msra.mxu0 %v193
    %293 = vmatprep.subr.mxu0 0.0
    %294 = vmatpush1.msra.mxu0 %v194
    %295 = vmatprep.subr.mxu0 0.0
    %296 = vmatpush1.msra.mxu0 %v195
    %297 = vmatprep.subr.mxu0 0.0
    %298 = vmatpush1.msra.mxu0 %v196
    %299 = vmatprep.subr.mxu0 0.0
    %300 = vmatpush1.msra.mxu0 0.0
    %301 = vmatprep.subr.mxu0 0.0
    %302 = vmatpush1.msra.mxu0 0.0
    %303 = vmatprep.subr.mxu0 0.0
    %304 = vmatpush1.msra.mxu0 0.0
    %305 = vmatprep.subr.mxu0 0.0
    %306 = vmatpush1.msra.mxu0 0.0
    %307 = vmatprep.subr.mxu0 0.0
    %308 = vmatpush1.msra.mxu0 0.0
    %309 = vmatprep.subr.mxu0 0.0
    %310 = vmatpush1.msra.mxu0 0.0
    %311 = vmatprep.subr.mxu0 0.0
    %312 = vmatpush1.msra.mxu0 0.0
    %313 = vmatprep.subr.mxu0 0.0
    %314 = vmatpush1.msra.mxu0 0.0
    %315 = vmatprep.subr.mxu0 0.0
    %316 = vmatpush1.msra.mxu0 0.0
    %317 = vmatprep.subr.mxu0 0.0
    %318 = vmatpush1.msra.mxu0 0.0
    %319 = vmatprep.subr.mxu0 0.0
    %320 = vmatpush1.msra.mxu0 0.0
    %321 = vmatprep.subr.mxu0 0.0
    %322 = vmatpush1.msra.mxu0 0.0
    %323 = vmatprep.subr.mxu0 0.0
    %324 = vmatpush1.msra.mxu0 0.0
    %325 = vmatprep.subr.mxu0 0.0
    %326 = vmatpush1.msra.mxu0 0.0
    %327 = vmatprep.subr.mxu0 0.0
    %328 = vmatpush1.msra.mxu0 0.0
    %329 = vmatprep.subr.mxu0 0.0
    %330 = vmatpush1.msra.mxu0 0.0
    %331 = vmatprep.subr.mxu0 0.0
    %332 = vmatpush1.msra.mxu0 0.0
    %333 = vmatprep.subr.mxu0 0.0
    %334 = vmatpush1.msra.mxu0 0.0
    %335 = vmatprep.subr.mxu0 0.0
    %336 = vmatpush1.msra.mxu0 0.0
    %337 = vmatprep.subr.mxu0 0.0
    %338 = vmatpush1.msra.mxu0 0.0
    %339 = vmatprep.subr.mxu0 0.0
    %340 = vmatpush1.msra.mxu0 0.0
    %341 = vmatprep.subr.mxu0 0.0
    %342 = vmatpush1.msra.mxu0 0.0
    %343 = vmatprep.subr.mxu0 0.0
    %344 = vmatpush1.msra.mxu0 0.0
    %345 = vmatprep.subr.mxu0 0.0
    %346 = vmatpush1.msra.mxu0 0.0
    %347 = vmatprep.subr.mxu0 0.0
    %348 = vmatpush1.msra.mxu0 0.0
    %349 = vmatprep.subr.mxu0 0.0
    %350 = vmatpush1.msra.mxu0 0.0
    %351 = vmatprep.subr.mxu0 0.0
    %352 = vmatpush1.msra.mxu0 0.0
    %353 = vmatprep.subr.mxu0 0.0
    %354 = vmatpush1.msra.mxu0 0.0
    %355 = vmatprep.mubr.f32.mxu0 0.0
    %356 = vmatmul.mubr.f32.gmra.mrb[0].mxu0 %v207
    %v357 = vpop.f32.mrb[0].mxu0
    %v358 = vadd.f32 %v289, %v357
    %v359 = vpop.f32.mrb[0].mxu0
    %360 = vmatprep.mubr.f32.mxu0 0.0
    %361 = vmatmul.mubr.f32.gmra.mrb[0].mxu0 %v210
    %v362 = vpop.f32.mrb[0].mxu0
    %v363 = vadd.f32 %v289, %v362
    %v364 = vpop.f32.mrb[0].mxu0
    %365 = vdwg.mxu0
    %366 = vrot.lane.b32.xlu0 %v205, 64
    %v367 = vpop.permute.xlu0 %366
    %369 = vmatprep.subr.mxu0 0.0
    %370 = vmatpush1.msra.mxu0 %v198
    %371 = vmatprep.subr.mxu0 0.0
    %372 = vmatpush1.msra.mxu0 %v199
    %373 = vmatprep.subr.mxu0 0.0
    %374 = vmatpush1.msra.mxu0 %v200
    %375 = vmatprep.subr.mxu0 0.0
    %376 = vmatpush1.msra.mxu0 %v201
    %377 = vmatprep.subr.mxu0 0.0
    %378 = vmatpush1.msra.mxu0 0.0
    %379 = vmatprep.subr.mxu0 0.0
    %380 = vmatpush1.msra.mxu0 0.0
    %381 = vmatprep.subr.mxu0 0.0
    %382 = vmatpush1.msra.mxu0 0.0
    %383 = vmatprep.subr.mxu0 0.0
    %384 = vmatpush1.msra.mxu0 0.0
    %385 = vmatprep.subr.mxu0 0.0
    %386 = vmatpush1.msra.mxu0 0.0
    %387 = vmatprep.subr.mxu0 0.0
    %388 = vmatpush1.msra.mxu0 0.0
    %389 = vmatprep.subr.mxu0 0.0
    %390 = vmatpush1.msra.mxu0 0.0
    %391 = vmatprep.subr.mxu0 0.0
    %392 = vmatpush1.msra.mxu0 0.0
    %393 = vmatprep.subr.mxu0 0.0
    %394 = vmatpush1.msra.mxu0 0.0
    %395 = vmatprep.subr.mxu0 0.0
    %396 = vmatpush1.msra.mxu0 0.0
    %397 = vmatprep.subr.mxu0 0.0
    %398 = vmatpush1.msra.mxu0 0.0
    %399 = vmatprep.subr.mxu0 0.0
    %400 = vmatpush1.msra.mxu0 0.0
    %401 = vmatprep.subr.mxu0 0.0
    %402 = vmatpush1.msra.mxu0 0.0
    %403 = vmatprep.subr.mxu0 0.0
    %404 = vmatpush1.msra.mxu0 0.0
    %405 = vmatprep.subr.mxu0 0.0
    %406 = vmatpush1.msra.mxu0 0.0
    %407 = vmatprep.subr.mxu0 0.0
    %408 = vmatpush1.msra.mxu0 0.0
    %409 = vmatprep.subr.mxu0 0.0
    %410 = vmatpush1.msra.mxu0 0.0
    %411 = vmatprep.subr.mxu0 0.0
    %412 = vmatpush1.msra.mxu0 0.0
    %413 = vmatprep.subr.mxu0 0.0
    %414 = vmatpush1.msra.mxu0 0.0
    %415 = vmatprep.subr.mxu0 0.0
    %416 = vmatpush1.msra.mxu0 0.0
    %417 = vmatprep.subr.mxu0 0.0
    %418 = vmatpush1.msra.mxu0 0.0
    %419 = vmatprep.subr.mxu0 0.0
    %420 = vmatpush1.msra.mxu0 0.0
    %421 = vmatprep.subr.mxu0 0.0
    %422 = vmatpush1.msra.mxu0 0.0
    %423 = vmatprep.subr.mxu0 0.0
    %424 = vmatpush1.msra.mxu0 0.0
    %425 = vmatprep.subr.mxu0 0.0
    %426 = vmatpush1.msra.mxu0 0.0
    %427 = vmatprep.subr.mxu0 0.0
    %428 = vmatpush1.msra.mxu0 0.0
    %429 = vmatprep.subr.mxu0 0.0
    %430 = vmatpush1.msra.mxu0 0.0
    %431 = vmatprep.subr.mxu0 0.0
    %432 = vmatpush1.msra.mxu0 0.0
    %433 = vmatprep.mubr.f32.mxu0 0.0
    %434 = vmatmul.mubr.f32.gmra.mrb[0].mxu0 %v207
    %v435 = vpop.f32.mrb[0].mxu0
    %v436 = vadd.f32 %v367, %v435
    %v437 = vpop.f32.mrb[0].mxu0
    %438 = vmatprep.mubr.f32.mxu0 0.0
    %439 = vmatmul.mubr.f32.gmra.mrb[0].mxu0 %v210
    %v440 = vpop.f32.mrb[0].mxu0
    %v441 = vadd.f32 %v367, %v440
    %v442 = vpop.f32.mrb[0].mxu0
    %443 = vdwg.mxu0
    %vm444 = vcmask 130048
    %v446 = vsel %vm444, %v279, 0
    %v449 = vsel %vm444, %v358, 0
    %451 = vmatprep.subr.mxu0 0.0
    %452 = vmatpush1.xpose.msra.mxu0 %v449
    %453 = vmatprep.subr.mxu0 0.0
    %454 = vmatpush1.xpose.msra.mxu0 0.0
    %455 = vmatprep.subr.mxu0 0.0
    %456 = vmatpush1.xpose.msra.mxu0 0.0
    %457 = vmatprep.subr.mxu0 0.0
    %458 = vmatpush1.xpose.msra.mxu0 0.0
    %459 = vmatprep.subr.mxu0 0.0
    %460 = vmatpush1.xpose.msra.mxu0 0.0
    %461 = vmatprep.subr.mxu0 0.0
    %462 = vmatpush1.xpose.msra.mxu0 0.0
    %463 = vmatprep.subr.mxu0 0.0
    %464 = vmatpush1.xpose.msra.mxu0 0.0
    %465 = vmatprep.subr.mxu0 0.0
    %466 = vmatpush1.xpose.msra.mxu0 0.0
    %467 = vmatprep.subr.mxu0 0.0
    %468 = vmatpush1.xpose.msra.mxu0 0.0
    %469 = vmatprep.subr.mxu0 0.0
    %470 = vmatpush1.xpose.msra.mxu0 0.0
    %471 = vmatprep.subr.mxu0 0.0
    %472 = vmatpush1.xpose.msra.mxu0 0.0
    %473 = vmatprep.subr.mxu0 0.0
    %474 = vmatpush1.xpose.msra.mxu0 0.0
    %475 = vmatprep.subr.mxu0 0.0
    %476 = vmatpush1.xpose.msra.mxu0 0.0
    %477 = vmatprep.subr.mxu0 0.0
    %478 = vmatpush1.xpose.msra.mxu0 0.0
    %479 = vmatprep.subr.mxu0 0.0
    %480 = vmatpush1.xpose.msra.mxu0 0.0
    %481 = vmatprep.subr.mxu0 0.0
    %482 = vmatpush1.xpose.msra.mxu0 0.0
    %483 = vmatprep.subr.mxu0 0.0
    %484 = vmatpush1.xpose.msra.mxu0 0.0
    %485 = vmatprep.subr.mxu0 0.0
    %486 = vmatpush1.xpose.msra.mxu0 0.0
    %487 = vmatprep.subr.mxu0 0.0
    %488 = vmatpush1.xpose.msra.mxu0 0.0
    %489 = vmatprep.subr.mxu0 0.0
    %490 = vmatpush1.xpose.msra.mxu0 0.0
    %491 = vmatprep.subr.mxu0 0.0
    %492 = vmatpush1.xpose.msra.mxu0 0.0
    %493 = vmatprep.subr.mxu0 0.0
    %494 = vmatpush1.xpose.msra.mxu0 0.0
    %495 = vmatprep.subr.mxu0 0.0
    %496 = vmatpush1.xpose.msra.mxu0 0.0
    %497 = vmatprep.subr.mxu0 0.0
    %498 = vmatpush1.xpose.msra.mxu0 0.0
    %499 = vmatprep.subr.mxu0 0.0
    %500 = vmatpush1.xpose.msra.mxu0 0.0
    %501 = vmatprep.subr.mxu0 0.0
    %502 = vmatpush1.xpose.msra.mxu0 0.0
    %503 = vmatprep.subr.mxu0 0.0
    %504 = vmatpush1.xpose.msra.mxu0 0.0
    %505 = vmatprep.subr.mxu0 0.0
    %506 = vmatpush1.xpose.msra.mxu0 0.0
    %507 = vmatprep.subr.mxu0 0.0
    %508 = vmatpush1.xpose.msra.mxu0 0.0
    %509 = vmatprep.subr.mxu0 0.0
    %510 = vmatpush1.xpose.msra.mxu0 0.0
    %511 = vmatprep.subr.mxu0 0.0
    %512 = vmatpush1.xpose.msra.mxu0 0.0
    %513 = vmatprep.subr.mxu0 0.0
    %514 = vmatpush1.xpose.msra.mxu0 0.0
    %515 = vmatprep.mubr.f32.mxu0 0.0
    %516 = vmatmul.mubr.f32.gmra.mrb[0].mxu0 %v446
    %v517 = vpop.f32.mrb[0].mxu0
    %v518 = vadd.f32 0.0, %v517
    %v519 = vpop.f32.mrb[0].mxu0
    %520 = vdwg.mxu0
    %v522 = vsel %vm444, %v284, 0
    %v525 = vsel %vm444, %v363, 0
    %527 = vmatprep.subr.mxu0 0.0
    %528 = vmatpush1.xpose.msra.mxu0 %v525
    %529 = vmatprep.subr.mxu0 0.0
    %530 = vmatpush1.xpose.msra.mxu0 0.0
    %531 = vmatprep.subr.mxu0 0.0
    %532 = vmatpush1.xpose.msra.mxu0 0.0
    %533 = vmatprep.subr.mxu0 0.0
    %534 = vmatpush1.xpose.msra.mxu0 0.0
    %535 = vmatprep.subr.mxu0 0.0
    %536 = vmatpush1.xpose.msra.mxu0 0.0
    %537 = vmatprep.subr.mxu0 0.0
    %538 = vmatpush1.xpose.msra.mxu0 0.0
    %539 = vmatprep.subr.mxu0 0.0
    %540 = vmatpush1.xpose.msra.mxu0 0.0
    %541 = vmatprep.subr.mxu0 0.0
    %542 = vmatpush1.xpose.msra.mxu0 0.0
    %543 = vmatprep.subr.mxu0 0.0
    %544 = vmatpush1.xpose.msra.mxu0 0.0
    %545 = vmatprep.subr.mxu0 0.0
    %546 = vmatpush1.xpose.msra.mxu0 0.0
    %547 = vmatprep.subr.mxu0 0.0
    %548 = vmatpush1.xpose.msra.mxu0 0.0
    %549 = vmatprep.subr.mxu0 0.0
    %550 = vmatpush1.xpose.msra.mxu0 0.0
    %551 = vmatprep.subr.mxu0 0.0
    %552 = vmatpush1.xpose.msra.mxu0 0.0
    %553 = vmatprep.subr.mxu0 0.0
    %554 = vmatpush1.xpose.msra.mxu0 0.0
    %555 = vmatprep.subr.mxu0 0.0
    %556 = vmatpush1.xpose.msra.mxu0 0.0
    %557 = vmatprep.subr.mxu0 0.0
    %558 = vmatpush1.xpose.msra.mxu0 0.0
    %559 = vmatprep.subr.mxu0 0.0
    %560 = vmatpush1.xpose.msra.mxu0 0.0
    %561 = vmatprep.subr.mxu0 0.0
    %562 = vmatpush1.xpose.msra.mxu0 0.0
    %563 = vmatprep.subr.mxu0 0.0
    %564 = vmatpush1.xpose.msra.mxu0 0.0
    %565 = vmatprep.subr.mxu0 0.0
    %566 = vmatpush1.xpose.msra.mxu0 0.0
    %567 = vmatprep.subr.mxu0 0.0
    %568 = vmatpush1.xpose.msra.mxu0 0.0
    %569 = vmatprep.subr.mxu0 0.0
    %570 = vmatpush1.xpose.msra.mxu0 0.0
    %571 = vmatprep.subr.mxu0 0.0
    %572 = vmatpush1.xpose.msra.mxu0 0.0
    %573 = vmatprep.subr.mxu0 0.0
    %574 = vmatpush1.xpose.msra.mxu0 0.0
    %575 = vmatprep.subr.mxu0 0.0
    %576 = vmatpush1.xpose.msra.mxu0 0.0
    %577 = vmatprep.subr.mxu0 0.0
    %578 = vmatpush1.xpose.msra.mxu0 0.0
    %579 = vmatprep.subr.mxu0 0.0
    %580 = vmatpush1.xpose.msra.mxu0 0.0
    %581 = vmatprep.subr.mxu0 0.0
    %582 = vmatpush1.xpose.msra.mxu0 0.0
    %583 = vmatprep.subr.mxu0 0.0
    %584 = vmatpush1.xpose.msra.mxu0 0.0
    %585 = vmatprep.subr.mxu0 0.0
    %586 = vmatpush1.xpose.msra.mxu0 0.0
    %587 = vmatprep.subr.mxu0 0.0
    %588 = vmatpush1.xpose.msra.mxu0 0.0
    %589 = vmatprep.subr.mxu0 0.0
    %590 = vmatpush1.xpose.msra.mxu0 0.0
    %591 = vmatprep.mubr.f32.mxu0 0.0
    %592 = vmatmul.mubr.f32.gmra.mrb[0].mxu0 %v522
    %v593 = vpop.f32.mrb[0].mxu0
    %v594 = vadd.f32 0.0, %v593
    %v595 = vpop.f32.mrb[0].mxu0
    %596 = vdwg.mxu0
    %v597 = vmul.f32 %v518, 0.25
    %v598 = vmul.f32 %v594, 0.25
    %v599 = vsel %vm146, 1, 0
    %vm600 = vcmp.eq.s32.totalorder %v599, 1
    %v601 = vsel %vm600, %v597, -1e+30
    %v602 = vsel %vm600, %v598, -1e+30
    %vm603 = vcmask 64512
    %v604 = vsel %vm603, %v601, -inf
    %605 = vmax.xlane.f32.xlu0 %v604
    %v606 = vpop.xlane.xlu0 %605
    %v607 = vsel %vm603, %v602, -inf
    %608 = vmax.xlane.f32.xlu0 %v607
    %v609 = vpop.xlane.xlu0 %608
    %v610 = vsub.f32 %v601, %v606
    %v611 = vsub.f32 %v602, %v609
    %v612 = vmul.f32 %v610, 1.442695
    %v613 = vpow.pop %v612
    %v614 = vmul.f32 %v611, 1.442695
    %v615 = vpow.pop %v614
    %v616 = vsel %vm603, %v613, 0.0
    %617 = vadd.xlane.f32.xlu0 %v616
    %v618 = vpop.xlane.xlu0 %617
    %v619 = vsel %vm603, %v615, 0.0
    %620 = vadd.xlane.f32.xlu0 %v619
    %v621 = vpop.xlane.xlu0 %620
    %v622 = vrcp.pop %v618
    %v623 = vrcp.pop %v621
    %v624 = vmul.f32 %v613, %v622
    %v625 = vmul.f32 %v615, %v623
    %v627 = vsel %vm603, %v624, 0
    %629 = vmatprep.subr.mxu0 0.0
    %630 = vmatpush1.msra.mxu0 %v436
    %631 = vmatprep.subr.mxu0 0.0
    %632 = vmatpush1.msra.mxu0 0.0
    %633 = vmatprep.subr.mxu0 0.0
    %634 = vmatpush1.msra.mxu0 0.0
    %635 = vmatprep.subr.mxu0 0.0
    %636 = vmatpush1.msra.mxu0 0.0
    %637 = vmatprep.subr.mxu0 0.0
    %638 = vmatpush1.msra.mxu0 0.0
    %639 = vmatprep.subr.mxu0 0.0
    %640 = vmatpush1.msra.mxu0 0.0
    %641 = vmatprep.subr.mxu0 0.0
    %642 = vmatpush1.msra.mxu0 0.0
    %643 = vmatprep.subr.mxu0 0.0
    %644 = vmatpush1.msra.mxu0 0.0
    %645 = vmatprep.subr.mxu0 0.0
    %646 = vmatpush1.msra.mxu0 0.0
    %647 = vmatprep.subr.mxu0 0.0
    %648 = vmatpush1.msra.mxu0 0.0
    %649 = vmatprep.subr.mxu0 0.0
    %650 = vmatpush1.msra.mxu0 0.0
    %651 = vmatprep.subr.mxu0 0.0
    %652 = vmatpush1.msra.mxu0 0.0
    %653 = vmatprep.subr.mxu0 0.0
    %654 = vmatpush1.msra.mxu0 0.0
    %655 = vmatprep.subr.mxu0 0.0
    %656 = vmatpush1.msra.mxu0 0.0
    %657 = vmatprep.subr.mxu0 0.0
    %658 = vmatpush1.msra.mxu0 0.0
    %659 = vmatprep.subr.mxu0 0.0
    %660 = vmatpush1.msra.mxu0 0.0
    %661 = vmatprep.subr.mxu0 0.0
    %662 = vmatpush1.msra.mxu0 0.0
    %663 = vmatprep.subr.mxu0 0.0
    %664 = vmatpush1.msra.mxu0 0.0
    %665 = vmatprep.subr.mxu0 0.0
    %666 = vmatpush1.msra.mxu0 0.0
    %667 = vmatprep.subr.mxu0 0.0
    %668 = vmatpush1.msra.mxu0 0.0
    %669 = vmatprep.subr.mxu0 0.0
    %670 = vmatpush1.msra.mxu0 0.0
    %671 = vmatprep.subr.mxu0 0.0
    %672 = vmatpush1.msra.mxu0 0.0
    %673 = vmatprep.subr.mxu0 0.0
    %674 = vmatpush1.msra.mxu0 0.0
    %675 = vmatprep.subr.mxu0 0.0
    %676 = vmatpush1.msra.mxu0 0.0
    %677 = vmatprep.subr.mxu0 0.0
    %678 = vmatpush1.msra.mxu0 0.0
    %679 = vmatprep.subr.mxu0 0.0
    %680 = vmatpush1.msra.mxu0 0.0
    %681 = vmatprep.subr.mxu0 0.0
    %682 = vmatpush1.msra.mxu0 0.0
    %683 = vmatprep.subr.mxu0 0.0
    %684 = vmatpush1.msra.mxu0 0.0
    %685 = vmatprep.subr.mxu0 0.0
    %686 = vmatpush1.msra.mxu0 0.0
    %687 = vmatprep.subr.mxu0 0.0
    %688 = vmatpush1.msra.mxu0 0.0
    %689 = vmatprep.subr.mxu0 0.0
    %690 = vmatpush1.msra.mxu0 0.0
    %691 = vmatprep.subr.mxu0 0.0
    %692 = vmatpush1.msra.mxu0 0.0
    %693 = vmatprep.mubr.f32.mxu0 0.0
    %694 = vmatmul.mubr.f32.gmra.mrb[0].mxu0 %v627
    %v695 = vpop.f32.mrb[0].mxu0
    %v696 = vadd.f32 0.0, %v695
    %v697 = vpop.f32.mrb[0].mxu0
    %698 = vdwg.mxu0
    %v700 = vsel %vm603, %v625, 0
    %702 = vmatprep.subr.mxu0 0.0
    %703 = vmatpush1.msra.mxu0 %v441
    %704 = vmatprep.subr.mxu0 0.0
    %705 = vmatpush1.msra.mxu0 0.0
    %706 = vmatprep.subr.mxu0 0.0
    %707 = vmatpush1.msra.mxu0 0.0
    %708 = vmatprep.subr.mxu0 0.0
    %709 = vmatpush1.msra.mxu0 0.0
    %710 = vmatprep.subr.mxu0 0.0
    %711 = vmatpush1.msra.mxu0 0.0
    %712 = vmatprep.subr.mxu0 0.0
    %713 = vmatpush1.msra.mxu0 0.0
    %714 = vmatprep.subr.mxu0 0.0
    %715 = vmatpush1.msra.mxu0 0.0
    %716 = vmatprep.subr.mxu0 0.0
    %717 = vmatpush1.msra.mxu0 0.0
    %718 = vmatprep.subr.mxu0 0.0
    %719 = vmatpush1.msra.mxu0 0.0
    %720 = vmatprep.subr.mxu0 0.0
    %721 = vmatpush1.msra.mxu0 0.0
    %722 = vmatprep.subr.mxu0 0.0
    %723 = vmatpush1.msra.mxu0 0.0
    %724 = vmatprep.subr.mxu0 0.0
    %725 = vmatpush1.msra.mxu0 0.0
    %726 = vmatprep.subr.mxu0 0.0
    %727 = vmatpush1.msra.mxu0 0.0
    %728 = vmatprep.subr.mxu0 0.0
    %729 = vmatpush1.msra.mxu0 0.0
    %730 = vmatprep.subr.mxu0 0.0
    %731 = vmatpush1.msra.mxu0 0.0
    %732 = vmatprep.subr.mxu0 0.0
    %733 = vmatpush1.msra.mxu0 0.0
    %734 = vmatprep.subr.mxu0 0.0
    %735 = vmatpush1.msra.mxu0 0.0
    %736 = vmatprep.subr.mxu0 0.0
    %737 = vmatpush1.msra.mxu0 0.0
    %738 = vmatprep.subr.mxu0 0.0
    %739 = vmatpush1.msra.mxu0 0.0
    %740 = vmatprep.subr.mxu0 0.0
    %741 = vmatpush1.msra.mxu0 0.0
    %742 = vmatprep.subr.mxu0 0.0
    %743 = vmatpush1.msra.mxu0 0.0
    %744 = vmatprep.subr.mxu0 0.0
    %745 = vmatpush1.msra.mxu0 0.0
    %746 = vmatprep.subr.mxu0 0.0
    %747 = vmatpush1.msra.mxu0 0.0
    %748 = vmatprep.subr.mxu0 0.0
    %749 = vmatpush1.msra.mxu0 0.0
    %750 = vmatprep.subr.mxu0 0.0
    %751 = vmatpush1.msra.mxu0 0.0
    %752 = vmatprep.subr.mxu0 0.0
    %753 = vmatpush1.msra.mxu0 0.0
    %754 = vmatprep.subr.mxu0 0.0
    %755 = vmatpush1.msra.mxu0 0.0
    %756 = vmatprep.subr.mxu0 0.0
    %757 = vmatpush1.msra.mxu0 0.0
    %758 = vmatprep.subr.mxu0 0.0
    %759 = vmatpush1.msra.mxu0 0.0
    %760 = vmatprep.subr.mxu0 0.0
    %761 = vmatpush1.msra.mxu0 0.0
    %762 = vmatprep.subr.mxu0 0.0
    %763 = vmatpush1.msra.mxu0 0.0
    %764 = vmatprep.subr.mxu0 0.0
    %765 = vmatpush1.msra.mxu0 0.0
    %766 = vmatprep.mubr.f32.mxu0 0.0
    %767 = vmatmul.mubr.f32.gmra.mrb[0].mxu0 %v700
    %v768 = vpop.f32.mrb[0].mxu0
    %v769 = vadd.f32 0.0, %v768
    %v770 = vpop.f32.mrb[0].mxu0
    %771 = vdwg.mxu0
    %v772 = vld [vmem:[%s2] sm:$0xff]
    %v773 = vld [vmem:[%s2 + $0x8] sm:$0xff]
    %s774 = scalar_lea.vmem %s1, 32
    %v775 = vld [vmem:[%s774] sm:$0xff]
    %v776 = vld [vmem:[%s774 + $0x8] sm:$0xff]
    %v777 = vld [vmem:[%s774 + $0x10] sm:$0xff]
    %v778 = vld [vmem:[%s774 + $0x18] sm:$0xff]
    %s779 = scalar_lea.vmem %s1, 96
    %v780 = vld [vmem:[%s779] sm:$0xff]
    %v781 = vld [vmem:[%s779 + $0x8] sm:$0xff]
    %v782 = vld [vmem:[%s779 + $0x10] sm:$0xff]
    %v783 = vld [vmem:[%s779 + $0x18] sm:$0xff]
    %s784 = scalar_lea.vmem %s1, 160
    %v785 = vld [vmem:[%s784] sm:$0xff]
    %v786 = vld [vmem:[%s784 + $0x8] sm:$0xff]
    %v787 = vld [vmem:[%s784 + $0x10] sm:$0xff]
    %v788 = vld [vmem:[%s784 + $0x18] sm:$0xff]
    %789 = vrot.lane.b32.xlu0 %v205, 112
    %v790 = vpop.permute.xlu0 %789
    %792 = vmatprep.subr.mxu0 0.0
    %793 = vmatpush1.msra.mxu0 %v775
    %794 = vmatprep.subr.mxu0 0.0
    %795 = vmatpush1.msra.mxu0 %v776
    %796 = vmatprep.subr.mxu0 0.0
    %797 = vmatpush1.msra.mxu0 %v777
    %798 = vmatprep.subr.mxu0 0.0
    %799 = vmatpush1.msra.mxu0 %v778
    %800 = vmatprep.subr.mxu0 0.0
    %801 = vmatpush1.msra.mxu0 0.0
    %802 = vmatprep.subr.mxu0 0.0
    %803 = vmatpush1.msra.mxu0 0.0
    %804 = vmatprep.subr.mxu0 0.0
    %805 = vmatpush1.msra.mxu0 0.0
    %806 = vmatprep.subr.mxu0 0.0
    %807 = vmatpush1.msra.mxu0 0.0
    %808 = vmatprep.subr.mxu0 0.0
    %809 = vmatpush1.msra.mxu0 0.0
    %810 = vmatprep.subr.mxu0 0.0
    %811 = vmatpush1.msra.mxu0 0.0
    %812 = vmatprep.subr.mxu0 0.0
    %813 = vmatpush1.msra.mxu0 0.0
    %814 = vmatprep.subr.mxu0 0.0
    %815 = vmatpush1.msra.mxu0 0.0
    %816 = vmatprep.subr.mxu0 0.0
    %817 = vmatpush1.msra.mxu0 0.0
    %818 = vmatprep.subr.mxu0 0.0
    %819 = vmatpush1.msra.mxu0 0.0
    %820 = vmatprep.subr.mxu0 0.0
    %821 = vmatpush1.msra.mxu0 0.0
    %822 = vmatprep.subr.mxu0 0.0
    %823 = vmatpush1.msra.mxu0 0.0
    %824 = vmatprep.subr.mxu0 0.0
    %825 = vmatpush1.msra.mxu0 0.0
    %826 = vmatprep.subr.mxu0 0.0
    %827 = vmatpush1.msra.mxu0 0.0
    %828 = vmatprep.subr.mxu0 0.0
    %829 = vmatpush1.msra.mxu0 0.0
    %830 = vmatprep.subr.mxu0 0.0
    %831 = vmatpush1.msra.mxu0 0.0
    %832 = vmatprep.subr.mxu0 0.0
    %833 = vmatpush1.msra.mxu0 0.0
    %834 = vmatprep.subr.mxu0 0.0
    %835 = vmatpush1.msra.mxu0 0.0
    %836 = vmatprep.subr.mxu0 0.0
    %837 = vmatpush1.msra.mxu0 0.0
    %838 = vmatprep.subr.mxu0 0.0
    %839 = vmatpush1.msra.mxu0 0.0
    %840 = vmatprep.subr.mxu0 0.0
    %841 = vmatpush1.msra.mxu0 0.0
    %842 = vmatprep.subr.mxu0 0.0
    %843 = vmatpush1.msra.mxu0 0.0
    %844 = vmatprep.subr.mxu0 0.0
    %845 = vmatpush1.msra.mxu0 0.0
    %846 = vmatprep.subr.mxu0 0.0
    %847 = vmatpush1.msra.mxu0 0.0
    %848 = vmatprep.subr.mxu0 0.0
    %849 = vmatpush1.msra.mxu0 0.0
    %850 = vmatprep.subr.mxu0 0.0
    %851 = vmatpush1.msra.mxu0 0.0
    %852 = vmatprep.subr.mxu0 0.0
    %853 = vmatpush1.msra.mxu0 0.0
    %854 = vmatprep.subr.mxu0 0.0
    %855 = vmatpush1.msra.mxu0 0.0
    %856 = vmatprep.mubr.f32.mxu0 0.0
    %857 = vmatmul.mubr.f32.gmra.mrb[0].mxu0 %v207
    %v858 = vpop.f32.mrb[0].mxu0
    %v859 = vadd.f32 %v790, %v858
    %v860 = vpop.f32.mrb[0].mxu0
    %861 = vmatprep.mubr.f32.mxu0 0.0
    %862 = vmatmul.mubr.f32.gmra.mrb[0].mxu0 %v210
    %v863 = vpop.f32.mrb[0].mxu0
    %v864 = vadd.f32 %v790, %v863
    %v865 = vpop.f32.mrb[0].mxu0
    %866 = vdwg.mxu0
    %867 = vrot.lane.b32.xlu0 %v205, 80
    %v868 = vpop.permute.xlu0 %867
    %870 = vmatprep.subr.mxu0 0.0
    %871 = vmatpush1.msra.mxu0 %v780
    %872 = vmatprep.subr.mxu0 0.0
    %873 = vmatpush1.msra.mxu0 %v781
    %874 = vmatprep.subr.mxu0 0.0
    %875 = vmatpush1.msra.mxu0 %v782
    %876 = vmatprep.subr.mxu0 0.0
    %877 = vmatpush1.msra.mxu0 %v783
    %878 = vmatprep.subr.mxu0 0.0
    %879 = vmatpush1.msra.mxu0 0.0
    %880 = vmatprep.subr.mxu0 0.0
    %881 = vmatpush1.msra.mxu0 0.0
    %882 = vmatprep.subr.mxu0 0.0
    %883 = vmatpush1.msra.mxu0 0.0
    %884 = vmatprep.subr.mxu0 0.0
    %885 = vmatpush1.msra.mxu0 0.0
    %886 = vmatprep.subr.mxu0 0.0
    %887 = vmatpush1.msra.mxu0 0.0
    %888 = vmatprep.subr.mxu0 0.0
    %889 = vmatpush1.msra.mxu0 0.0
    %890 = vmatprep.subr.mxu0 0.0
    %891 = vmatpush1.msra.mxu0 0.0
    %892 = vmatprep.subr.mxu0 0.0
    %893 = vmatpush1.msra.mxu0 0.0
    %894 = vmatprep.subr.mxu0 0.0
    %895 = vmatpush1.msra.mxu0 0.0
    %896 = vmatprep.subr.mxu0 0.0
    %897 = vmatpush1.msra.mxu0 0.0
    %898 = vmatprep.subr.mxu0 0.0
    %899 = vmatpush1.msra.mxu0 0.0
    %900 = vmatprep.subr.mxu0 0.0
    %901 = vmatpush1.msra.mxu0 0.0
    %902 = vmatprep.subr.mxu0 0.0
    %903 = vmatpush1.msra.mxu0 0.0
    %904 = vmatprep.subr.mxu0 0.0
    %905 = vmatpush1.msra.mxu0 0.0
    %906 = vmatprep.subr.mxu0 0.0
    %907 = vmatpush1.msra.mxu0 0.0
    %908 = vmatprep.subr.mxu0 0.0
    %909 = vmatpush1.msra.mxu0 0.0
    %910 = vmatprep.subr.mxu0 0.0
    %911 = vmatpush1.msra.mxu0 0.0
    %912 = vmatprep.subr.mxu0 0.0
    %913 = vmatpush1.msra.mxu0 0.0
    %914 = vmatprep.subr.mxu0 0.0
    %915 = vmatpush1.msra.mxu0 0.0
    %916 = vmatprep.subr.mxu0 0.0
    %917 = vmatpush1.msra.mxu0 0.0
    %918 = vmatprep.subr.mxu0 0.0
    %919 = vmatpush1.msra.mxu0 0.0
    %920 = vmatprep.subr.mxu0 0.0
    %921 = vmatpush1.msra.mxu0 0.0
    %922 = vmatprep.subr.mxu0 0.0
    %923 = vmatpush1.msra.mxu0 0.0
    %924 = vmatprep.subr.mxu0 0.0
    %925 = vmatpush1.msra.mxu0 0.0
    %926 = vmatprep.subr.mxu0 0.0
    %927 = vmatpush1.msra.mxu0 0.0
    %928 = vmatprep.subr.mxu0 0.0
    %929 = vmatpush1.msra.mxu0 0.0
    %930 = vmatprep.subr.mxu0 0.0
    %931 = vmatpush1.msra.mxu0 0.0
    %932 = vmatprep.subr.mxu0 0.0
    %933 = vmatpush1.msra.mxu0 0.0
    %934 = vmatprep.mubr.f32.mxu0 0.0
    %935 = vmatmul.mubr.f32.gmra.mrb[0].mxu0 %v207
    %v936 = vpop.f32.mrb[0].mxu0
    %v937 = vadd.f32 %v868, %v936
    %v938 = vpop.f32.mrb[0].mxu0
    %939 = vmatprep.mubr.f32.mxu0 0.0
    %940 = vmatmul.mubr.f32.gmra.mrb[0].mxu0 %v210
    %v941 = vpop.f32.mrb[0].mxu0
    %v942 = vadd.f32 %v868, %v941
    %v943 = vpop.f32.mrb[0].mxu0
    %944 = vdwg.mxu0
    %945 = vrot.lane.b32.xlu0 %v205, 48
    %v946 = vpop.permute.xlu0 %945
    %948 = vmatprep.subr.mxu0 0.0
    %949 = vmatpush1.msra.mxu0 %v785
    %950 = vmatprep.subr.mxu0 0.0
    %951 = vmatpush1.msra.mxu0 %v786
    %952 = vmatprep.subr.mxu0 0.0
    %953 = vmatpush1.msra.mxu0 %v787
    %954 = vmatprep.subr.mxu0 0.0
    %955 = vmatpush1.msra.mxu0 %v788
    %956 = vmatprep.subr.mxu0 0.0
    %957 = vmatpush1.msra.mxu0 0.0
    %958 = vmatprep.subr.mxu0 0.0
    %959 = vmatpush1.msra.mxu0 0.0
    %960 = vmatprep.subr.mxu0 0.0
    %961 = vmatpush1.msra.mxu0 0.0
    %962 = vmatprep.subr.mxu0 0.0
    %963 = vmatpush1.msra.mxu0 0.0
    %964 = vmatprep.subr.mxu0 0.0
    %965 = vmatpush1.msra.mxu0 0.0
    %966 = vmatprep.subr.mxu0 0.0
    %967 = vmatpush1.msra.mxu0 0.0
    %968 = vmatprep.subr.mxu0 0.0
    %969 = vmatpush1.msra.mxu0 0.0
    %970 = vmatprep.subr.mxu0 0.0
    %971 = vmatpush1.msra.mxu0 0.0
    %972 = vmatprep.subr.mxu0 0.0
    %973 = vmatpush1.msra.mxu0 0.0
    %974 = vmatprep.subr.mxu0 0.0
    %975 = vmatpush1.msra.mxu0 0.0
    %976 = vmatprep.subr.mxu0 0.0
    %977 = vmatpush1.msra.mxu0 0.0
    %978 = vmatprep.subr.mxu0 0.0
    %979 = vmatpush1.msra.mxu0 0.0
    %980 = vmatprep.subr.mxu0 0.0
    %981 = vmatpush1.msra.mxu0 0.0
    %982 = vmatprep.subr.mxu0 0.0
    %983 = vmatpush1.msra.mxu0 0.0
    %984 = vmatprep.subr.mxu0 0.0
    %985 = vmatpush1.msra.mxu0 0.0
    %986 = vmatprep.subr.mxu0 0.0
    %987 = vmatpush1.msra.mxu0 0.0
    %988 = vmatprep.subr.mxu0 0.0
    %989 = vmatpush1.msra.mxu0 0.0
    %990 = vmatprep.subr.mxu0 0.0
    %991 = vmatpush1.msra.mxu0 0.0
    %992 = vmatprep.subr.mxu0 0.0
    %993 = vmatpush1.msra.mxu0 0.0
    %994 = vmatprep.subr.mxu0 0.0
    %995 = vmatpush1.msra.mxu0 0.0
    %996 = vmatprep.subr.mxu0 0.0
    %997 = vmatpush1.msra.mxu0 0.0
    %998 = vmatprep.subr.mxu0 0.0
    %999 = vmatpush1.msra.mxu0 0.0
    %1000 = vmatprep.subr.mxu0 0.0
    %1001 = vmatpush1.msra.mxu0 0.0
    %1002 = vmatprep.subr.mxu0 0.0
    %1003 = vmatpush1.msra.mxu0 0.0
    %1004 = vmatprep.subr.mxu0 0.0
    %1005 = vmatpush1.msra.mxu0 0.0
    %1006 = vmatprep.subr.mxu0 0.0
    %1007 = vmatpush1.msra.mxu0 0.0
    %1008 = vmatprep.subr.mxu0 0.0
    %1009 = vmatpush1.msra.mxu0 0.0
    %1010 = vmatprep.subr.mxu0 0.0
    %1011 = vmatpush1.msra.mxu0 0.0
    %1012 = vmatprep.mubr.f32.mxu0 0.0
    %1013 = vmatmul.mubr.f32.gmra.mrb[0].mxu0 %v207
    %v1014 = vpop.f32.mrb[0].mxu0
    %v1015 = vadd.f32 %v946, %v1014
    %v1016 = vpop.f32.mrb[0].mxu0
    %1017 = vmatprep.mubr.f32.mxu0 0.0
    %1018 = vmatmul.mubr.f32.gmra.mrb[0].mxu0 %v210
    %v1019 = vpop.f32.mrb[0].mxu0
    %v1020 = vadd.f32 %v946, %v1019
    %v1021 = vpop.f32.mrb[0].mxu0
    %1022 = vdwg.mxu0
    %v1024 = vsel %vm444, %v859, 0
    %v1027 = vsel %vm444, %v937, 0
    %1029 = vmatprep.subr.mxu0 0.0
    %1030 = vmatpush1.xpose.msra.mxu0 %v1027
    %1031 = vmatprep.subr.mxu0 0.0
    %1032 = vmatpush1.xpose.msra.mxu0 0.0
    %1033 = vmatprep.subr.mxu0 0.0
    %1034 = vmatpush1.xpose.msra.mxu0 0.0
    %1035 = vmatprep.subr.mxu0 0.0
    %1036 = vmatpush1.xpose.msra.mxu0 0.0
    %1037 = vmatprep.subr.mxu0 0.0
    %1038 = vmatpush1.xpose.msra.mxu0 0.0
    %1039 = vmatprep.subr.mxu0 0.0
    %1040 = vmatpush1.xpose.msra.mxu0 0.0
    %1041 = vmatprep.subr.mxu0 0.0
    %1042 = vmatpush1.xpose.msra.mxu0 0.0
    %1043 = vmatprep.subr.mxu0 0.0
    %1044 = vmatpush1.xpose.msra.mxu0 0.0
    %1045 = vmatprep.subr.mxu0 0.0
    %1046 = vmatpush1.xpose.msra.mxu0 0.0
    %1047 = vmatprep.subr.mxu0 0.0
    %1048 = vmatpush1.xpose.msra.mxu0 0.0
    %1049 = vmatprep.subr.mxu0 0.0
    %1050 = vmatpush1.xpose.msra.mxu0 0.0
    %1051 = vmatprep.subr.mxu0 0.0
    %1052 = vmatpush1.xpose.msra.mxu0 0.0
    %1053 = vmatprep.subr.mxu0 0.0
    %1054 = vmatpush1.xpose.msra.mxu0 0.0
    %1055 = vmatprep.subr.mxu0 0.0
    %1056 = vmatpush1.xpose.msra.mxu0 0.0
    %1057 = vmatprep.subr.mxu0 0.0
    %1058 = vmatpush1.xpose.msra.mxu0 0.0
    %1059 = vmatprep.subr.mxu0 0.0
    %1060 = vmatpush1.xpose.msra.mxu0 0.0
    %1061 = vmatprep.subr.mxu0 0.0
    %1062 = vmatpush1.xpose.msra.mxu0 0.0
    %1063 = vmatprep.subr.mxu0 0.0
    %1064 = vmatpush1.xpose.msra.mxu0 0.0
    %1065 = vmatprep.subr.mxu0 0.0
    %1066 = vmatpush1.xpose.msra.mxu0 0.0
    %1067 = vmatprep.subr.mxu0 0.0
    %1068 = vmatpush1.xpose.msra.mxu0 0.0
    %1069 = vmatprep.subr.mxu0 0.0
    %1070 = vmatpush1.xpose.msra.mxu0 0.0
    %1071 = vmatprep.subr.mxu0 0.0
    %1072 = vmatpush1.xpose.msra.mxu0 0.0
    %1073 = vmatprep.subr.mxu0 0.0
    %1074 = vmatpush1.xpose.msra.mxu0 0.0
    %1075 = vmatprep.subr.mxu0 0.0
    %1076 = vmatpush1.xpose.msra.mxu0 0.0
    %1077 = vmatprep.subr.mxu0 0.0
    %1078 = vmatpush1.xpose.msra.mxu0 0.0
    %1079 = vmatprep.subr.mxu0 0.0
    %1080 = vmatpush1.xpose.msra.mxu0 0.0
    %1081 = vmatprep.subr.mxu0 0.0
    %1082 = vmatpush1.xpose.msra.mxu0 0.0
    %1083 = vmatprep.subr.mxu0 0.0
    %1084 = vmatpush1.xpose.msra.mxu0 0.0
    %1085 = vmatprep.subr.mxu0 0.0
    %1086 = vmatpush1.xpose.msra.mxu0 0.0
    %1087 = vmatprep.subr.mxu0 0.0
    %1088 = vmatpush1.xpose.msra.mxu0 0.0
    %1089 = vmatprep.subr.mxu0 0.0
    %1090 = vmatpush1.xpose.msra.mxu0 0.0
    %1091 = vmatprep.subr.mxu0 0.0
    %1092 = vmatpush1.xpose.msra.mxu0 0.0
    %1093 = vmatprep.mubr.f32.mxu0 0.0
    %1094 = vmatmul.mubr.f32.gmra.mrb[0].mxu0 %v1024
    %v1095 = vpop.f32.mrb[0].mxu0
    %v1096 = vadd.f32 0.0, %v1095
    %v1097 = vpop.f32.mrb[0].mxu0
    %1098 = vdwg.mxu0
    %v1100 = vsel %vm444, %v864, 0
    %v1103 = vsel %vm444, %v942, 0
    %1105 = vmatprep.subr.mxu0 0.0
    %1106 = vmatpush1.xpose.msra.mxu0 %v1103
    %1107 = vmatprep.subr.mxu0 0.0
    %1108 = vmatpush1.xpose.msra.mxu0 0.0
    %1109 = vmatprep.subr.mxu0 0.0
    %1110 = vmatpush1.xpose.msra.mxu0 0.0
    %1111 = vmatprep.subr.mxu0 0.0
    %1112 = vmatpush1.xpose.msra.mxu0 0.0
    %1113 = vmatprep.subr.mxu0 0.0
    %1114 = vmatpush1.xpose.msra.mxu0 0.0
    %1115 = vmatprep.subr.mxu0 0.0
    %1116 = vmatpush1.xpose.msra.mxu0 0.0
    %1117 = vmatprep.subr.mxu0 0.0
    %1118 = vmatpush1.xpose.msra.mxu0 0.0
    %1119 = vmatprep.subr.mxu0 0.0
    %1120 = vmatpush1.xpose.msra.mxu0 0.0
    %1121 = vmatprep.subr.mxu0 0.0
    %1122 = vmatpush1.xpose.msra.mxu0 0.0
    %1123 = vmatprep.subr.mxu0 0.0
    %1124 = vmatpush1.xpose.msra.mxu0 0.0
    %1125 = vmatprep.subr.mxu0 0.0
    %1126 = vmatpush1.xpose.msra.mxu0 0.0
    %1127 = vmatprep.subr.mxu0 0.0
    %1128 = vmatpush1.xpose.msra.mxu0 0.0
    %1129 = vmatprep.subr.mxu0 0.0
    %1130 = vmatpush1.xpose.msra.mxu0 0.0
    %1131 = vmatprep.subr.mxu0 0.0
    %1132 = vmatpush1.xpose.msra.mxu0 0.0
    %1133 = vmatprep.subr.mxu0 0.0
    %1134 = vmatpush1.xpose.msra.mxu0 0.0
    %1135 = vmatprep.subr.mxu0 0.0
    %1136 = vmatpush1.xpose.msra.mxu0 0.0
    %1137 = vmatprep.subr.mxu0 0.0
    %1138 = vmatpush1.xpose.msra.mxu0 0.0
    %1139 = vmatprep.subr.mxu0 0.0
    %1140 = vmatpush1.xpose.msra.mxu0 0.0
    %1141 = vmatprep.subr.mxu0 0.0
    %1142 = vmatpush1.xpose.msra.mxu0 0.0
    %1143 = vmatprep.subr.mxu0 0.0
    %1144 = vmatpush1.xpose.msra.mxu0 0.0
    %1145 = vmatprep.subr.mxu0 0.0
    %1146 = vmatpush1.xpose.msra.mxu0 0.0
    %1147 = vmatprep.subr.mxu0 0.0
    %1148 = vmatpush1.xpose.msra.mxu0 0.0
    %1149 = vmatprep.subr.mxu0 0.0
    %1150 = vmatpush1.xpose.msra.mxu0 0.0
    %1151 = vmatprep.subr.mxu0 0.0
    %1152 = vmatpush1.xpose.msra.mxu0 0.0
    %1153 = vmatprep.subr.mxu0 0.0
    %1154 = vmatpush1.xpose.msra.mxu0 0.0
    %1155 = vmatprep.subr.mxu0 0.0
    %1156 = vmatpush1.xpose.msra.mxu0 0.0
    %1157 = vmatprep.subr.mxu0 0.0
    %1158 = vmatpush1.xpose.msra.mxu0 0.0
    %1159 = vmatprep.subr.mxu0 0.0
    %1160 = vmatpush1.xpose.msra.mxu0 0.0
    %1161 = vmatprep.subr.mxu0 0.0
    %1162 = vmatpush1.xpose.msra.mxu0 0.0
    %1163 = vmatprep.subr.mxu0 0.0
    %1164 = vmatpush1.xpose.msra.mxu0 0.0
    %1165 = vmatprep.subr.mxu0 0.0
    %1166 = vmatpush1.xpose.msra.mxu0 0.0
    %1167 = vmatprep.subr.mxu0 0.0
    %1168 = vmatpush1.xpose.msra.mxu0 0.0
    %1169 = vmatprep.mubr.f32.mxu0 0.0
    %1170 = vmatmul.mubr.f32.gmra.mrb[0].mxu0 %v1100
    %v1171 = vpop.f32.mrb[0].mxu0
    %v1172 = vadd.f32 0.0, %v1171
    %v1173 = vpop.f32.mrb[0].mxu0
    %1174 = vdwg.mxu0
    %v1175 = vmul.f32 %v1096, 0.25
    %v1176 = vmul.f32 %v1172, 0.25
    %v1177 = vsel %vm600, %v1175, -1e+30
    %v1178 = vsel %vm600, %v1176, -1e+30
    %v1179 = vsel %vm603, %v1177, -inf
    %1180 = vmax.xlane.f32.xlu0 %v1179
    %v1181 = vpop.xlane.xlu0 %1180
    %v1182 = vsel %vm603, %v1178, -inf
    %1183 = vmax.xlane.f32.xlu0 %v1182
    %v1184 = vpop.xlane.xlu0 %1183
    %v1185 = vsub.f32 %v1177, %v1181
    %v1186 = vsub.f32 %v1178, %v1184
    %v1187 = vmul.f32 %v1185, 1.442695
    %v1188 = vpow.pop %v1187
    %v1189 = vmul.f32 %v1186, 1.442695
    %v1190 = vpow.pop %v1189
    %v1191 = vsel %vm603, %v1188, 0.0
    %1192 = vadd.xlane.f32.xlu0 %v1191
    %v1193 = vpop.xlane.xlu0 %1192
    %v1194 = vsel %vm603, %v1190, 0.0
    %1195 = vadd.xlane.f32.xlu0 %v1194
    %v1196 = vpop.xlane.xlu0 %1195
    %v1197 = vrcp.pop %v1193
    %v1198 = vrcp.pop %v1196
    %v1199 = vmul.f32 %v1188, %v1197
    %v1200 = vmul.f32 %v1190, %v1198
    %v1202 = vsel %vm603, %v1199, 0
    %1204 = vmatprep.subr.mxu0 0.0
    %1205 = vmatpush1.msra.mxu0 %v1015
    %1206 = vmatprep.subr.mxu0 0.0
    %1207 = vmatpush1.msra.mxu0 0.0
    %1208 = vmatprep.subr.mxu0 0.0
    %1209 = vmatpush1.msra.mxu0 0.0
    %1210 = vmatprep.subr.mxu0 0.0
    %1211 = vmatpush1.msra.mxu0 0.0
    %1212 = vmatprep.subr.mxu0 0.0
    %1213 = vmatpush1.msra.mxu0 0.0
    %1214 = vmatprep.subr.mxu0 0.0
    %1215 = vmatpush1.msra.mxu0 0.0
    %1216 = vmatprep.subr.mxu0 0.0
    %1217 = vmatpush1.msra.mxu0 0.0
    %1218 = vmatprep.subr.mxu0 0.0
    %1219 = vmatpush1.msra.mxu0 0.0
    %1220 = vmatprep.subr.mxu0 0.0
    %1221 = vmatpush1.msra.mxu0 0.0
    %1222 = vmatprep.subr.mxu0 0.0
    %1223 = vmatpush1.msra.mxu0 0.0
    %1224 = vmatprep.subr.mxu0 0.0
    %1225 = vmatpush1.msra.mxu0 0.0
    %1226 = vmatprep.subr.mxu0 0.0
    %1227 = vmatpush1.msra.mxu0 0.0
    %1228 = vmatprep.subr.mxu0 0.0
    %1229 = vmatpush1.msra.mxu0 0.0
    %1230 = vmatprep.subr.mxu0 0.0
    %1231 = vmatpush1.msra.mxu0 0.0
    %1232 = vmatprep.subr.mxu0 0.0
    %1233 = vmatpush1.msra.mxu0 0.0
    %1234 = vmatprep.subr.mxu0 0.0
    %1235 = vmatpush1.msra.mxu0 0.0
    %1236 = vmatprep.subr.mxu0 0.0
    %1237 = vmatpush1.msra.mxu0 0.0
    %1238 = vmatprep.subr.mxu0 0.0
    %1239 = vmatpush1.msra.mxu0 0.0
    %1240 = vmatprep.subr.mxu0 0.0
    %1241 = vmatpush1.msra.mxu0 0.0
    %1242 = vmatprep.subr.mxu0 0.0
    %1243 = vmatpush1.msra.mxu0 0.0
    %1244 = vmatprep.subr.mxu0 0.0
    %1245 = vmatpush1.msra.mxu0 0.0
    %1246 = vmatprep.subr.mxu0 0.0
    %1247 = vmatpush1.msra.mxu0 0.0
    %1248 = vmatprep.subr.mxu0 0.0
    %1249 = vmatpush1.msra.mxu0 0.0
    %1250 = vmatprep.subr.mxu0 0.0
    %1251 = vmatpush1.msra.mxu0 0.0
    %1252 = vmatprep.subr.mxu0 0.0
    %1253 = vmatpush1.msra.mxu0 0.0
    %1254 = vmatprep.subr.mxu0 0.0
    %1255 = vmatpush1.msra.mxu0 0.0
    %1256 = vmatprep.subr.mxu0 0.0
    %1257 = vmatpush1.msra.mxu0 0.0
    %1258 = vmatprep.subr.mxu0 0.0
    %1259 = vmatpush1.msra.mxu0 0.0
    %1260 = vmatprep.subr.mxu0 0.0
    %1261 = vmatpush1.msra.mxu0 0.0
    %1262 = vmatprep.subr.mxu0 0.0
    %1263 = vmatpush1.msra.mxu0 0.0
    %1264 = vmatprep.subr.mxu0 0.0
    %1265 = vmatpush1.msra.mxu0 0.0
    %1266 = vmatprep.subr.mxu0 0.0
    %1267 = vmatpush1.msra.mxu0 0.0
    %1268 = vmatprep.mubr.f32.mxu0 0.0
    %1269 = vmatmul.mubr.f32.gmra.mrb[0].mxu0 %v1202
    %v1270 = vpop.f32.mrb[0].mxu0
    %v1271 = vadd.f32 0.0, %v1270
    %v1272 = vpop.f32.mrb[0].mxu0
    %1273 = vdwg.mxu0
    %v1275 = vsel %vm603, %v1200, 0
    %1277 = vmatprep.subr.mxu0 0.0
    %1278 = vmatpush1.msra.mxu0 %v1020
    %1279 = vmatprep.subr.mxu0 0.0
    %1280 = vmatpush1.msra.mxu0 0.0
    %1281 = vmatprep.subr.mxu0 0.0
    %1282 = vmatpush1.msra.mxu0 0.0
    %1283 = vmatprep.subr.mxu0 0.0
    %1284 = vmatpush1.msra.mxu0 0.0
    %1285 = vmatprep.subr.mxu0 0.0
    %1286 = vmatpush1.msra.mxu0 0.0
    %1287 = vmatprep.subr.mxu0 0.0
    %1288 = vmatpush1.msra.mxu0 0.0
    %1289 = vmatprep.subr.mxu0 0.0
    %1290 = vmatpush1.msra.mxu0 0.0
    %1291 = vmatprep.subr.mxu0 0.0
    %1292 = vmatpush1.msra.mxu0 0.0
    %1293 = vmatprep.subr.mxu0 0.0
    %1294 = vmatpush1.msra.mxu0 0.0
    %1295 = vmatprep.subr.mxu0 0.0
    %1296 = vmatpush1.msra.mxu0 0.0
    %1297 = vmatprep.subr.mxu0 0.0
    %1298 = vmatpush1.msra.mxu0 0.0
    %1299 = vmatprep.subr.mxu0 0.0
    %1300 = vmatpush1.msra.mxu0 0.0
    %1301 = vmatprep.subr.mxu0 0.0
    %1302 = vmatpush1.msra.mxu0 0.0
    %1303 = vmatprep.subr.mxu0 0.0
    %1304 = vmatpush1.msra.mxu0 0.0
    %1305 = vmatprep.subr.mxu0 0.0
    %1306 = vmatpush1.msra.mxu0 0.0
    %1307 = vmatprep.subr.mxu0 0.0
    %1308 = vmatpush1.msra.mxu0 0.0
    %1309 = vmatprep.subr.mxu0 0.0
    %1310 = vmatpush1.msra.mxu0 0.0
    %1311 = vmatprep.subr.mxu0 0.0
    %1312 = vmatpush1.msra.mxu0 0.0
    %1313 = vmatprep.subr.mxu0 0.0
    %1314 = vmatpush1.msra.mxu0 0.0
    %1315 = vmatprep.subr.mxu0 0.0
    %1316 = vmatpush1.msra.mxu0 0.0
    %1317 = vmatprep.subr.mxu0 0.0
    %1318 = vmatpush1.msra.mxu0 0.0
    %1319 = vmatprep.subr.mxu0 0.0
    %1320 = vmatpush1.msra.mxu0 0.0
    %1321 = vmatprep.subr.mxu0 0.0
    %1322 = vmatpush1.msra.mxu0 0.0
    %1323 = vmatprep.subr.mxu0 0.0
    %1324 = vmatpush1.msra.mxu0 0.0
    %1325 = vmatprep.subr.mxu0 0.0
    %1326 = vmatpush1.msra.mxu0 0.0
    %1327 = vmatprep.subr.mxu0 0.0
    %1328 = vmatpush1.msra.mxu0 0.0
    %1329 = vmatprep.subr.mxu0 0.0
    %1330 = vmatpush1.msra.mxu0 0.0
    %1331 = vmatprep.subr.mxu0 0.0
    %1332 = vmatpush1.msra.mxu0 0.0
    %1333 = vmatprep.subr.mxu0 0.0
    %1334 = vmatpush1.msra.mxu0 0.0
    %1335 = vmatprep.subr.mxu0 0.0
    %1336 = vmatpush1.msra.mxu0 0.0
    %1337 = vmatprep.subr.mxu0 0.0
    %1338 = vmatpush1.msra.mxu0 0.0
    %1339 = vmatprep.subr.mxu0 0.0
    %1340 = vmatpush1.msra.mxu0 0.0
    %1341 = vmatprep.mubr.f32.mxu0 0.0
    %1342 = vmatmul.mubr.f32.gmra.mrb[0].mxu0 %v1275
    %v1343 = vpop.f32.mrb[0].mxu0
    %v1344 = vadd.f32 0.0, %v1343
    %v1345 = vpop.f32.mrb[0].mxu0
    %1346 = vdwg.mxu0
    %s1347 = scalar_lea.vmem %s2, 16
    %v1348 = vld [vmem:[%s1347] sm:$0xff]
    %v1349 = vld [vmem:[%s1347 + $0x8] sm:$0xff]
    %v1351 = vsel %vm444, %v1271, 0
    %v1354 = vsel %vm444, %v1344, 0
    %1356 = vmatprep.subr.mxu0 0.0
    %1357 = vmatpush1.msra.mxu0 %v1348
    %1358 = vmatprep.subr.mxu0 0.0
    %1359 = vmatpush1.msra.mxu0 %v1349
    %1360 = vmatprep.subr.mxu0 0.0
    %1361 = vmatpush1.msra.mxu0 0.0
    %1362 = vmatprep.subr.mxu0 0.0
    %1363 = vmatpush1.msra.mxu0 0.0
    %1364 = vmatprep.subr.mxu0 0.0
    %1365 = vmatpush1.msra.mxu0 0.0
    %1366 = vmatprep.subr.mxu0 0.0
    %1367 = vmatpush1.msra.mxu0 0.0
    %1368 = vmatprep.subr.mxu0 0.0
    %1369 = vmatpush1.msra.mxu0 0.0
    %1370 = vmatprep.subr.mxu0 0.0
    %1371 = vmatpush1.msra.mxu0 0.0
    %1372 = vmatprep.subr.mxu0 0.0
    %1373 = vmatpush1.msra.mxu0 0.0
    %1374 = vmatprep.subr.mxu0 0.0
    %1375 = vmatpush1.msra.mxu0 0.0
    %1376 = vmatprep.subr.mxu0 0.0
    %1377 = vmatpush1.msra.mxu0 0.0
    %1378 = vmatprep.subr.mxu0 0.0
    %1379 = vmatpush1.msra.mxu0 0.0
    %1380 = vmatprep.subr.mxu0 0.0
    %1381 = vmatpush1.msra.mxu0 0.0
    %1382 = vmatprep.subr.mxu0 0.0
    %1383 = vmatpush1.msra.mxu0 0.0
    %1384 = vmatprep.subr.mxu0 0.0
    %1385 = vmatpush1.msra.mxu0 0.0
    %1386 = vmatprep.subr.mxu0 0.0
    %1387 = vmatpush1.msra.mxu0 0.0
    %1388 = vmatprep.subr.mxu0 0.0
    %1389 = vmatpush1.msra.mxu0 0.0
    %1390 = vmatprep.subr.mxu0 0.0
    %1391 = vmatpush1.msra.mxu0 0.0
    %1392 = vmatprep.subr.mxu0 0.0
    %1393 = vmatpush1.msra.mxu0 0.0
    %1394 = vmatprep.subr.mxu0 0.0
    %1395 = vmatpush1.msra.mxu0 0.0
    %1396 = vmatprep.subr.mxu0 0.0
    %1397 = vmatpush1.msra.mxu0 0.0
    %1398 = vmatprep.subr.mxu0 0.0
    %1399 = vmatpush1.msra.mxu0 0.0
    %1400 = vmatprep.subr.mxu0 0.0
    %1401 = vmatpush1.msra.mxu0 0.0
    %1402 = vmatprep.subr.mxu0 0.0
    %1403 = vmatpush1.msra.mxu0 0.0
    %1404 = vmatprep.subr.mxu0 0.0
    %1405 = vmatpush1.msra.mxu0 0.0
    %1406 = vmatprep.subr.mxu0 0.0
    %1407 = vmatpush1.msra.mxu0 0.0
    %1408 = vmatprep.subr.mxu0 0.0
    %1409 = vmatpush1.msra.mxu0 0.0
    %1410 = vmatprep.subr.mxu0 0.0
    %1411 = vmatpush1.msra.mxu0 0.0
    %1412 = vmatprep.subr.mxu0 0.0
    %1413 = vmatpush1.msra.mxu0 0.0
    %1414 = vmatprep.subr.mxu0 0.0
    %1415 = vmatpush1.msra.mxu0 0.0
    %1416 = vmatprep.subr.mxu0 0.0
    %1417 = vmatpush1.msra.mxu0 0.0
    %1418 = vmatprep.subr.mxu0 0.0
    %1419 = vmatpush1.msra.mxu0 0.0
    %1420 = vmatprep.mubr.f32.mxu0 0.0
    %1421 = vmatmul.mubr.f32.gmra.mrb[0].mxu0 %v1351
    %v1422 = vpop.f32.mrb[0].mxu0
    %v1423 = vadd.f32 0.0, %v1422
    %v1424 = vpop.f32.mrb[0].mxu0
    %1425 = vmatprep.mubr.f32.mxu0 0.0
    %1426 = vmatmul.mubr.f32.gmra.mrb[0].mxu0 %v1354
    %v1427 = vpop.f32.mrb[0].mxu0
    %v1428 = vadd.f32 0.0, %v1427
    %v1429 = vpop.f32.mrb[0].mxu0
    %1430 = vdwg.mxu0
    %v1432 = vsel %vm444, %v696, 0
    %v1435 = vsel %vm444, %v769, 0
    %1437 = vmatprep.subr.mxu0 0.0
    %1438 = vmatpush1.msra.mxu0 %v772
    %1439 = vmatprep.subr.mxu0 0.0
    %1440 = vmatpush1.msra.mxu0 %v773
    %1441 = vmatprep.subr.mxu0 0.0
    %1442 = vmatpush1.msra.mxu0 0.0
    %1443 = vmatprep.subr.mxu0 0.0
    %1444 = vmatpush1.msra.mxu0 0.0
    %1445 = vmatprep.subr.mxu0 0.0
    %1446 = vmatpush1.msra.mxu0 0.0
    %1447 = vmatprep.subr.mxu0 0.0
    %1448 = vmatpush1.msra.mxu0 0.0
    %1449 = vmatprep.subr.mxu0 0.0
    %1450 = vmatpush1.msra.mxu0 0.0
    %1451 = vmatprep.subr.mxu0 0.0
    %1452 = vmatpush1.msra.mxu0 0.0
    %1453 = vmatprep.subr.mxu0 0.0
    %1454 = vmatpush1.msra.mxu0 0.0
    %1455 = vmatprep.subr.mxu0 0.0
    %1456 = vmatpush1.msra.mxu0 0.0
    %1457 = vmatprep.subr.mxu0 0.0
    %1458 = vmatpush1.msra.mxu0 0.0
    %1459 = vmatprep.subr.mxu0 0.0
    %1460 = vmatpush1.msra.mxu0 0.0
    %1461 = vmatprep.subr.mxu0 0.0
    %1462 = vmatpush1.msra.mxu0 0.0
    %1463 = vmatprep.subr.mxu0 0.0
    %1464 = vmatpush1.msra.mxu0 0.0
    %1465 = vmatprep.subr.mxu0 0.0
    %1466 = vmatpush1.msra.mxu0 0.0
    %1467 = vmatprep.subr.mxu0 0.0
    %1468 = vmatpush1.msra.mxu0 0.0
    %1469 = vmatprep.subr.mxu0 0.0
    %1470 = vmatpush1.msra.mxu0 0.0
    %1471 = vmatprep.subr.mxu0 0.0
    %1472 = vmatpush1.msra.mxu0 0.0
    %1473 = vmatprep.subr.mxu0 0.0
    %1474 = vmatpush1.msra.mxu0 0.0
    %1475 = vmatprep.subr.mxu0 0.0
    %1476 = vmatpush1.msra.mxu0 0.0
    %1477 = vmatprep.subr.mxu0 0.0
    %1478 = vmatpush1.msra.mxu0 0.0
    %1479 = vmatprep.subr.mxu0 0.0
    %1480 = vmatpush1.msra.mxu0 0.0
    %1481 = vmatprep.subr.mxu0 0.0
    %1482 = vmatpush1.msra.mxu0 0.0
    %1483 = vmatprep.subr.mxu0 0.0
    %1484 = vmatpush1.msra.mxu0 0.0
    %1485 = vmatprep.subr.mxu0 0.0
    %1486 = vmatpush1.msra.mxu0 0.0
    %1487 = vmatprep.subr.mxu0 0.0
    %1488 = vmatpush1.msra.mxu0 0.0
    %1489 = vmatprep.subr.mxu0 0.0
    %1490 = vmatpush1.msra.mxu0 0.0
    %1491 = vmatprep.subr.mxu0 0.0
    %1492 = vmatpush1.msra.mxu0 0.0
    %1493 = vmatprep.subr.mxu0 0.0
    %1494 = vmatpush1.msra.mxu0 0.0
    %1495 = vmatprep.subr.mxu0 0.0
    %1496 = vmatpush1.msra.mxu0 0.0
    %1497 = vmatprep.subr.mxu0 0.0
    %1498 = vmatpush1.msra.mxu0 0.0
    %1499 = vmatprep.subr.mxu0 0.0
    %1500 = vmatpush1.msra.mxu0 0.0
    %1501 = vmatprep.mubr.f32.mxu0 0.0
    %1502 = vmatmul.mubr.f32.gmra.mrb[0].mxu0 %v1432
    %v1503 = vpop.f32.mrb[0].mxu0
    %v1504 = vadd.f32 %v1423, %v1503
    %v1505 = vpop.f32.mrb[0].mxu0
    %1506 = vmatprep.mubr.f32.mxu0 0.0
    %1507 = vmatmul.mubr.f32.gmra.mrb[0].mxu0 %v1435
    %v1508 = vpop.f32.mrb[0].mxu0
    %v1509 = vadd.f32 %v1428, %v1508
    %v1510 = vpop.f32.mrb[0].mxu0
    %1511 = vdwg.mxu0
    %v1512 = vadd.f32 %v136, %v1504
    %v1513 = vadd.f32 %v141, %v1509
    %v1514 = vlaneseq
    %v1515 = vshrl.u32 %v1514, 7
    %v1516 = vsub.s32 3, %v1515
    %v1517 = vrot.slane %v147, %v1516
    %v1518 = vadd.f32 %v1512, %v1517
    %v1519 = vadd.f32 %v1513, %v1517
    %v1520 = vsel %vm148, %v1518, 0.0
    %1521 = vadd.xlane.f32.xlu0 %v1520
    %v1522 = vpop.xlane.xlu0 %1521
    %v1523 = vsel %vm148, %v1519, 0.0
    %1524 = vadd.xlane.f32.xlu0 %v1523
    %v1525 = vpop.xlane.xlu0 %1524
    %v1526 = vmul.f32 %v1522, %v155
    %v1527 = vmul.f32 %v1525, %v155
    %v1528 = vsub.f32 %v1518, %v1526
    %v1529 = vsub.f32 %v1519, %v1527
    %v1530 = vmul.f32 %v1528, %v1528
    %v1531 = vmul.f32 %v1529, %v1529
    %v1532 = vsel %vm148, %v1530, 0.0
    %1533 = vadd.xlane.f32.xlu0 %v1532
    %v1534 = vpop.xlane.xlu0 %1533
    %v1535 = vsel %vm148, %v1531, 0.0
    %1536 = vadd.xlane.f32.xlu0 %v1535
    %v1537 = vpop.xlane.xlu0 %1536
    %v1538 = vmul.f32 %v1534, %v155
    %v1539 = vmul.f32 %v1537, %v155
    %v1540 = vadd.f32 %v1538, 1e-05
    %v1541 = vadd.f32 %v1539, 1e-05
    %v1542 = vrsqrt.pop %v1540
    %v1543 = vrsqrt.pop %v1541
    %v1544 = vmul.f32 %v1528, %v1542
    %v1545 = vmul.f32 %v1529, %v1543
    %v1546 = vlaneseq
    %v1547 = vshrl.u32 %v1546, 7
    %v1548 = vsub.s32 4, %v1547
    %v1549 = vrot.slane %v147, %v1548
    %v1550 = vmul.f32 %v1544, %v1549
    %v1551 = vmul.f32 %v1545, %v1549
    %v1552 = vlaneseq
    %v1553 = vshrl.u32 %v1552, 7
    %v1554 = vsub.s32 5, %v1553
    %v1555 = vrot.slane %v147, %v1554
    %v1556 = vadd.f32 %v1550, %v1555
    %v1557 = vadd.f32 %v1551, %v1555
    %v1558 = vld [vmem:[%s3] sm:$0xff]
    %v1559 = vld [vmem:[%s3 + $0x8] sm:$0xff]
    %v1560 = vld [vmem:[%s3 + $0x10] sm:$0xff]
    %v1561 = vld [vmem:[%s3 + $0x18] sm:$0xff]
    %v1562 = vlaneseq
    %v1563 = vshrl.u32 %v1562, 7
    %v1564 = vsub.s32 6, %v1563
    %v1565 = vrot.slane %v147, %v1564
    %v1567 = vsel %vm148, %v1556, 0
    %v1570 = vsel %vm148, %v1557, 0
    %1572 = vmatprep.subr.mxu0 0.0
    %1573 = vmatpush1.msra.mxu0 %v1558
    %1574 = vmatprep.subr.mxu0 0.0
    %1575 = vmatpush1.msra.mxu0 %v1559
    %1576 = vmatprep.subr.mxu0 0.0
    %1577 = vmatpush1.msra.mxu0 %v1560
    %1578 = vmatprep.subr.mxu0 0.0
    %1579 = vmatpush1.msra.mxu0 %v1561
    %1580 = vmatprep.subr.mxu0 0.0
    %1581 = vmatpush1.msra.mxu0 0.0
    %1582 = vmatprep.subr.mxu0 0.0
    %1583 = vmatpush1.msra.mxu0 0.0
    %1584 = vmatprep.subr.mxu0 0.0
    %1585 = vmatpush1.msra.mxu0 0.0
    %1586 = vmatprep.subr.mxu0 0.0
    %1587 = vmatpush1.msra.mxu0 0.0
    %1588 = vmatprep.subr.mxu0 0.0
    %1589 = vmatpush1.msra.mxu0 0.0
    %1590 = vmatprep.subr.mxu0 0.0
    %1591 = vmatpush1.msra.mxu0 0.0
    %1592 = vmatprep.subr.mxu0 0.0
    %1593 = vmatpush1.msra.mxu0 0.0
    %1594 = vmatprep.subr.mxu0 0.0
    %1595 = vmatpush1.msra.mxu0 0.0
    %1596 = vmatprep.subr.mxu0 0.0
    %1597 = vmatpush1.msra.mxu0 0.0
    %1598 = vmatprep.subr.mxu0 0.0
    %1599 = vmatpush1.msra.mxu0 0.0
    %1600 = vmatprep.subr.mxu0 0.0
    %1601 = vmatpush1.msra.mxu0 0.0
    %1602 = vmatprep.subr.mxu0 0.0
    %1603 = vmatpush1.msra.mxu0 0.0
    %1604 = vmatprep.subr.mxu0 0.0
    %1605 = vmatpush1.msra.mxu0 0.0
    %1606 = vmatprep.subr.mxu0 0.0
    %1607 = vmatpush1.msra.mxu0 0.0
    %1608 = vmatprep.subr.mxu0 0.0
    %1609 = vmatpush1.msra.mxu0 0.0
    %1610 = vmatprep.subr.mxu0 0.0
    %1611 = vmatpush1.msra.mxu0 0.0
    %1612 = vmatprep.subr.mxu0 0.0
    %1613 = vmatpush1.msra.mxu0 0.0
    %1614 = vmatprep.subr.mxu0 0.0
    %1615 = vmatpush1.msra.mxu0 0.0
    %1616 = vmatprep.subr.mxu0 0.0
    %1617 = vmatpush1.msra.mxu0 0.0
    %1618 = vmatprep.subr.mxu0 0.0
    %1619 = vmatpush1.msra.mxu0 0.0
    %1620 = vmatprep.subr.mxu0 0.0
    %1621 = vmatpush1.msra.mxu0 0.0
    %1622 = vmatprep.subr.mxu0 0.0
    %1623 = vmatpush1.msra.mxu0 0.0
    %1624 = vmatprep.subr.mxu0 0.0
    %1625 = vmatpush1.msra.mxu0 0.0
    %1626 = vmatprep.subr.mxu0 0.0
    %1627 = vmatpush1.msra.mxu0 0.0
    %1628 = vmatprep.subr.mxu0 0.0
    %1629 = vmatpush1.msra.mxu0 0.0
    %1630 = vmatprep.subr.mxu0 0.0
    %1631 = vmatpush1.msra.mxu0 0.0
    %1632 = vmatprep.subr.mxu0 0.0
    %1633 = vmatpush1.msra.mxu0 0.0
    %1634 = vmatprep.subr.mxu0 0.0
    %1635 = vmatpush1.msra.mxu0 0.0
    %1636 = vmatprep.mubr.f32.mxu0 0.0
    %1637 = vmatmul.mubr.f32.gmra.mrb[0].mxu0 %v1567
    %v1638 = vpop.f32.mrb[0].mxu0
    %v1639 = vadd.f32 %v1565, %v1638
    %v1640 = vpop.f32.mrb[0].mxu0
    %1641 = vmatprep.mubr.f32.mxu0 0.0
    %1642 = vmatmul.mubr.f32.gmra.mrb[0].mxu0 %v1570
    %v1643 = vpop.f32.mrb[0].mxu0
    %v1644 = vadd.f32 %v1565, %v1643
    %v1645 = vpop.f32.mrb[0].mxu0
    %1646 = vdwg.mxu0
    %v1647 = vmul.f32 %v1639, 0.5
    %v1648 = vmul.f32 %v1644, 0.5
    %v1649 = vmul.f32 %v1639, 0.044715
    %v1650 = vmul.f32 %v1644, 0.044715
    %v1651 = vmul.f32 %v1649, %v1639
    %v1652 = vmul.f32 %v1650, %v1644
    %v1653 = vmul.f32 %v1651, %v1639
    %v1654 = vmul.f32 %v1652, %v1644
    %v1655 = vadd.f32 %v1639, %v1653
    %v1656 = vadd.f32 %v1644, %v1654
    %v1657 = vmul.f32 %v1655, 0.7978846
    %v1658 = vmul.f32 %v1656, 0.7978846
    %v1659 = vtanh.pop %v1657
    %v1660 = vtanh.pop %v1658
    %v1661 = vadd.f32 %v1659, 1.0
    %v1662 = vadd.f32 %v1660, 1.0
    %v1663 = vmul.f32 %v1647, %v1661
    %v1664 = vmul.f32 %v1648, %v1662
    %v1665 = vld [vmem:[%s4] sm:$0xff]
    %v1666 = vld [vmem:[%s4 + $0x8] sm:$0xff]
    %v1667 = vld [vmem:[%s4 + $0x10] sm:$0xff]
    %v1668 = vld [vmem:[%s4 + $0x18] sm:$0xff]
    %v1669 = vld [vmem:[%s4 + $0x20] sm:$0xff]
    %v1670 = vld [vmem:[%s4 + $0x28] sm:$0xff]
    %v1671 = vld [vmem:[%s4 + $0x30] sm:$0xff]
    %v1672 = vld [vmem:[%s4 + $0x38] sm:$0xff]
    %v1673 = vld [vmem:[%s4 + $0x40] sm:$0xff]
    %v1674 = vld [vmem:[%s4 + $0x48] sm:$0xff]
    %v1675 = vld [vmem:[%s4 + $0x50] sm:$0xff]
    %v1676 = vld [vmem:[%s4 + $0x58] sm:$0xff]
    %v1677 = vld [vmem:[%s4 + $0x60] sm:$0xff]
    %v1678 = vld [vmem:[%s4 + $0x68] sm:$0xff]
    %v1679 = vld [vmem:[%s4 + $0x70] sm:$0xff]
    %v1680 = vld [vmem:[%s4 + $0x78] sm:$0xff]
    %1681 = vmatprep.subr.mxu0 0.0
    %1682 = vmatpush1.msra.mxu0 %v1665
    %1683 = vmatprep.subr.mxu0 0.0
    %1684 = vmatpush1.msra.mxu0 %v1666
    %1685 = vmatprep.subr.mxu0 0.0
    %1686 = vmatpush1.msra.mxu0 %v1667
    %1687 = vmatprep.subr.mxu0 0.0
    %1688 = vmatpush1.msra.mxu0 %v1668
    %1689 = vmatprep.subr.mxu0 0.0
    %1690 = vmatpush1.msra.mxu0 %v1669
    %1691 = vmatprep.subr.mxu0 0.0
    %1692 = vmatpush1.msra.mxu0 %v1670
    %1693 = vmatprep.subr.mxu0 0.0
    %1694 = vmatpush1.msra.mxu0 %v1671
    %1695 = vmatprep.subr.mxu0 0.0
    %1696 = vmatpush1.msra.mxu0 %v1672
    %1697 = vmatprep.subr.mxu0 0.0
    %1698 = vmatpush1.msra.mxu0 %v1673
    %1699 = vmatprep.subr.mxu0 0.0
    %1700 = vmatpush1.msra.mxu0 %v1674
    %1701 = vmatprep.subr.mxu0 0.0
    %1702 = vmatpush1.msra.mxu0 %v1675
    %1703 = vmatprep.subr.mxu0 0.0
    %1704 = vmatpush1.msra.mxu0 %v1676
    %1705 = vmatprep.subr.mxu0 0.0
    %1706 = vmatpush1.msra.mxu0 %v1677
    %1707 = vmatprep.subr.mxu0 0.0
    %1708 = vmatpush1.msra.mxu0 %v1678
    %1709 = vmatprep.subr.mxu0 0.0
    %1710 = vmatpush1.msra.mxu0 %v1679
    %1711 = vmatprep.subr.mxu0 0.0
    %1712 = vmatpush1.msra.mxu0 %v1680
    %1713 = vmatprep.subr.mxu0 0.0
    %1714 = vmatpush1.msra.mxu0 0.0
    %1715 = vmatprep.subr.mxu0 0.0
    %1716 = vmatpush1.msra.mxu0 0.0
    %1717 = vmatprep.subr.mxu0 0.0
    %1718 = vmatpush1.msra.mxu0 0.0
    %1719 = vmatprep.subr.mxu0 0.0
    %1720 = vmatpush1.msra.mxu0 0.0
    %1721 = vmatprep.subr.mxu0 0.0
    %1722 = vmatpush1.msra.mxu0 0.0
    %1723 = vmatprep.subr.mxu0 0.0
    %1724 = vmatpush1.msra.mxu0 0.0
    %1725 = vmatprep.subr.mxu0 0.0
    %1726 = vmatpush1.msra.mxu0 0.0
    %1727 = vmatprep.subr.mxu0 0.0
    %1728 = vmatpush1.msra.mxu0 0.0
    %1729 = vmatprep.subr.mxu0 0.0
    %1730 = vmatpush1.msra.mxu0 0.0
    %1731 = vmatprep.subr.mxu0 0.0
    %1732 = vmatpush1.msra.mxu0 0.0
    %1733 = vmatprep.subr.mxu0 0.0
    %1734 = vmatpush1.msra.mxu0 0.0
    %1735 = vmatprep.subr.mxu0 0.0
    %1736 = vmatpush1.msra.mxu0 0.0
    %1737 = vmatprep.subr.mxu0 0.0
    %1738 = vmatpush1.msra.mxu0 0.0
    %1739 = vmatprep.subr.mxu0 0.0
    %1740 = vmatpush1.msra.mxu0 0.0
    %1741 = vmatprep.subr.mxu0 0.0
    %1742 = vmatpush1.msra.mxu0 0.0
    %1743 = vmatprep.subr.mxu0 0.0
    %1744 = vmatpush1.msra.mxu0 0.0
    %1745 = vmatprep.mubr.f32.mxu0 0.0
    %1746 = vmatmul.mubr.f32.gmra.mrb[0].mxu0 %v1663
    %v1747 = vpop.f32.mrb[0].mxu0
    %v1748 = vadd.f32 0.0, %v1747
    %v1749 = vpop.f32.mrb[0].mxu0
    %1750 = vmatprep.mubr.f32.mxu0 0.0
    %1751 = vmatmul.mubr.f32.gmra.mrb[0].mxu0 %v1664
    %v1752 = vpop.f32.mrb[0].mxu0
    %v1753 = vadd.f32 0.0, %v1752
    %v1754 = vpop.f32.mrb[0].mxu0
    %1755 = vdwg.mxu0
    %v1756 = vadd.f32 %v1518, %v1748
    %v1757 = vadd.f32 %v1519, %v1753
    %v1758 = vlaneseq
    %v1759 = vshrl.u32 %v1758, 7
    %v1760 = vsub.s32 7, %v1759
    %v1761 = vrot.slane %v147, %v1760
    %v1762 = vadd.f32 %v1756, %v1761
    %v1763 = vadd.f32 %v1757, %v1761
    %s1764 = scalar_lea.vmem %s5, 8
    %v1765 = vld [vmem:[%s1764] sm:$0xff]
    %v1766 = vsel %vm148, %v1762, 0.0
    %1767 = vadd.xlane.f32.xlu0 %v1766
    %v1768 = vpop.xlane.xlu0 %1767
    %v1769 = vsel %vm148, %v1763, 0.0
    %1770 = vadd.xlane.f32.xlu0 %v1769
    %v1771 = vpop.xlane.xlu0 %1770
    %v1772 = vmul.f32 %v1768, %v155
    %v1773 = vmul.f32 %v1771, %v155
    %v1774 = vsub.f32 %v1762, %v1772
    %v1775 = vsub.f32 %v1763, %v1773
    %v1776 = vmul.f32 %v1774, %v1774
    %v1777 = vmul.f32 %v1775, %v1775
    %v1778 = vsel %vm148, %v1776, 0.0
    %1779 = vadd.xlane.f32.xlu0 %v1778
    %v1780 = vpop.xlane.xlu0 %1779
    %v1781 = vsel %vm148, %v1777, 0.0
    %1782 = vadd.xlane.f32.xlu0 %v1781
    %v1783 = vpop.xlane.xlu0 %1782
    %v1784 = vmul.f32 %v1780, %v155
    %v1785 = vmul.f32 %v1783, %v155
    %v1786 = vadd.f32 %v1784, 1e-05
    %v1787 = vadd.f32 %v1785, 1e-05
    %v1788 = vrsqrt.pop %v1786
    %v1789 = vrsqrt.pop %v1787
    %v1790 = vmul.f32 %v1774, %v1788
    %v1791 = vmul.f32 %v1775, %v1789
    %v1792 = vlaneseq
    %v1793 = vshrl.u32 %v1792, 7
    %v1794 = vsub.s32 0, %v1793
    %v1795 = vrot.slane %v1765, %v1794
    %v1796 = vmul.f32 %v1790, %v1795
    %v1797 = vmul.f32 %v1791, %v1795
    %v1798 = vlaneseq
    %v1799 = vshrl.u32 %v1798, 7
    %v1800 = vsub.s32 1, %v1799
    %v1801 = vrot.slane %v1765, %v1800
    %v1802 = vadd.f32 %v1796, %v1801
    %v1803 = vadd.f32 %v1797, %v1801
    %s1804 = scalar_lea.vmem %s1, 192
    %v1805 = vld [vmem:[%s1804] sm:$0xff]
    %v1806 = vld [vmem:[%s1804 + $0x8] sm:$0xff]
    %v1807 = vld [vmem:[%s1804 + $0x10] sm:$0xff]
    %v1808 = vld [vmem:[%s1804 + $0x18] sm:$0xff]
    %s1809 = scalar_lea.vmem %s1, 256
    %v1810 = vld [vmem:[%s1809] sm:$0xff]
    %v1811 = vld [vmem:[%s1809 + $0x8] sm:$0xff]
    %v1812 = vld [vmem:[%s1809 + $0x10] sm:$0xff]
    %v1813 = vld [vmem:[%s1809 + $0x18] sm:$0xff]
    %s1814 = scalar_lea.vmem %s1, 320
    %v1815 = vld [vmem:[%s1814] sm:$0xff]
    %v1816 = vld [vmem:[%s1814 + $0x8] sm:$0xff]
    %v1817 = vld [vmem:[%s1814 + $0x10] sm:$0xff]
    %v1818 = vld [vmem:[%s1814 + $0x18] sm:$0xff]
    %v1819 = vlaneseq
    %v1820 = vshrl.u32 %v1819, 7
    %v1821 = vsub.s32 2, %v1820
    %v1822 = vrot.slane %v1765, %v1821
    %v1824 = vsel %vm148, %v1802, 0
    %v1827 = vsel %vm148, %v1803, 0
    %1829 = vmatprep.subr.mxu0 0.0
    %1830 = vmatpush1.msra.mxu0 %v1805
    %1831 = vmatprep.subr.mxu0 0.0
    %1832 = vmatpush1.msra.mxu0 %v1806
    %1833 = vmatprep.subr.mxu0 0.0
    %1834 = vmatpush1.msra.mxu0 %v1807
    %1835 = vmatprep.subr.mxu0 0.0
    %1836 = vmatpush1.msra.mxu0 %v1808
    %1837 = vmatprep.subr.mxu0 0.0
    %1838 = vmatpush1.msra.mxu0 0.0
    %1839 = vmatprep.subr.mxu0 0.0
    %1840 = vmatpush1.msra.mxu0 0.0
    %1841 = vmatprep.subr.mxu0 0.0
    %1842 = vmatpush1.msra.mxu0 0.0
    %1843 = vmatprep.subr.mxu0 0.0
    %1844 = vmatpush1.msra.mxu0 0.0
    %1845 = vmatprep.subr.mxu0 0.0
    %1846 = vmatpush1.msra.mxu0 0.0
    %1847 = vmatprep.subr.mxu0 0.0
    %1848 = vmatpush1.msra.mxu0 0.0
    %1849 = vmatprep.subr.mxu0 0.0
    %1850 = vmatpush1.msra.mxu0 0.0
    %1851 = vmatprep.subr.mxu0 0.0
    %1852 = vmatpush1.msra.mxu0 0.0
    %1853 = vmatprep.subr.mxu0 0.0
    %1854 = vmatpush1.msra.mxu0 0.0
    %1855 = vmatprep.subr.mxu0 0.0
    %1856 = vmatpush1.msra.mxu0 0.0
    %1857 = vmatprep.subr.mxu0 0.0
    %1858 = vmatpush1.msra.mxu0 0.0
    %1859 = vmatprep.subr.mxu0 0.0
    %1860 = vmatpush1.msra.mxu0 0.0
    %1861 = vmatprep.subr.mxu0 0.0
    %1862 = vmatpush1.msra.mxu0 0.0
    %1863 = vmatprep.subr.mxu0 0.0
    %1864 = vmatpush1.msra.mxu0 0.0
    %1865 = vmatprep.subr.mxu0 0.0
    %1866 = vmatpush1.msra.mxu0 0.0
    %1867 = vmatprep.subr.mxu0 0.0
    %1868 = vmatpush1.msra.mxu0 0.0
    %1869 = vmatprep.subr.mxu0 0.0
    %1870 = vmatpush1.msra.mxu0 0.0
    %1871 = vmatprep.subr.mxu0 0.0
    %1872 = vmatpush1.msra.mxu0 0.0
    %1873 = vmatprep.subr.mxu0 0.0
    %1874 = vmatpush1.msra.mxu0 0.0
    %1875 = vmatprep.subr.mxu0 0.0
    %1876 = vmatpush1.msra.mxu0 0.0
    %1877 = vmatprep.subr.mxu0 0.0
    %1878 = vmatpush1.msra.mxu0 0.0
    %1879 = vmatprep.subr.mxu0 0.0
    %1880 = vmatpush1.msra.mxu0 0.0
    %1881 = vmatprep.subr.mxu0 0.0
    %1882 = vmatpush1.msra.mxu0 0.0
    %1883 = vmatprep.subr.mxu0 0.0
    %1884 = vmatpush1.msra.mxu0 0.0
    %1885 = vmatprep.subr.mxu0 0.0
    %1886 = vmatpush1.msra.mxu0 0.0
    %1887 = vmatprep.subr.mxu0 0.0
    %1888 = vmatpush1.msra.mxu0 0.0
    %1889 = vmatprep.subr.mxu0 0.0
    %1890 = vmatpush1.msra.mxu0 0.0
    %1891 = vmatprep.subr.mxu0 0.0
    %1892 = vmatpush1.msra.mxu0 0.0
    %1893 = vmatprep.mubr.f32.mxu0 0.0
    %1894 = vmatmul.mubr.f32.gmra.mrb[0].mxu0 %v1824
    %v1895 = vpop.f32.mrb[0].mxu0
    %v1896 = vadd.f32 %v1822, %v1895
    %v1897 = vpop.f32.mrb[0].mxu0
    %1898 = vmatprep.mubr.f32.mxu0 0.0
    %1899 = vmatmul.mubr.f32.gmra.mrb[0].mxu0 %v1827
    %v1900 = vpop.f32.mrb[0].mxu0
    %v1901 = vadd.f32 %v1822, %v1900
    %v1902 = vpop.f32.mrb[0].mxu0
    %1903 = vdwg.mxu0
    %1905 = vrot.lane.b32.xlu0 %v1822, 96
    %v1906 = vpop.permute.xlu0 %1905
    %1908 = vmatprep.subr.mxu0 0.0
    %1909 = vmatpush1.msra.mxu0 %v1810
    %1910 = vmatprep.subr.mxu0 0.0
    %1911 = vmatpush1.msra.mxu0 %v1811
    %1912 = vmatprep.subr.mxu0 0.0
    %1913 = vmatpush1.msra.mxu0 %v1812
    %1914 = vmatprep.subr.mxu0 0.0
    %1915 = vmatpush1.msra.mxu0 %v1813
    %1916 = vmatprep.subr.mxu0 0.0
    %1917 = vmatpush1.msra.mxu0 0.0
    %1918 = vmatprep.subr.mxu0 0.0
    %1919 = vmatpush1.msra.mxu0 0.0
    %1920 = vmatprep.subr.mxu0 0.0
    %1921 = vmatpush1.msra.mxu0 0.0
    %1922 = vmatprep.subr.mxu0 0.0
    %1923 = vmatpush1.msra.mxu0 0.0
    %1924 = vmatprep.subr.mxu0 0.0
    %1925 = vmatpush1.msra.mxu0 0.0
    %1926 = vmatprep.subr.mxu0 0.0
    %1927 = vmatpush1.msra.mxu0 0.0
    %1928 = vmatprep.subr.mxu0 0.0
    %1929 = vmatpush1.msra.mxu0 0.0
    %1930 = vmatprep.subr.mxu0 0.0
    %1931 = vmatpush1.msra.mxu0 0.0
    %1932 = vmatprep.subr.mxu0 0.0
    %1933 = vmatpush1.msra.mxu0 0.0
    %1934 = vmatprep.subr.mxu0 0.0
    %1935 = vmatpush1.msra.mxu0 0.0
    %1936 = vmatprep.subr.mxu0 0.0
    %1937 = vmatpush1.msra.mxu0 0.0
    %1938 = vmatprep.subr.mxu0 0.0
    %1939 = vmatpush1.msra.mxu0 0.0
    %1940 = vmatprep.subr.mxu0 0.0
    %1941 = vmatpush1.msra.mxu0 0.0
    %1942 = vmatprep.subr.mxu0 0.0
    %1943 = vmatpush1.msra.mxu0 0.0
    %1944 = vmatprep.subr.mxu0 0.0
    %1945 = vmatpush1.msra.mxu0 0.0
    %1946 = vmatprep.subr.mxu0 0.0
    %1947 = vmatpush1.msra.mxu0 0.0
    %1948 = vmatprep.subr.mxu0 0.0
    %1949 = vmatpush1.msra.mxu0 0.0
    %1950 = vmatprep.subr.mxu0 0.0
    %1951 = vmatpush1.msra.mxu0 0.0
    %1952 = vmatprep.subr.mxu0 0.0
    %1953 = vmatpush1.msra.mxu0 0.0
    %1954 = vmatprep.subr.mxu0 0.0
    %1955 = vmatpush1.msra.mxu0 0.0
    %1956 = vmatprep.subr.mxu0 0.0
    %1957 = vmatpush1.msra.mxu0 0.0
    %1958 = vmatprep.subr.mxu0 0.0
    %1959 = vmatpush1.msra.mxu0 0.0
    %1960 = vmatprep.subr.mxu0 0.0
    %1961 = vmatpush1.msra.mxu0 0.0
    %1962 = vmatprep.subr.mxu0 0.0
    %1963 = vmatpush1.msra.mxu0 0.0
    %1964 = vmatprep.subr.mxu0 0.0
    %1965 = vmatpush1.msra.mxu0 0.0
    %1966 = vmatprep.subr.mxu0 0.0
    %1967 = vmatpush1.msra.mxu0 0.0
    %1968 = vmatprep.subr.mxu0 0.0
    %1969 = vmatpush1.msra.mxu0 0.0
    %1970 = vmatprep.subr.mxu0 0.0
    %1971 = vmatpush1.msra.mxu0 0.0
    %1972 = vmatprep.mubr.f32.mxu0 0.0
    %1973 = vmatmul.mubr.f32.gmra.mrb[0].mxu0 %v1824
    %v1974 = vpop.f32.mrb[0].mxu0
    %v1975 = vadd.f32 %v1906, %v1974
    %v1976 = vpop.f32.mrb[0].mxu0
    %1977 = vmatprep.mubr.f32.mxu0 0.0
    %1978 = vmatmul.mubr.f32.gmra.mrb[0].mxu0 %v1827
    %v1979 = vpop.f32.mrb[0].mxu0
    %v1980 = vadd.f32 %v1906, %v1979
    %v1981 = vpop.f32.mrb[0].mxu0
    %1982 = vdwg.mxu0
    %1983 = vrot.lane.b32.xlu0 %v1822, 64
    %v1984 = vpop.permute.xlu0 %1983
    %1986 = vmatprep.subr.mxu0 0.0
    %1987 = vmatpush1.msra.mxu0 %v1815
    %1988 = vmatprep.subr.mxu0 0.0
    %1989 = vmatpush1.msra.mxu0 %v1816
    %1990 = vmatprep.subr.mxu0 0.0
    %1991 = vmatpush1.msra.mxu0 %v1817
    %1992 = vmatprep.subr.mxu0 0.0
    %1993 = vmatpush1.msra.mxu0 %v1818
    %1994 = vmatprep.subr.mxu0 0.0
    %1995 = vmatpush1.msra.mxu0 0.0
    %1996 = vmatprep.subr.mxu0 0.0
    %1997 = vmatpush1.msra.mxu0 0.0
    %1998 = vmatprep.subr.mxu0 0.0
    %1999 = vmatpush1.msra.mxu0 0.0
    %2000 = vmatprep.subr.mxu0 0.0
    %2001 = vmatpush1.msra.mxu0 0.0
    %2002 = vmatprep.subr.mxu0 0.0
    %2003 = vmatpush1.msra.mxu0 0.0
    %2004 = vmatprep.subr.mxu0 0.0
    %2005 = vmatpush1.msra.mxu0 0.0
    %2006 = vmatprep.subr.mxu0 0.0
    %2007 = vmatpush1.msra.mxu0 0.0
    %2008 = vmatprep.subr.mxu0 0.0
    %2009 = vmatpush1.msra.mxu0 0.0
    %2010 = vmatprep.subr.mxu0 0.0
    %2011 = vmatpush1.msra.mxu0 0.0
    %2012 = vmatprep.subr.mxu0 0.0
    %2013 = vmatpush1.msra.mxu0 0.0
    %2014 = vmatprep.subr.mxu0 0.0
    %2015 = vmatpush1.msra.mxu0 0.0
    %2016 = vmatprep.subr.mxu0 0.0
    %2017 = vmatpush1.msra.mxu0 0.0
    %2018 = vmatprep.subr.mxu0 0.0
    %2019 = vmatpush1.msra.mxu0 0.0
    %2020 = vmatprep.subr.mxu0 0.0
    %2021 = vmatpush1.msra.mxu0 0.0
    %2022 = vmatprep.subr.mxu0 0.0
    %2023 = vmatpush1.msra.mxu0 0.0
    %2024 = vmatprep.subr.mxu0 0.0
    %2025 = vmatpush1.msra.mxu0 0.0
    %2026 = vmatprep.subr.mxu0 0.0
    %2027 = vmatpush1.msra.mxu0 0.0
    %2028 = vmatprep.subr.mxu0 0.0
    %2029 = vmatpush1.msra.mxu0 0.0
    %2030 = vmatprep.subr.mxu0 0.0
    %2031 = vmatpush1.msra.mxu0 0.0
    %2032 = vmatprep.subr.mxu0 0.0
    %2033 = vmatpush1.msra.mxu0 0.0
    %2034 = vmatprep.subr.mxu0 0.0
    %2035 = vmatpush1.msra.mxu0 0.0
    %2036 = vmatprep.subr.mxu0 0.0
    %2037 = vmatpush1.msra.mxu0 0.0
    %2038 = vmatprep.subr.mxu0 0.0
    %2039 = vmatpush1.msra.mxu0 0.0
    %2040 = vmatprep.subr.mxu0 0.0
    %2041 = vmatpush1.msra.mxu0 0.0
    %2042 = vmatprep.subr.mxu0 0.0
    %2043 = vmatpush1.msra.mxu0 0.0
    %2044 = vmatprep.subr.mxu0 0.0
    %2045 = vmatpush1.msra.mxu0 0.0
    %2046 = vmatprep.subr.mxu0 0.0
    %2047 = vmatpush1.msra.mxu0 0.0
    %2048 = vmatprep.subr.mxu0 0.0
    %2049 = vmatpush1.msra.mxu0 0.0
    %2050 = vmatprep.mubr.f32.mxu0 0.0
    %2051 = vmatmul.mubr.f32.gmra.mrb[0].mxu0 %v1824
    %v2052 = vpop.f32.mrb[0].mxu0
    %v2053 = vadd.f32 %v1984, %v2052
    %v2054 = vpop.f32.mrb[0].mxu0
    %2055 = vmatprep.mubr.f32.mxu0 0.0
    %2056 = vmatmul.mubr.f32.gmra.mrb[0].mxu0 %v1827
    %v2057 = vpop.f32.mrb[0].mxu0
    %v2058 = vadd.f32 %v1984, %v2057
    %v2059 = vpop.f32.mrb[0].mxu0
    %2060 = vdwg.mxu0
    %v2062 = vsel %vm444, %v1896, 0
    %v2065 = vsel %vm444, %v1975, 0
    %2067 = vmatprep.subr.mxu0 0.0
    %2068 = vmatpush1.xpose.msra.mxu0 %v2065
    %2069 = vmatprep.subr.mxu0 0.0
    %2070 = vmatpush1.xpose.msra.mxu0 0.0
    %2071 = vmatprep.subr.mxu0 0.0
    %2072 = vmatpush1.xpose.msra.mxu0 0.0
    %2073 = vmatprep.subr.mxu0 0.0
    %2074 = vmatpush1.xpose.msra.mxu0 0.0
    %2075 = vmatprep.subr.mxu0 0.0
    %2076 = vmatpush1.xpose.msra.mxu0 0.0
    %2077 = vmatprep.subr.mxu0 0.0
    %2078 = vmatpush1.xpose.msra.mxu0 0.0
    %2079 = vmatprep.subr.mxu0 0.0
    %2080 = vmatpush1.xpose.msra.mxu0 0.0
    %2081 = vmatprep.subr.mxu0 0.0
    %2082 = vmatpush1.xpose.msra.mxu0 0.0
    %2083 = vmatprep.subr.mxu0 0.0
    %2084 = vmatpush1.xpose.msra.mxu0 0.0
    %2085 = vmatprep.subr.mxu0 0.0
    %2086 = vmatpush1.xpose.msra.mxu0 0.0
    %2087 = vmatprep.subr.mxu0 0.0
    %2088 = vmatpush1.xpose.msra.mxu0 0.0
    %2089 = vmatprep.subr.mxu0 0.0
    %2090 = vmatpush1.xpose.msra.mxu0 0.0
    %2091 = vmatprep.subr.mxu0 0.0
    %2092 = vmatpush1.xpose.msra.mxu0 0.0
    %2093 = vmatprep.subr.mxu0 0.0
    %2094 = vmatpush1.xpose.msra.mxu0 0.0
    %2095 = vmatprep.subr.mxu0 0.0
    %2096 = vmatpush1.xpose.msra.mxu0 0.0
    %2097 = vmatprep.subr.mxu0 0.0
    %2098 = vmatpush1.xpose.msra.mxu0 0.0
    %2099 = vmatprep.subr.mxu0 0.0
    %2100 = vmatpush1.xpose.msra.mxu0 0.0
    %2101 = vmatprep.subr.mxu0 0.0
    %2102 = vmatpush1.xpose.msra.mxu0 0.0
    %2103 = vmatprep.subr.mxu0 0.0
    %2104 = vmatpush1.xpose.msra.mxu0 0.0
    %2105 = vmatprep.subr.mxu0 0.0
    %2106 = vmatpush1.xpose.msra.mxu0 0.0
    %2107 = vmatprep.subr.mxu0 0.0
    %2108 = vmatpush1.xpose.msra.mxu0 0.0
    %2109 = vmatprep.subr.mxu0 0.0
    %2110 = vmatpush1.xpose.msra.mxu0 0.0
    %2111 = vmatprep.subr.mxu0 0.0
    %2112 = vmatpush1.xpose.msra.mxu0 0.0
    %2113 = vmatprep.subr.mxu0 0.0
    %2114 = vmatpush1.xpose.msra.mxu0 0.0
    %2115 = vmatprep.subr.mxu0 0.0
    %2116 = vmatpush1.xpose.msra.mxu0 0.0
    %2117 = vmatprep.subr.mxu0 0.0
    %2118 = vmatpush1.xpose.msra.mxu0 0.0
    %2119 = vmatprep.subr.mxu0 0.0
    %2120 = vmatpush1.xpose.msra.mxu0 0.0
    %2121 = vmatprep.subr.mxu0 0.0
    %2122 = vmatpush1.xpose.msra.mxu0 0.0
    %2123 = vmatprep.subr.mxu0 0.0
    %2124 = vmatpush1.xpose.msra.mxu0 0.0
    %2125 = vmatprep.subr.mxu0 0.0
    %2126 = vmatpush1.xpose.msra.mxu0 0.0
    %2127 = vmatprep.subr.mxu0 0.0
    %2128 = vmatpush1.xpose.msra.mxu0 0.0
    %2129 = vmatprep.subr.mxu0 0.0
    %2130 = vmatpush1.xpose.msra.mxu0 0.0
    %2131 = vmatprep.mubr.f32.mxu0 0.0
    %2132 = vmatmul.mubr.f32.gmra.mrb[0].mxu0 %v2062
    %v2133 = vpop.f32.mrb[0].mxu0
    %v2134 = vadd.f32 0.0, %v2133
    %v2135 = vpop.f32.mrb[0].mxu0
    %2136 = vdwg.mxu0
    %v2138 = vsel %vm444, %v1901, 0
    %v2141 = vsel %vm444, %v1980, 0
    %2143 = vmatprep.subr.mxu0 0.0
    %2144 = vmatpush1.xpose.msra.mxu0 %v2141
    %2145 = vmatprep.subr.mxu0 0.0
    %2146 = vmatpush1.xpose.msra.mxu0 0.0
    %2147 = vmatprep.subr.mxu0 0.0
    %2148 = vmatpush1.xpose.msra.mxu0 0.0
    %2149 = vmatprep.subr.mxu0 0.0
    %2150 = vmatpush1.xpose.msra.mxu0 0.0
    %2151 = vmatprep.subr.mxu0 0.0
    %2152 = vmatpush1.xpose.msra.mxu0 0.0
    %2153 = vmatprep.subr.mxu0 0.0
    %2154 = vmatpush1.xpose.msra.mxu0 0.0
    %2155 = vmatprep.subr.mxu0 0.0
    %2156 = vmatpush1.xpose.msra.mxu0 0.0
    %2157 = vmatprep.subr.mxu0 0.0
    %2158 = vmatpush1.xpose.msra.mxu0 0.0
    %2159 = vmatprep.subr.mxu0 0.0
    %2160 = vmatpush1.xpose.msra.mxu0 0.0
    %2161 = vmatprep.subr.mxu0 0.0
    %2162 = vmatpush1.xpose.msra.mxu0 0.0
    %2163 = vmatprep.subr.mxu0 0.0
    %2164 = vmatpush1.xpose.msra.mxu0 0.0
    %2165 = vmatprep.subr.mxu0 0.0
    %2166 = vmatpush1.xpose.msra.mxu0 0.0
    %2167 = vmatprep.subr.mxu0 0.0
    %2168 = vmatpush1.xpose.msra.mxu0 0.0
    %2169 = vmatprep.subr.mxu0 0.0
    %2170 = vmatpush1.xpose.msra.mxu0 0.0
    %2171 = vmatprep.subr.mxu0 0.0
    %2172 = vmatpush1.xpose.msra.mxu0 0.0
    %2173 = vmatprep.subr.mxu0 0.0
    %2174 = vmatpush1.xpose.msra.mxu0 0.0
    %2175 = vmatprep.subr.mxu0 0.0
    %2176 = vmatpush1.xpose.msra.mxu0 0.0
    %2177 = vmatprep.subr.mxu0 0.0
    %2178 = vmatpush1.xpose.msra.mxu0 0.0
    %2179 = vmatprep.subr.mxu0 0.0
    %2180 = vmatpush1.xpose.msra.mxu0 0.0
    %2181 = vmatprep.subr.mxu0 0.0
    %2182 = vmatpush1.xpose.msra.mxu0 0.0
    %2183 = vmatprep.subr.mxu0 0.0
    %2184 = vmatpush1.xpose.msra.mxu0 0.0
    %2185 = vmatprep.subr.mxu0 0.0
    %2186 = vmatpush1.xpose.msra.mxu0 0.0
    %2187 = vmatprep.subr.mxu0 0.0
    %2188 = vmatpush1.xpose.msra.mxu0 0.0
    %2189 = vmatprep.subr.mxu0 0.0
    %2190 = vmatpush1.xpose.msra.mxu0 0.0
    %2191 = vmatprep.subr.mxu0 0.0
    %2192 = vmatpush1.xpose.msra.mxu0 0.0
    %2193 = vmatprep.subr.mxu0 0.0
    %2194 = vmatpush1.xpose.msra.mxu0 0.0
    %2195 = vmatprep.subr.mxu0 0.0
    %2196 = vmatpush1.xpose.msra.mxu0 0.0
    %2197 = vmatprep.subr.mxu0 0.0
    %2198 = vmatpush1.xpose.msra.mxu0 0.0
    %2199 = vmatprep.subr.mxu0 0.0
    %2200 = vmatpush1.xpose.msra.mxu0 0.0
    %2201 = vmatprep.subr.mxu0 0.0
    %2202 = vmatpush1.xpose.msra.mxu0 0.0
    %2203 = vmatprep.subr.mxu0 0.0
    %2204 = vmatpush1.xpose.msra.mxu0 0.0
    %2205 = vmatprep.subr.mxu0 0.0
    %2206 = vmatpush1.xpose.msra.mxu0 0.0
    %2207 = vmatprep.mubr.f32.mxu0 0.0
    %2208 = vmatmul.mubr.f32.gmra.mrb[0].mxu0 %v2138
    %v2209 = vpop.f32.mrb[0].mxu0
    %v2210 = vadd.f32 0.0, %v2209
    %v2211 = vpop.f32.mrb[0].mxu0
    %2212 = vdwg.mxu0
    %v2213 = vmul.f32 %v2134, 0.25
    %v2214 = vmul.f32 %v2210, 0.25
    %v2215 = vsel %vm600, %v2213, -1e+30
    %v2216 = vsel %vm600, %v2214, -1e+30
    %v2217 = vsel %vm603, %v2215, -inf
    %2218 = vmax.xlane.f32.xlu0 %v2217
    %v2219 = vpop.xlane.xlu0 %2218
    %v2220 = vsel %vm603, %v2216, -inf
    %2221 = vmax.xlane.f32.xlu0 %v2220
    %v2222 = vpop.xlane.xlu0 %2221
    %v2223 = vsub.f32 %v2215, %v2219
    %v2224 = vsub.f32 %v2216, %v2222
    %v2225 = vmul.f32 %v2223, 1.442695
    %v2226 = vpow.pop %v2225
    %v2227 = vmul.f32 %v2224, 1.442695
    %v2228 = vpow.pop %v2227
    %v2229 = vsel %vm603, %v2226, 0.0
    %2230 = vadd.xlane.f32.xlu0 %v2229
    %v2231 = vpop.xlane.xlu0 %2230
    %v2232 = vsel %vm603, %v2228, 0.0
    %2233 = vadd.xlane.f32.xlu0 %v2232
    %v2234 = vpop.xlane.xlu0 %2233
    %v2235 = vrcp.pop %v2231
    %v2236 = vrcp.pop %v2234
    %v2237 = vmul.f32 %v2226, %v2235
    %v2238 = vmul.f32 %v2228, %v2236
    %v2240 = vsel %vm603, %v2237, 0
    %2242 = vmatprep.subr.mxu0 0.0
    %2243 = vmatpush1.msra.mxu0 %v2053
    %2244 = vmatprep.subr.mxu0 0.0
    %2245 = vmatpush1.msra.mxu0 0.0
    %2246 = vmatprep.subr.mxu0 0.0
    %2247 = vmatpush1.msra.mxu0 0.0
    %2248 = vmatprep.subr.mxu0 0.0
    %2249 = vmatpush1.msra.mxu0 0.0
    %2250 = vmatprep.subr.mxu0 0.0
    %2251 = vmatpush1.msra.mxu0 0.0
    %2252 = vmatprep.subr.mxu0 0.0
    %2253 = vmatpush1.msra.mxu0 0.0
    %2254 = vmatprep.subr.mxu0 0.0
    %2255 = vmatpush1.msra.mxu0 0.0
    %2256 = vmatprep.subr.mxu0 0.0
    %2257 = vmatpush1.msra.mxu0 0.0
    %2258 = vmatprep.subr.mxu0 0.0
    %2259 = vmatpush1.msra.mxu0 0.0
    %2260 = vmatprep.subr.mxu0 0.0
    %2261 = vmatpush1.msra.mxu0 0.0
    %2262 = vmatprep.subr.mxu0 0.0
    %2263 = vmatpush1.msra.mxu0 0.0
    %2264 = vmatprep.subr.mxu0 0.0
    %2265 = vmatpush1.msra.mxu0 0.0
    %2266 = vmatprep.subr.mxu0 0.0
    %2267 = vmatpush1.msra.mxu0 0.0
    %2268 = vmatprep.subr.mxu0 0.0
    %2269 = vmatpush1.msra.mxu0 0.0
    %2270 = vmatprep.subr.mxu0 0.0
    %2271 = vmatpush1.msra.mxu0 0.0
    %2272 = vmatprep.subr.mxu0 0.0
    %2273 = vmatpush1.msra.mxu0 0.0
    %2274 = vmatprep.subr.mxu0 0.0
    %2275 = vmatpush1.msra.mxu0 0.0
    %2276 = vmatprep.subr.mxu0 0.0
    %2277 = vmatpush1.msra.mxu0 0.0
    %2278 = vmatprep.subr.mxu0 0.0
    %2279 = vmatpush1.msra.mxu0 0.0
    %2280 = vmatprep.subr.mxu0 0.0
    %2281 = vmatpush1.msra.mxu0 0.0
    %2282 = vmatprep.subr.mxu0 0.0
    %2283 = vmatpush1.msra.mxu0 0.0
    %2284 = vmatprep.subr.mxu0 0.0
    %2285 = vmatpush1.msra.mxu0 0.0
    %2286 = vmatprep.subr.mxu0 0.0
    %2287 = vmatpush1.msra.mxu0 0.0
    %2288 = vmatprep.subr.mxu0 0.0
    %2289 = vmatpush1.msra.mxu0 0.0
    %2290 = vmatprep.subr.mxu0 0.0
    %2291 = vmatpush1.msra.mxu0 0.0
    %2292 = vmatprep.subr.mxu0 0.0
    %2293 = vmatpush1.msra.mxu0 0.0
    %2294 = vmatprep.subr.mxu0 0.0
    %2295 = vmatpush1.msra.mxu0 0.0
    %2296 = vmatprep.subr.mxu0 0.0
    %2297 = vmatpush1.msra.mxu0 0.0
    %2298 = vmatprep.subr.mxu0 0.0
    %2299 = vmatpush1.msra.mxu0 0.0
    %2300 = vmatprep.subr.mxu0 0.0
    %2301 = vmatpush1.msra.mxu0 0.0
    %2302 = vmatprep.subr.mxu0 0.0
    %2303 = vmatpush1.msra.mxu0 0.0
    %2304 = vmatprep.subr.mxu0 0.0
    %2305 = vmatpush1.msra.mxu0 0.0
    %2306 = vmatprep.mubr.f32.mxu0 0.0
    %2307 = vmatmul.mubr.f32.gmra.mrb[0].mxu0 %v2240
    %v2308 = vpop.f32.mrb[0].mxu0
    %v2309 = vadd.f32 0.0, %v2308
    %v2310 = vpop.f32.mrb[0].mxu0
    %2311 = vdwg.mxu0
    %v2313 = vsel %vm603, %v2238, 0
    %2315 = vmatprep.subr.mxu0 0.0
    %2316 = vmatpush1.msra.mxu0 %v2058
    %2317 = vmatprep.subr.mxu0 0.0
    %2318 = vmatpush1.msra.mxu0 0.0
    %2319 = vmatprep.subr.mxu0 0.0
    %2320 = vmatpush1.msra.mxu0 0.0
    %2321 = vmatprep.subr.mxu0 0.0
    %2322 = vmatpush1.msra.mxu0 0.0
    %2323 = vmatprep.subr.mxu0 0.0
    %2324 = vmatpush1.msra.mxu0 0.0
    %2325 = vmatprep.subr.mxu0 0.0
    %2326 = vmatpush1.msra.mxu0 0.0
    %2327 = vmatprep.subr.mxu0 0.0
    %2328 = vmatpush1.msra.mxu0 0.0
    %2329 = vmatprep.subr.mxu0 0.0
    %2330 = vmatpush1.msra.mxu0 0.0
    %2331 = vmatprep.subr.mxu0 0.0
    %2332 = vmatpush1.msra.mxu0 0.0
    %2333 = vmatprep.subr.mxu0 0.0
    %2334 = vmatpush1.msra.mxu0 0.0
    %2335 = vmatprep.subr.mxu0 0.0
    %2336 = vmatpush1.msra.mxu0 0.0
    %2337 = vmatprep.subr.mxu0 0.0
    %2338 = vmatpush1.msra.mxu0 0.0
    %2339 = vmatprep.subr.mxu0 0.0
    %2340 = vmatpush1.msra.mxu0 0.0
    %2341 = vmatprep.subr.mxu0 0.0
    %2342 = vmatpush1.msra.mxu0 0.0
    %2343 = vmatprep.subr.mxu0 0.0
    %2344 = vmatpush1.msra.mxu0 0.0
    %2345 = vmatprep.subr.mxu0 0.0
    %2346 = vmatpush1.msra.mxu0 0.0
    %2347 = vmatprep.subr.mxu0 0.0
    %2348 = vmatpush1.msra.mxu0 0.0
    %2349 = vmatprep.subr.mxu0 0.0
    %2350 = vmatpush1.msra.mxu0 0.0
    %2351 = vmatprep.subr.mxu0 0.0
    %2352 = vmatpush1.msra.mxu0 0.0
    %2353 = vmatprep.subr.mxu0 0.0
    %2354 = vmatpush1.msra.mxu0 0.0
    %2355 = vmatprep.subr.mxu0 0.0
    %2356 = vmatpush1.msra.mxu0 0.0
    %2357 = vmatprep.subr.mxu0 0.0
    %2358 = vmatpush1.msra.mxu0 0.0
    %2359 = vmatprep.subr.mxu0 0.0
    %2360 = vmatpush1.msra.mxu0 0.0
    %2361 = vmatprep.subr.mxu0 0.0
    %2362 = vmatpush1.msra.mxu0 0.0
    %2363 = vmatprep.subr.mxu0 0.0
    %2364 = vmatpush1.msra.mxu0 0.0
    %2365 = vmatprep.subr.mxu0 0.0
    %2366 = vmatpush1.msra.mxu0 0.0
    %2367 = vmatprep.subr.mxu0 0.0
    %2368 = vmatpush1.msra.mxu0 0.0
    %2369 = vmatprep.subr.mxu0 0.0
    %2370 = vmatpush1.msra.mxu0 0.0
    %2371 = vmatprep.subr.mxu0 0.0
    %2372 = vmatpush1.msra.mxu0 0.0
    %2373 = vmatprep.subr.mxu0 0.0
    %2374 = vmatpush1.msra.mxu0 0.0
    %2375 = vmatprep.subr.mxu0 0.0
    %2376 = vmatpush1.msra.mxu0 0.0
    %2377 = vmatprep.subr.mxu0 0.0
    %2378 = vmatpush1.msra.mxu0 0.0
    %2379 = vmatprep.mubr.f32.mxu0 0.0
    %2380 = vmatmul.mubr.f32.gmra.mrb[0].mxu0 %v2313
    %v2381 = vpop.f32.mrb[0].mxu0
    %v2382 = vadd.f32 0.0, %v2381
    %v2383 = vpop.f32.mrb[0].mxu0
    %2384 = vdwg.mxu0
    %s2385 = scalar_lea.vmem %s2, 32
    %v2386 = vld [vmem:[%s2385] sm:$0xff]
    %v2387 = vld [vmem:[%s2385 + $0x8] sm:$0xff]
    %s2388 = scalar_lea.vmem %s1, 224
    %v2389 = vld [vmem:[%s2388] sm:$0xff]
    %v2390 = vld [vmem:[%s2388 + $0x8] sm:$0xff]
    %v2391 = vld [vmem:[%s2388 + $0x10] sm:$0xff]
    %v2392 = vld [vmem:[%s2388 + $0x18] sm:$0xff]
    %s2393 = scalar_lea.vmem %s1, 288
    %v2394 = vld [vmem:[%s2393] sm:$0xff]
    %v2395 = vld [vmem:[%s2393 + $0x8] sm:$0xff]
    %v2396 = vld [vmem:[%s2393 + $0x10] sm:$0xff]
    %v2397 = vld [vmem:[%s2393 + $0x18] sm:$0xff]
    %s2398 = scalar_lea.vmem %s1, 352
    %v2399 = vld [vmem:[%s2398] sm:$0xff]
    %v2400 = vld [vmem:[%s2398 + $0x8] sm:$0xff]
    %v2401 = vld [vmem:[%s2398 + $0x10] sm:$0xff]
    %v2402 = vld [vmem:[%s2398 + $0x18] sm:$0xff]
    %2403 = vrot.lane.b32.xlu0 %v1822, 112
    %v2404 = vpop.permute.xlu0 %2403
    %2406 = vmatprep.subr.mxu0 0.0
    %2407 = vmatpush1.msra.mxu0 %v2389
    %2408 = vmatprep.subr.mxu0 0.0
    %2409 = vmatpush1.msra.mxu0 %v2390
    %2410 = vmatprep.subr.mxu0 0.0
    %2411 = vmatpush1.msra.mxu0 %v2391
    %2412 = vmatprep.subr.mxu0 0.0
    %2413 = vmatpush1.msra.mxu0 %v2392
    %2414 = vmatprep.subr.mxu0 0.0
    %2415 = vmatpush1.msra.mxu0 0.0
    %2416 = vmatprep.subr.mxu0 0.0
    %2417 = vmatpush1.msra.mxu0 0.0
    %2418 = vmatprep.subr.mxu0 0.0
    %2419 = vmatpush1.msra.mxu0 0.0
    %2420 = vmatprep.subr.mxu0 0.0
    %2421 = vmatpush1.msra.mxu0 0.0
    %2422 = vmatprep.subr.mxu0 0.0
    %2423 = vmatpush1.msra.mxu0 0.0
    %2424 = vmatprep.subr.mxu0 0.0
    %2425 = vmatpush1.msra.mxu0 0.0
    %2426 = vmatprep.subr.mxu0 0.0
    %2427 = vmatpush1.msra.mxu0 0.0
    %2428 = vmatprep.subr.mxu0 0.0
    %2429 = vmatpush1.msra.mxu0 0.0
    %2430 = vmatprep.subr.mxu0 0.0
    %2431 = vmatpush1.msra.mxu0 0.0
    %2432 = vmatprep.subr.mxu0 0.0
    %2433 = vmatpush1.msra.mxu0 0.0
    %2434 = vmatprep.subr.mxu0 0.0
    %2435 = vmatpush1.msra.mxu0 0.0
    %2436 = vmatprep.subr.mxu0 0.0
    %2437 = vmatpush1.msra.mxu0 0.0
    %2438 = vmatprep.subr.mxu0 0.0
    %2439 = vmatpush1.msra.mxu0 0.0
    %2440 = vmatprep.subr.mxu0 0.0
    %2441 = vmatpush1.msra.mxu0 0.0
    %2442 = vmatprep.subr.mxu0 0.0
    %2443 = vmatpush1.msra.mxu0 0.0
    %2444 = vmatprep.subr.mxu0 0.0
    %2445 = vmatpush1.msra.mxu0 0.0
    %2446 = vmatprep.subr.mxu0 0.0
    %2447 = vmatpush1.msra.mxu0 0.0
    %2448 = vmatprep.subr.mxu0 0.0
    %2449 = vmatpush1.msra.mxu0 0.0
    %2450 = vmatprep.subr.mxu0 0.0
    %2451 = vmatpush1.msra.mxu0 0.0
    %2452 = vmatprep.subr.mxu0 0.0
    %2453 = vmatpush1.msra.mxu0 0.0
    %2454 = vmatprep.subr.mxu0 0.0
    %2455 = vmatpush1.msra.mxu0 0.0
    %2456 = vmatprep.subr.mxu0 0.0
    %2457 = vmatpush1.msra.mxu0 0.0
    %2458 = vmatprep.subr.mxu0 0.0
    %2459 = vmatpush1.msra.mxu0 0.0
    %2460 = vmatprep.subr.mxu0 0.0
    %2461 = vmatpush1.msra.mxu0 0.0
    %2462 = vmatprep.subr.mxu0 0.0
    %2463 = vmatpush1.msra.mxu0 0.0
    %2464 = vmatprep.subr.mxu0 0.0
    %2465 = vmatpush1.msra.mxu0 0.0
    %2466 = vmatprep.subr.mxu0 0.0
    %2467 = vmatpush1.msra.mxu0 0.0
    %2468 = vmatprep.subr.mxu0 0.0
    %2469 = vmatpush1.msra.mxu0 0.0
    %2470 = vmatprep.mubr.f32.mxu0 0.0
    %2471 = vmatmul.mubr.f32.gmra.mrb[0].mxu0 %v1824
    %v2472 = vpop.f32.mrb[0].mxu0
    %v2473 = vadd.f32 %v2404, %v2472
    %v2474 = vpop.f32.mrb[0].mxu0
    %2475 = vmatprep.mubr.f32.mxu0 0.0
    %2476 = vmatmul.mubr.f32.gmra.mrb[0].mxu0 %v1827
    %v2477 = vpop.f32.mrb[0].mxu0
    %v2478 = vadd.f32 %v2404, %v2477
    %v2479 = vpop.f32.mrb[0].mxu0
    %2480 = vdwg.mxu0
    %2481 = vrot.lane.b32.xlu0 %v1822, 80
    %v2482 = vpop.permute.xlu0 %2481
    %2484 = vmatprep.subr.mxu0 0.0
    %2485 = vmatpush1.msra.mxu0 %v2394
    %2486 = vmatprep.subr.mxu0 0.0
    %2487 = vmatpush1.msra.mxu0 %v2395
    %2488 = vmatprep.subr.mxu0 0.0
    %2489 = vmatpush1.msra.mxu0 %v2396
    %2490 = vmatprep.subr.mxu0 0.0
    %2491 = vmatpush1.msra.mxu0 %v2397
    %2492 = vmatprep.subr.mxu0 0.0
    %2493 = vmatpush1.msra.mxu0 0.0
    %2494 = vmatprep.subr.mxu0 0.0
    %2495 = vmatpush1.msra.mxu0 0.0
    %2496 = vmatprep.subr.mxu0 0.0
    %2497 = vmatpush1.msra.mxu0 0.0
    %2498 = vmatprep.subr.mxu0 0.0
    %2499 = vmatpush1.msra.mxu0 0.0
    %2500 = vmatprep.subr.mxu0 0.0
    %2501 = vmatpush1.msra.mxu0 0.0
    %2502 = vmatprep.subr.mxu0 0.0
    %2503 = vmatpush1.msra.mxu0 0.0
    %2504 = vmatprep.subr.mxu0 0.0
    %2505 = vmatpush1.msra.mxu0 0.0
    %2506 = vmatprep.subr.mxu0 0.0
    %2507 = vmatpush1.msra.mxu0 0.0
    %2508 = vmatprep.subr.mxu0 0.0
    %2509 = vmatpush1.msra.mxu0 0.0
    %2510 = vmatprep.subr.mxu0 0.0
    %2511 = vmatpush1.msra.mxu0 0.0
    %2512 = vmatprep.subr.mxu0 0.0
    %2513 = vmatpush1.msra.mxu0 0.0
    %2514 = vmatprep.subr.mxu0 0.0
    %2515 = vmatpush1.msra.mxu0 0.0
    %2516 = vmatprep.subr.mxu0 0.0
    %2517 = vmatpush1.msra.mxu0 0.0
    %2518 = vmatprep.subr.mxu0 0.0
    %2519 = vmatpush1.msra.mxu0 0.0
    %2520 = vmatprep.subr.mxu0 0.0
    %2521 = vmatpush1.msra.mxu0 0.0
    %2522 = vmatprep.subr.mxu0 0.0
    %2523 = vmatpush1.msra.mxu0 0.0
    %2524 = vmatprep.subr.mxu0 0.0
    %2525 = vmatpush1.msra.mxu0 0.0
    %2526 = vmatprep.subr.mxu0 0.0
    %2527 = vmatpush1.msra.mxu0 0.0
    %2528 = vmatprep.subr.mxu0 0.0
    %2529 = vmatpush1.msra.mxu0 0.0
    %2530 = vmatprep.subr.mxu0 0.0
    %2531 = vmatpush1.msra.mxu0 0.0
    %2532 = vmatprep.subr.mxu0 0.0
    %2533 = vmatpush1.msra.mxu0 0.0
    %2534 = vmatprep.subr.mxu0 0.0
    %2535 = vmatpush1.msra.mxu0 0.0
    %2536 = vmatprep.subr.mxu0 0.0
    %2537 = vmatpush1.msra.mxu0 0.0
    %2538 = vmatprep.subr.mxu0 0.0
    %2539 = vmatpush1.msra.mxu0 0.0
    %2540 = vmatprep.subr.mxu0 0.0
    %2541 = vmatpush1.msra.mxu0 0.0
    %2542 = vmatprep.subr.mxu0 0.0
    %2543 = vmatpush1.msra.mxu0 0.0
    %2544 = vmatprep.subr.mxu0 0.0
    %2545 = vmatpush1.msra.mxu0 0.0
    %2546 = vmatprep.subr.mxu0 0.0
    %2547 = vmatpush1.msra.mxu0 0.0
    %2548 = vmatprep.mubr.f32.mxu0 0.0
    %2549 = vmatmul.mubr.f32.gmra.mrb[0].mxu0 %v1824
    %v2550 = vpop.f32.mrb[0].mxu0
    %v2551 = vadd.f32 %v2482, %v2550
    %v2552 = vpop.f32.mrb[0].mxu0
    %2553 = vmatprep.mubr.f32.mxu0 0.0
    %2554 = vmatmul.mubr.f32.gmra.mrb[0].mxu0 %v1827
    %v2555 = vpop.f32.mrb[0].mxu0
    %v2556 = vadd.f32 %v2482, %v2555
    %v2557 = vpop.f32.mrb[0].mxu0
    %2558 = vdwg.mxu0
    %2559 = vrot.lane.b32.xlu0 %v1822, 48
    %v2560 = vpop.permute.xlu0 %2559
    %2562 = vmatprep.subr.mxu0 0.0
    %2563 = vmatpush1.msra.mxu0 %v2399
    %2564 = vmatprep.subr.mxu0 0.0
    %2565 = vmatpush1.msra.mxu0 %v2400
    %2566 = vmatprep.subr.mxu0 0.0
    %2567 = vmatpush1.msra.mxu0 %v2401
    %2568 = vmatprep.subr.mxu0 0.0
    %2569 = vmatpush1.msra.mxu0 %v2402
    %2570 = vmatprep.subr.mxu0 0.0
    %2571 = vmatpush1.msra.mxu0 0.0
    %2572 = vmatprep.subr.mxu0 0.0
    %2573 = vmatpush1.msra.mxu0 0.0
    %2574 = vmatprep.subr.mxu0 0.0
    %2575 = vmatpush1.msra.mxu0 0.0
    %2576 = vmatprep.subr.mxu0 0.0
    %2577 = vmatpush1.msra.mxu0 0.0
    %2578 = vmatprep.subr.mxu0 0.0
    %2579 = vmatpush1.msra.mxu0 0.0
    %2580 = vmatprep.subr.mxu0 0.0
    %2581 = vmatpush1.msra.mxu0 0.0
    %2582 = vmatprep.subr.mxu0 0.0
    %2583 = vmatpush1.msra.mxu0 0.0
    %2584 = vmatprep.subr.mxu0 0.0
    %2585 = vmatpush1.msra.mxu0 0.0
    %2586 = vmatprep.subr.mxu0 0.0
    %2587 = vmatpush1.msra.mxu0 0.0
    %2588 = vmatprep.subr.mxu0 0.0
    %2589 = vmatpush1.msra.mxu0 0.0
    %2590 = vmatprep.subr.mxu0 0.0
    %2591 = vmatpush1.msra.mxu0 0.0
    %2592 = vmatprep.subr.mxu0 0.0
    %2593 = vmatpush1.msra.mxu0 0.0
    %2594 = vmatprep.subr.mxu0 0.0
    %2595 = vmatpush1.msra.mxu0 0.0
    %2596 = vmatprep.subr.mxu0 0.0
    %2597 = vmatpush1.msra.mxu0 0.0
    %2598 = vmatprep.subr.mxu0 0.0
    %2599 = vmatpush1.msra.mxu0 0.0
    %2600 = vmatprep.subr.mxu0 0.0
    %2601 = vmatpush1.msra.mxu0 0.0
    %2602 = vmatprep.subr.mxu0 0.0
    %2603 = vmatpush1.msra.mxu0 0.0
    %2604 = vmatprep.subr.mxu0 0.0
    %2605 = vmatpush1.msra.mxu0 0.0
    %2606 = vmatprep.subr.mxu0 0.0
    %2607 = vmatpush1.msra.mxu0 0.0
    %2608 = vmatprep.subr.mxu0 0.0
    %2609 = vmatpush1.msra.mxu0 0.0
    %2610 = vmatprep.subr.mxu0 0.0
    %2611 = vmatpush1.msra.mxu0 0.0
    %2612 = vmatprep.subr.mxu0 0.0
    %2613 = vmatpush1.msra.mxu0 0.0
    %2614 = vmatprep.subr.mxu0 0.0
    %2615 = vmatpush1.msra.mxu0 0.0
    %2616 = vmatprep.subr.mxu0 0.0
    %2617 = vmatpush1.msra.mxu0 0.0
    %2618 = vmatprep.subr.mxu0 0.0
    %2619 = vmatpush1.msra.mxu0 0.0
    %2620 = vmatprep.subr.mxu0 0.0
    %2621 = vmatpush1.msra.mxu0 0.0
    %2622 = vmatprep.subr.mxu0 0.0
    %2623 = vmatpush1.msra.mxu0 0.0
    %2624 = vmatprep.subr.mxu0 0.0
    %2625 = vmatpush1.msra.mxu0 0.0
    %2626 = vmatprep.mubr.f32.mxu0 0.0
    %2627 = vmatmul.mubr.f32.gmra.mrb[0].mxu0 %v1824
    %v2628 = vpop.f32.mrb[0].mxu0
    %v2629 = vadd.f32 %v2560, %v2628
    %v2630 = vpop.f32.mrb[0].mxu0
    %2631 = vmatprep.mubr.f32.mxu0 0.0
    %2632 = vmatmul.mubr.f32.gmra.mrb[0].mxu0 %v1827
    %v2633 = vpop.f32.mrb[0].mxu0
    %v2634 = vadd.f32 %v2560, %v2633
    %v2635 = vpop.f32.mrb[0].mxu0
    %2636 = vdwg.mxu0
    %v2638 = vsel %vm444, %v2473, 0
    %v2641 = vsel %vm444, %v2551, 0
    %2643 = vmatprep.subr.mxu0 0.0
    %2644 = vmatpush1.xpose.msra.mxu0 %v2641
    %2645 = vmatprep.subr.mxu0 0.0
    %2646 = vmatpush1.xpose.msra.mxu0 0.0
    %2647 = vmatprep.subr.mxu0 0.0
    %2648 = vmatpush1.xpose.msra.mxu0 0.0
    %2649 = vmatprep.subr.mxu0 0.0
    %2650 = vmatpush1.xpose.msra.mxu0 0.0
    %2651 = vmatprep.subr.mxu0 0.0
    %2652 = vmatpush1.xpose.msra.mxu0 0.0
    %2653 = vmatprep.subr.mxu0 0.0
    %2654 = vmatpush1.xpose.msra.mxu0 0.0
    %2655 = vmatprep.subr.mxu0 0.0
    %2656 = vmatpush1.xpose.msra.mxu0 0.0
    %2657 = vmatprep.subr.mxu0 0.0
    %2658 = vmatpush1.xpose.msra.mxu0 0.0
    %2659 = vmatprep.subr.mxu0 0.0
    %2660 = vmatpush1.xpose.msra.mxu0 0.0
    %2661 = vmatprep.subr.mxu0 0.0
    %2662 = vmatpush1.xpose.msra.mxu0 0.0
    %2663 = vmatprep.subr.mxu0 0.0
    %2664 = vmatpush1.xpose.msra.mxu0 0.0
    %2665 = vmatprep.subr.mxu0 0.0
    %2666 = vmatpush1.xpose.msra.mxu0 0.0
    %2667 = vmatprep.subr.mxu0 0.0
    %2668 = vmatpush1.xpose.msra.mxu0 0.0
    %2669 = vmatprep.subr.mxu0 0.0
    %2670 = vmatpush1.xpose.msra.mxu0 0.0
    %2671 = vmatprep.subr.mxu0 0.0
    %2672 = vmatpush1.xpose.msra.mxu0 0.0
    %2673 = vmatprep.subr.mxu0 0.0
    %2674 = vmatpush1.xpose.msra.mxu0 0.0
    %2675 = vmatprep.subr.mxu0 0.0
    %2676 = vmatpush1.xpose.msra.mxu0 0.0
    %2677 = vmatprep.subr.mxu0 0.0
    %2678 = vmatpush1.xpose.msra.mxu0 0.0
    %2679 = vmatprep.subr.mxu0 0.0
    %2680 = vmatpush1.xpose.msra.mxu0 0.0
    %2681 = vmatprep.subr.mxu0 0.0
    %2682 = vmatpush1.xpose.msra.mxu0 0.0
    %2683 = vmatprep.subr.mxu0 0.0
    %2684 = vmatpush1.xpose.msra.mxu0 0.0
    %2685 = vmatprep.subr.mxu0 0.0
    %2686 = vmatpush1.xpose.msra.mxu0 0.0
    %2687 = vmatprep.subr.mxu0 0.0
    %2688 = vmatpush1.xpose.msra.mxu0 0.0
    %2689 = vmatprep.subr.mxu0 0.0
    %2690 = vmatpush1.xpose.msra.mxu0 0.0
    %2691 = vmatprep.subr.mxu0 0.0
    %2692 = vmatpush1.xpose.msra.mxu0 0.0
    %2693 = vmatprep.subr.mxu0 0.0
    %2694 = vmatpush1.xpose.msra.mxu0 0.0
    %2695 = vmatprep.subr.mxu0 0.0
    %2696 = vmatpush1.xpose.msra.mxu0 0.0
    %2697 = vmatprep.subr.mxu0 0.0
    %2698 = vmatpush1.xpose.msra.mxu0 0.0
    %2699 = vmatprep.subr.mxu0 0.0
    %2700 = vmatpush1.xpose.msra.mxu0 0.0
    %2701 = vmatprep.subr.mxu0 0.0
    %2702 = vmatpush1.xpose.msra.mxu0 0.0
    %2703 = vmatprep.subr.mxu0 0.0
    %2704 = vmatpush1.xpose.msra.mxu0 0.0
    %2705 = vmatprep.subr.mxu0 0.0
    %2706 = vmatpush1.xpose.msra.mxu0 0.0
    %2707 = vmatprep.mubr.f32.mxu0 0.0
    %2708 = vmatmul.mubr.f32.gmra.mrb[0].mxu0 %v2638
    %v2709 = vpop.f32.mrb[0].mxu0
    %v2710 = vadd.f32 0.0, %v2709
    %v2711 = vpop.f32.mrb[0].mxu0
    %2712 = vdwg.mxu0
    %v2714 = vsel %vm444, %v2478, 0
    %v2717 = vsel %vm444, %v2556, 0
    %2719 = vmatprep.subr.mxu0 0.0
    %2720 = vmatpush1.xpose.msra.mxu0 %v2717
    %2721 = vmatprep.subr.mxu0 0.0
    %2722 = vmatpush1.xpose.msra.mxu0 0.0
    %2723 = vmatprep.subr.mxu0 0.0
    %2724 = vmatpush1.xpose.msra.mxu0 0.0
    %2725 = vmatprep.subr.mxu0 0.0
    %2726 = vmatpush1.xpose.msra.mxu0 0.0
    %2727 = vmatprep.subr.mxu0 0.0
    %2728 = vmatpush1.xpose.msra.mxu0 0.0
    %2729 = vmatprep.subr.mxu0 0.0
    %2730 = vmatpush1.xpose.msra.mxu0 0.0
    %2731 = vmatprep.subr.mxu0 0.0
    %2732 = vmatpush1.xpose.msra.mxu0 0.0
    %2733 = vmatprep.subr.mxu0 0.0
    %2734 = vmatpush1.xpose.msra.mxu0 0.0
    %2735 = vmatprep.subr.mxu0 0.0
    %2736 = vmatpush1.xpose.msra.mxu0 0.0
    %2737 = vmatprep.subr.mxu0 0.0
    %2738 = vmatpush1.xpose.msra.mxu0 0.0
    %2739 = vmatprep.subr.mxu0 0.0
    %2740 = vmatpush1.xpose.msra.mxu0 0.0
    %2741 = vmatprep.subr.mxu0 0.0
    %2742 = vmatpush1.xpose.msra.mxu0 0.0
    %2743 = vmatprep.subr.mxu0 0.0
    %2744 = vmatpush1.xpose.msra.mxu0 0.0
    %2745 = vmatprep.subr.mxu0 0.0
    %2746 = vmatpush1.xpose.msra.mxu0 0.0
    %2747 = vmatprep.subr.mxu0 0.0
    %2748 = vmatpush1.xpose.msra.mxu0 0.0
    %2749 = vmatprep.subr.mxu0 0.0
    %2750 = vmatpush1.xpose.msra.mxu0 0.0
    %2751 = vmatprep.subr.mxu0 0.0
    %2752 = vmatpush1.xpose.msra.mxu0 0.0
    %2753 = vmatprep.subr.mxu0 0.0
    %2754 = vmatpush1.xpose.msra.mxu0 0.0
    %2755 = vmatprep.subr.mxu0 0.0
    %2756 = vmatpush1.xpose.msra.mxu0 0.0
    %2757 = vmatprep.subr.mxu0 0.0
    %2758 = vmatpush1.xpose.msra.mxu0 0.0
    %2759 = vmatprep.subr.mxu0 0.0
    %2760 = vmatpush1.xpose.msra.mxu0 0.0
    %2761 = vmatprep.subr.mxu0 0.0
    %2762 = vmatpush1.xpose.msra.mxu0 0.0
    %2763 = vmatprep.subr.mxu0 0.0
    %2764 = vmatpush1.xpose.msra.mxu0 0.0
    %2765 = vmatprep.subr.mxu0 0.0
    %2766 = vmatpush1.xpose.msra.mxu0 0.0
    %2767 = vmatprep.subr.mxu0 0.0
    %2768 = vmatpush1.xpose.msra.mxu0 0.0
    %2769 = vmatprep.subr.mxu0 0.0
    %2770 = vmatpush1.xpose.msra.mxu0 0.0
    %2771 = vmatprep.subr.mxu0 0.0
    %2772 = vmatpush1.xpose.msra.mxu0 0.0
    %2773 = vmatprep.subr.mxu0 0.0
    %2774 = vmatpush1.xpose.msra.mxu0 0.0
    %2775 = vmatprep.subr.mxu0 0.0
    %2776 = vmatpush1.xpose.msra.mxu0 0.0
    %2777 = vmatprep.subr.mxu0 0.0
    %2778 = vmatpush1.xpose.msra.mxu0 0.0
    %2779 = vmatprep.subr.mxu0 0.0
    %2780 = vmatpush1.xpose.msra.mxu0 0.0
    %2781 = vmatprep.subr.mxu0 0.0
    %2782 = vmatpush1.xpose.msra.mxu0 0.0
    %2783 = vmatprep.mubr.f32.mxu0 0.0
    %2784 = vmatmul.mubr.f32.gmra.mrb[0].mxu0 %v2714
    %v2785 = vpop.f32.mrb[0].mxu0
    %v2786 = vadd.f32 0.0, %v2785
    %v2787 = vpop.f32.mrb[0].mxu0
    %2788 = vdwg.mxu0
    %v2789 = vmul.f32 %v2710, 0.25
    %v2790 = vmul.f32 %v2786, 0.25
    %v2791 = vsel %vm600, %v2789, -1e+30
    %v2792 = vsel %vm600, %v2790, -1e+30
    %v2793 = vsel %vm603, %v2791, -inf
    %2794 = vmax.xlane.f32.xlu0 %v2793
    %v2795 = vpop.xlane.xlu0 %2794
    %v2796 = vsel %vm603, %v2792, -inf
    %2797 = vmax.xlane.f32.xlu0 %v2796
    %v2798 = vpop.xlane.xlu0 %2797
    %v2799 = vsub.f32 %v2791, %v2795
    %v2800 = vsub.f32 %v2792, %v2798
    %v2801 = vmul.f32 %v2799, 1.442695
    %v2802 = vpow.pop %v2801
    %v2803 = vmul.f32 %v2800, 1.442695
    %v2804 = vpow.pop %v2803
    %v2805 = vsel %vm603, %v2802, 0.0
    %2806 = vadd.xlane.f32.xlu0 %v2805
    %v2807 = vpop.xlane.xlu0 %2806
    %v2808 = vsel %vm603, %v2804, 0.0
    %2809 = vadd.xlane.f32.xlu0 %v2808
    %v2810 = vpop.xlane.xlu0 %2809
    %v2811 = vrcp.pop %v2807
    %v2812 = vrcp.pop %v2810
    %v2813 = vmul.f32 %v2802, %v2811
    %v2814 = vmul.f32 %v2804, %v2812
    %v2816 = vsel %vm603, %v2813, 0
    %2818 = vmatprep.subr.mxu0 0.0
    %2819 = vmatpush1.msra.mxu0 %v2629
    %2820 = vmatprep.subr.mxu0 0.0
    %2821 = vmatpush1.msra.mxu0 0.0
    %2822 = vmatprep.subr.mxu0 0.0
    %2823 = vmatpush1.msra.mxu0 0.0
    %2824 = vmatprep.subr.mxu0 0.0
    %2825 = vmatpush1.msra.mxu0 0.0
    %2826 = vmatprep.subr.mxu0 0.0
    %2827 = vmatpush1.msra.mxu0 0.0
    %2828 = vmatprep.subr.mxu0 0.0
    %2829 = vmatpush1.msra.mxu0 0.0
    %2830 = vmatprep.subr.mxu0 0.0
    %2831 = vmatpush1.msra.mxu0 0.0
    %2832 = vmatprep.subr.mxu0 0.0
    %2833 = vmatpush1.msra.mxu0 0.0
    %2834 = vmatprep.subr.mxu0 0.0
    %2835 = vmatpush1.msra.mxu0 0.0
    %2836 = vmatprep.subr.mxu0 0.0
    %2837 = vmatpush1.msra.mxu0 0.0
    %2838 = vmatprep.subr.mxu0 0.0
    %2839 = vmatpush1.msra.mxu0 0.0
    %2840 = vmatprep.subr.mxu0 0.0
    %2841 = vmatpush1.msra.mxu0 0.0
    %2842 = vmatprep.subr.mxu0 0.0
    %2843 = vmatpush1.msra.mxu0 0.0
    %2844 = vmatprep.subr.mxu0 0.0
    %2845 = vmatpush1.msra.mxu0 0.0
    %2846 = vmatprep.subr.mxu0 0.0
    %2847 = vmatpush1.msra.mxu0 0.0
    %2848 = vmatprep.subr.mxu0 0.0
    %2849 = vmatpush1.msra.mxu0 0.0
    %2850 = vmatprep.subr.mxu0 0.0
    %2851 = vmatpush1.msra.mxu0 0.0
    %2852 = vmatprep.subr.mxu0 0.0
    %2853 = vmatpush1.msra.mxu0 0.0
    %2854 = vmatprep.subr.mxu0 0.0
    %2855 = vmatpush1.msra.mxu0 0.0
    %2856 = vmatprep.subr.mxu0 0.0
    %2857 = vmatpush1.msra.mxu0 0.0
    %2858 = vmatprep.subr.mxu0 0.0
    %2859 = vmatpush1.msra.mxu0 0.0
    %2860 = vmatprep.subr.mxu0 0.0
    %2861 = vmatpush1.msra.mxu0 0.0
    %2862 = vmatprep.subr.mxu0 0.0
    %2863 = vmatpush1.msra.mxu0 0.0
    %2864 = vmatprep.subr.mxu0 0.0
    %2865 = vmatpush1.msra.mxu0 0.0
    %2866 = vmatprep.subr.mxu0 0.0
    %2867 = vmatpush1.msra.mxu0 0.0
    %2868 = vmatprep.subr.mxu0 0.0
    %2869 = vmatpush1.msra.mxu0 0.0
    %2870 = vmatprep.subr.mxu0 0.0
    %2871 = vmatpush1.msra.mxu0 0.0
    %2872 = vmatprep.subr.mxu0 0.0
    %2873 = vmatpush1.msra.mxu0 0.0
    %2874 = vmatprep.subr.mxu0 0.0
    %2875 = vmatpush1.msra.mxu0 0.0
    %2876 = vmatprep.subr.mxu0 0.0
    %2877 = vmatpush1.msra.mxu0 0.0
    %2878 = vmatprep.subr.mxu0 0.0
    %2879 = vmatpush1.msra.mxu0 0.0
    %2880 = vmatprep.subr.mxu0 0.0
    %2881 = vmatpush1.msra.mxu0 0.0
    %2882 = vmatprep.mubr.f32.mxu0 0.0
    %2883 = vmatmul.mubr.f32.gmra.mrb[0].mxu0 %v2816
    %v2884 = vpop.f32.mrb[0].mxu0
    %v2885 = vadd.f32 0.0, %v2884
    %v2886 = vpop.f32.mrb[0].mxu0
    %2887 = vdwg.mxu0
    %v2889 = vsel %vm603, %v2814, 0
    %2891 = vmatprep.subr.mxu0 0.0
    %2892 = vmatpush1.msra.mxu0 %v2634
    %2893 = vmatprep.subr.mxu0 0.0
    %2894 = vmatpush1.msra.mxu0 0.0
    %2895 = vmatprep.subr.mxu0 0.0
    %2896 = vmatpush1.msra.mxu0 0.0
    %2897 = vmatprep.subr.mxu0 0.0
    %2898 = vmatpush1.msra.mxu0 0.0
    %2899 = vmatprep.subr.mxu0 0.0
    %2900 = vmatpush1.msra.mxu0 0.0
    %2901 = vmatprep.subr.mxu0 0.0
    %2902 = vmatpush1.msra.mxu0 0.0
    %2903 = vmatprep.subr.mxu0 0.0
    %2904 = vmatpush1.msra.mxu0 0.0
    %2905 = vmatprep.subr.mxu0 0.0
    %2906 = vmatpush1.msra.mxu0 0.0
    %2907 = vmatprep.subr.mxu0 0.0
    %2908 = vmatpush1.msra.mxu0 0.0
    %2909 = vmatprep.subr.mxu0 0.0
    %2910 = vmatpush1.msra.mxu0 0.0
    %2911 = vmatprep.subr.mxu0 0.0
    %2912 = vmatpush1.msra.mxu0 0.0
    %2913 = vmatprep.subr.mxu0 0.0
    %2914 = vmatpush1.msra.mxu0 0.0
    %2915 = vmatprep.subr.mxu0 0.0
    %2916 = vmatpush1.msra.mxu0 0.0
    %2917 = vmatprep.subr.mxu0 0.0
    %2918 = vmatpush1.msra.mxu0 0.0
    %2919 = vmatprep.subr.mxu0 0.0
    %2920 = vmatpush1.msra.mxu0 0.0
    %2921 = vmatprep.subr.mxu0 0.0
    %2922 = vmatpush1.msra.mxu0 0.0
    %2923 = vmatprep.subr.mxu0 0.0
    %2924 = vmatpush1.msra.mxu0 0.0
    %2925 = vmatprep.subr.mxu0 0.0
    %2926 = vmatpush1.msra.mxu0 0.0
    %2927 = vmatprep.subr.mxu0 0.0
    %2928 = vmatpush1.msra.mxu0 0.0
    %2929 = vmatprep.subr.mxu0 0.0
    %2930 = vmatpush1.msra.mxu0 0.0
    %2931 = vmatprep.subr.mxu0 0.0
    %2932 = vmatpush1.msra.mxu0 0.0
    %2933 = vmatprep.subr.mxu0 0.0
    %2934 = vmatpush1.msra.mxu0 0.0
    %2935 = vmatprep.subr.mxu0 0.0
    %2936 = vmatpush1.msra.mxu0 0.0
    %2937 = vmatprep.subr.mxu0 0.0
    %2938 = vmatpush1.msra.mxu0 0.0
    %2939 = vmatprep.subr.mxu0 0.0
    %2940 = vmatpush1.msra.mxu0 0.0
    %2941 = vmatprep.subr.mxu0 0.0
    %2942 = vmatpush1.msra.mxu0 0.0
    %2943 = vmatprep.subr.mxu0 0.0
    %2944 = vmatpush1.msra.mxu0 0.0
    %2945 = vmatprep.subr.mxu0 0.0
    %2946 = vmatpush1.msra.mxu0 0.0
    %2947 = vmatprep.subr.mxu0 0.0
    %2948 = vmatpush1.msra.mxu0 0.0
    %2949 = vmatprep.subr.mxu0 0.0
    %2950 = vmatpush1.msra.mxu0 0.0
    %2951 = vmatprep.subr.mxu0 0.0
    %2952 = vmatpush1.msra.mxu0 0.0
    %2953 = vmatprep.subr.mxu0 0.0
    %2954 = vmatpush1.msra.mxu0 0.0
    %2955 = vmatprep.mubr.f32.mxu0 0.0
    %2956 = vmatmul.mubr.f32.gmra.mrb[0].mxu0 %v2889
    %v2957 = vpop.f32.mrb[0].mxu0
    %v2958 = vadd.f32 0.0, %v2957
    %v2959 = vpop.f32.mrb[0].mxu0
    %2960 = vdwg.mxu0
    %s2961 = scalar_lea.vmem %s2, 48
    %v2962 = vld [vmem:[%s2961] sm:$0xff]
    %v2963 = vld [vmem:[%s2961 + $0x8] sm:$0xff]
    %v2965 = vsel %vm444, %v2885, 0
    %v2968 = vsel %vm444, %v2958, 0
    %2970 = vmatprep.subr.mxu0 0.0
    %2971 = vmatpush1.msra.mxu0 %v2962
    %2972 = vmatprep.subr.mxu0 0.0
    %2973 = vmatpush1.msra.mxu0 %v2963
    %2974 = vmatprep.subr.mxu0 0.0
    %2975 = vmatpush1.msra.mxu0 0.0
    %2976 = vmatprep.subr.mxu0 0.0
    %2977 = vmatpush1.msra.mxu0 0.0
    %2978 = vmatprep.subr.mxu0 0.0
    %2979 = vmatpush1.msra.mxu0 0.0
    %2980 = vmatprep.subr.mxu0 0.0
    %2981 = vmatpush1.msra.mxu0 0.0
    %2982 = vmatprep.subr.mxu0 0.0
    %2983 = vmatpush1.msra.mxu0 0.0
    %2984 = vmatprep.subr.mxu0 0.0
    %2985 = vmatpush1.msra.mxu0 0.0
    %2986 = vmatprep.subr.mxu0 0.0
    %2987 = vmatpush1.msra.mxu0 0.0
    %2988 = vmatprep.subr.mxu0 0.0
    %2989 = vmatpush1.msra.mxu0 0.0
    %2990 = vmatprep.subr.mxu0 0.0
    %2991 = vmatpush1.msra.mxu0 0.0
    %2992 = vmatprep.subr.mxu0 0.0
    %2993 = vmatpush1.msra.mxu0 0.0
    %2994 = vmatprep.subr.mxu0 0.0
    %2995 = vmatpush1.msra.mxu0 0.0
    %2996 = vmatprep.subr.mxu0 0.0
    %2997 = vmatpush1.msra.mxu0 0.0
    %2998 = vmatprep.subr.mxu0 0.0
    %2999 = vmatpush1.msra.mxu0 0.0
    %3000 = vmatprep.subr.mxu0 0.0
    %3001 = vmatpush1.msra.mxu0 0.0
    %3002 = vmatprep.subr.mxu0 0.0
    %3003 = vmatpush1.msra.mxu0 0.0
    %3004 = vmatprep.subr.mxu0 0.0
    %3005 = vmatpush1.msra.mxu0 0.0
    %3006 = vmatprep.subr.mxu0 0.0
    %3007 = vmatpush1.msra.mxu0 0.0
    %3008 = vmatprep.subr.mxu0 0.0
    %3009 = vmatpush1.msra.mxu0 0.0
    %3010 = vmatprep.subr.mxu0 0.0
    %3011 = vmatpush1.msra.mxu0 0.0
    %3012 = vmatprep.subr.mxu0 0.0
    %3013 = vmatpush1.msra.mxu0 0.0
    %3014 = vmatprep.subr.mxu0 0.0
    %3015 = vmatpush1.msra.mxu0 0.0
    %3016 = vmatprep.subr.mxu0 0.0
    %3017 = vmatpush1.msra.mxu0 0.0
    %3018 = vmatprep.subr.mxu0 0.0
    %3019 = vmatpush1.msra.mxu0 0.0
    %3020 = vmatprep.subr.mxu0 0.0
    %3021 = vmatpush1.msra.mxu0 0.0
    %3022 = vmatprep.subr.mxu0 0.0
    %3023 = vmatpush1.msra.mxu0 0.0
    %3024 = vmatprep.subr.mxu0 0.0
    %3025 = vmatpush1.msra.mxu0 0.0
    %3026 = vmatprep.subr.mxu0 0.0
    %3027 = vmatpush1.msra.mxu0 0.0
    %3028 = vmatprep.subr.mxu0 0.0
    %3029 = vmatpush1.msra.mxu0 0.0
    %3030 = vmatprep.subr.mxu0 0.0
    %3031 = vmatpush1.msra.mxu0 0.0
    %3032 = vmatprep.subr.mxu0 0.0
    %3033 = vmatpush1.msra.mxu0 0.0
    %3034 = vmatprep.mubr.f32.mxu0 0.0
    %3035 = vmatmul.mubr.f32.gmra.mrb[0].mxu0 %v2965
    %v3036 = vpop.f32.mrb[0].mxu0
    %v3037 = vadd.f32 0.0, %v3036
    %v3038 = vpop.f32.mrb[0].mxu0
    %3039 = vmatprep.mubr.f32.mxu0 0.0
    %3040 = vmatmul.mubr.f32.gmra.mrb[0].mxu0 %v2968
    %v3041 = vpop.f32.mrb[0].mxu0
    %v3042 = vadd.f32 0.0, %v3041
    %v3043 = vpop.f32.mrb[0].mxu0
    %3044 = vdwg.mxu0
    %v3046 = vsel %vm444, %v2309, 0
    %v3049 = vsel %vm444, %v2382, 0
    %3051 = vmatprep.subr.mxu0 0.0
    %3052 = vmatpush1.msra.mxu0 %v2386
    %3053 = vmatprep.subr.mxu0 0.0
    %3054 = vmatpush1.msra.mxu0 %v2387
    %3055 = vmatprep.subr.mxu0 0.0
    %3056 = vmatpush1.msra.mxu0 0.0
    %3057 = vmatprep.subr.mxu0 0.0
    %3058 = vmatpush1.msra.mxu0 0.0
    %3059 = vmatprep.subr.mxu0 0.0
    %3060 = vmatpush1.msra.mxu0 0.0
    %3061 = vmatprep.subr.mxu0 0.0
    %3062 = vmatpush1.msra.mxu0 0.0
    %3063 = vmatprep.subr.mxu0 0.0
    %3064 = vmatpush1.msra.mxu0 0.0
    %3065 = vmatprep.subr.mxu0 0.0
    %3066 = vmatpush1.msra.mxu0 0.0
    %3067 = vmatprep.subr.mxu0 0.0
    %3068 = vmatpush1.msra.mxu0 0.0
    %3069 = vmatprep.subr.mxu0 0.0
    %3070 = vmatpush1.msra.mxu0 0.0
    %3071 = vmatprep.subr.mxu0 0.0
    %3072 = vmatpush1.msra.mxu0 0.0
    %3073 = vmatprep.subr.mxu0 0.0
    %3074 = vmatpush1.msra.mxu0 0.0
    %3075 = vmatprep.subr.mxu0 0.0
    %3076 = vmatpush1.msra.mxu0 0.0
    %3077 = vmatprep.subr.mxu0 0.0
    %3078 = vmatpush1.msra.mxu0 0.0
    %3079 = vmatprep.subr.mxu0 0.0
    %3080 = vmatpush1.msra.mxu0 0.0
    %3081 = vmatprep.subr.mxu0 0.0
    %3082 = vmatpush1.msra.mxu0 0.0
    %3083 = vmatprep.subr.mxu0 0.0
    %3084 = vmatpush1.msra.mxu0 0.0
    %3085 = vmatprep.subr.mxu0 0.0
    %3086 = vmatpush1.msra.mxu0 0.0
    %3087 = vmatprep.subr.mxu0 0.0
    %3088 = vmatpush1.msra.mxu0 0.0
    %3089 = vmatprep.subr.mxu0 0.0
    %3090 = vmatpush1.msra.mxu0 0.0
    %3091 = vmatprep.subr.mxu0 0.0
    %3092 = vmatpush1.msra.mxu0 0.0
    %3093 = vmatprep.subr.mxu0 0.0
    %3094 = vmatpush1.msra.mxu0 0.0
    %3095 = vmatprep.subr.mxu0 0.0
    %3096 = vmatpush1.msra.mxu0 0.0
    %3097 = vmatprep.subr.mxu0 0.0
    %3098 = vmatpush1.msra.mxu0 0.0
    %3099 = vmatprep.subr.mxu0 0.0
    %3100 = vmatpush1.msra.mxu0 0.0
    %3101 = vmatprep.subr.mxu0 0.0
    %3102 = vmatpush1.msra.mxu0 0.0
    %3103 = vmatprep.subr.mxu0 0.0
    %3104 = vmatpush1.msra.mxu0 0.0
    %3105 = vmatprep.subr.mxu0 0.0
    %3106 = vmatpush1.msra.mxu0 0.0
    %3107 = vmatprep.subr.mxu0 0.0
    %3108 = vmatpush1.msra.mxu0 0.0
    %3109 = vmatprep.subr.mxu0 0.0
    %3110 = vmatpush1.msra.mxu0 0.0
    %3111 = vmatprep.subr.mxu0 0.0
    %3112 = vmatpush1.msra.mxu0 0.0
    %3113 = vmatprep.subr.mxu0 0.0
    %3114 = vmatpush1.msra.mxu0 0.0
    %3115 = vmatprep.mubr.f32.mxu0 0.0
    %3116 = vmatmul.mubr.f32.gmra.mrb[0].mxu0 %v3046
    %v3117 = vpop.f32.mrb[0].mxu0
    %v3118 = vadd.f32 %v3037, %v3117
    %v3119 = vpop.f32.mrb[0].mxu0
    %3120 = vmatprep.mubr.f32.mxu0 0.0
    %3121 = vmatmul.mubr.f32.gmra.mrb[0].mxu0 %v3049
    %v3122 = vpop.f32.mrb[0].mxu0
    %v3123 = vadd.f32 %v3042, %v3122
    %v3124 = vpop.f32.mrb[0].mxu0
    %3125 = vdwg.mxu0
    %v3126 = vadd.f32 %v1762, %v3118
    %v3127 = vadd.f32 %v1763, %v3123
    %v3128 = vlaneseq
    %v3129 = vshrl.u32 %v3128, 7
    %v3130 = vsub.s32 3, %v3129
    %v3131 = vrot.slane %v1765, %v3130
    %v3132 = vadd.f32 %v3126, %v3131
    %v3133 = vadd.f32 %v3127, %v3131
    %v3134 = vsel %vm148, %v3132, 0.0
    %3135 = vadd.xlane.f32.xlu0 %v3134
    %v3136 = vpop.xlane.xlu0 %3135
    %v3137 = vsel %vm148, %v3133, 0.0
    %3138 = vadd.xlane.f32.xlu0 %v3137
    %v3139 = vpop.xlane.xlu0 %3138
    %v3140 = vmul.f32 %v3136, %v155
    %v3141 = vmul.f32 %v3139, %v155
    %v3142 = vsub.f32 %v3132, %v3140
    %v3143 = vsub.f32 %v3133, %v3141
    %v3144 = vmul.f32 %v3142, %v3142
    %v3145 = vmul.f32 %v3143, %v3143
    %v3146 = vsel %vm148, %v3144, 0.0
    %3147 = vadd.xlane.f32.xlu0 %v3146
    %v3148 = vpop.xlane.xlu0 %3147
    %v3149 = vsel %vm148, %v3145, 0.0
    %3150 = vadd.xlane.f32.xlu0 %v3149
    %v3151 = vpop.xlane.xlu0 %3150
    %v3152 = vmul.f32 %v3148, %v155
    %v3153 = vmul.f32 %v3151, %v155
    %v3154 = vadd.f32 %v3152, 1e-05
    %v3155 = vadd.f32 %v3153, 1e-05
    %v3156 = vrsqrt.pop %v3154
    %v3157 = vrsqrt.pop %v3155
    %v3158 = vmul.f32 %v3142, %v3156
    %v3159 = vmul.f32 %v3143, %v3157
    %v3160 = vlaneseq
    %v3161 = vshrl.u32 %v3160, 7
    %v3162 = vsub.s32 4, %v3161
    %v3163 = vrot.slane %v1765, %v3162
    %v3164 = vmul.f32 %v3158, %v3163
    %v3165 = vmul.f32 %v3159, %v3163
    %v3166 = vlaneseq
    %v3167 = vshrl.u32 %v3166, 7
    %v3168 = vsub.s32 5, %v3167
    %v3169 = vrot.slane %v1765, %v3168
    %v3170 = vadd.f32 %v3164, %v3169
    %v3171 = vadd.f32 %v3165, %v3169
    %s3172 = scalar_lea.vmem %s3, 32
    %v3173 = vld [vmem:[%s3172] sm:$0xff]
    %v3174 = vld [vmem:[%s3172 + $0x8] sm:$0xff]
    %v3175 = vld [vmem:[%s3172 + $0x10] sm:$0xff]
    %v3176 = vld [vmem:[%s3172 + $0x18] sm:$0xff]
    %v3177 = vlaneseq
    %v3178 = vshrl.u32 %v3177, 7
    %v3179 = vsub.s32 6, %v3178
    %v3180 = vrot.slane %v1765, %v3179
    %v3182 = vsel %vm148, %v3170, 0
    %v3185 = vsel %vm148, %v3171, 0
    %3187 = vmatprep.subr.mxu0 0.0
    %3188 = vmatpush1.msra.mxu0 %v3173
    %3189 = vmatprep.subr.mxu0 0.0
    %3190 = vmatpush1.msra.mxu0 %v3174
    %3191 = vmatprep.subr.mxu0 0.0
    %3192 = vmatpush1.msra.mxu0 %v3175
    %3193 = vmatprep.subr.mxu0 0.0
    %3194 = vmatpush1.msra.mxu0 %v3176
    %3195 = vmatprep.subr.mxu0 0.0
    %3196 = vmatpush1.msra.mxu0 0.0
    %3197 = vmatprep.subr.mxu0 0.0
    %3198 = vmatpush1.msra.mxu0 0.0
    %3199 = vmatprep.subr.mxu0 0.0
    %3200 = vmatpush1.msra.mxu0 0.0
    %3201 = vmatprep.subr.mxu0 0.0
    %3202 = vmatpush1.msra.mxu0 0.0
    %3203 = vmatprep.subr.mxu0 0.0
    %3204 = vmatpush1.msra.mxu0 0.0
    %3205 = vmatprep.subr.mxu0 0.0
    %3206 = vmatpush1.msra.mxu0 0.0
    %3207 = vmatprep.subr.mxu0 0.0
    %3208 = vmatpush1.msra.mxu0 0.0
    %3209 = vmatprep.subr.mxu0 0.0
    %3210 = vmatpush1.msra.mxu0 0.0
    %3211 = vmatprep.subr.mxu0 0.0
    %3212 = vmatpush1.msra.mxu0 0.0
    %3213 = vmatprep.subr.mxu0 0.0
    %3214 = vmatpush1.msra.mxu0 0.0
    %3215 = vmatprep.subr.mxu0 0.0
    %3216 = vmatpush1.msra.mxu0 0.0
    %3217 = vmatprep.subr.mxu0 0.0
    %3218 = vmatpush1.msra.mxu0 0.0
    %3219 = vmatprep.subr.mxu0 0.0
    %3220 = vmatpush1.msra.mxu0 0.0
    %3221 = vmatprep.subr.mxu0 0.0
    %3222 = vmatpush1.msra.mxu0 0.0
    %3223 = vmatprep.subr.mxu0 0.0
    %3224 = vmatpush1.msra.mxu0 0.0
    %3225 = vmatprep.subr.mxu0 0.0
    %3226 = vmatpush1.msra.mxu0 0.0
    %3227 = vmatprep.subr.mxu0 0.0
    %3228 = vmatpush1.msra.mxu0 0.0
    %3229 = vmatprep.subr.mxu0 0.0
    %3230 = vmatpush1.msra.mxu0 0.0
    %3231 = vmatprep.subr.mxu0 0.0
    %3232 = vmatpush1.msra.mxu0 0.0
    %3233 = vmatprep.subr.mxu0 0.0
    %3234 = vmatpush1.msra.mxu0 0.0
    %3235 = vmatprep.subr.mxu0 0.0
    %3236 = vmatpush1.msra.mxu0 0.0
    %3237 = vmatprep.subr.mxu0 0.0
    %3238 = vmatpush1.msra.mxu0 0.0
    %3239 = vmatprep.subr.mxu0 0.0
    %3240 = vmatpush1.msra.mxu0 0.0
    %3241 = vmatprep.subr.mxu0 0.0
    %3242 = vmatpush1.msra.mxu0 0.0
    %3243 = vmatprep.subr.mxu0 0.0
    %3244 = vmatpush1.msra.mxu0 0.0
    %3245 = vmatprep.subr.mxu0 0.0
    %3246 = vmatpush1.msra.mxu0 0.0
    %3247 = vmatprep.subr.mxu0 0.0
    %3248 = vmatpush1.msra.mxu0 0.0
    %3249 = vmatprep.subr.mxu0 0.0
    %3250 = vmatpush1.msra.mxu0 0.0
    %3251 = vmatprep.mubr.f32.mxu0 0.0
    %3252 = vmatmul.mubr.f32.gmra.mrb[0].mxu0 %v3182
    %v3253 = vpop.f32.mrb[0].mxu0
    %v3254 = vadd.f32 %v3180, %v3253
    %v3255 = vpop.f32.mrb[0].mxu0
    %3256 = vmatprep.mubr.f32.mxu0 0.0
    %3257 = vmatmul.mubr.f32.gmra.mrb[0].mxu0 %v3185
    %v3258 = vpop.f32.mrb[0].mxu0
    %v3259 = vadd.f32 %v3180, %v3258
    %v3260 = vpop.f32.mrb[0].mxu0
    %3261 = vdwg.mxu0
    %v3262 = vmul.f32 %v3254, 0.5
    %v3263 = vmul.f32 %v3259, 0.5
    %v3264 = vmul.f32 %v3254, 0.044715
    %v3265 = vmul.f32 %v3259, 0.044715
    %v3266 = vmul.f32 %v3264, %v3254
    %v3267 = vmul.f32 %v3265, %v3259
    %v3268 = vmul.f32 %v3266, %v3254
    %v3269 = vmul.f32 %v3267, %v3259
    %v3270 = vadd.f32 %v3254, %v3268
    %v3271 = vadd.f32 %v3259, %v3269
    %v3272 = vmul.f32 %v3270, 0.7978846
    %v3273 = vmul.f32 %v3271, 0.7978846
    %v3274 = vtanh.pop %v3272
    %v3275 = vtanh.pop %v3273
    %v3276 = vadd.f32 %v3274, 1.0
    %v3277 = vadd.f32 %v3275, 1.0
    %v3278 = vmul.f32 %v3262, %v3276
    %v3279 = vmul.f32 %v3263, %v3277
    %s3280 = scalar_lea.vmem %s4, 128
    %v3281 = vld [vmem:[%s3280] sm:$0xff]
    %v3282 = vld [vmem:[%s3280 + $0x8] sm:$0xff]
    %v3283 = vld [vmem:[%s3280 + $0x10] sm:$0xff]
    %v3284 = vld [vmem:[%s3280 + $0x18] sm:$0xff]
    %v3285 = vld [vmem:[%s3280 + $0x20] sm:$0xff]
    %v3286 = vld [vmem:[%s3280 + $0x28] sm:$0xff]
    %v3287 = vld [vmem:[%s3280 + $0x30] sm:$0xff]
    %v3288 = vld [vmem:[%s3280 + $0x38] sm:$0xff]
    %v3289 = vld [vmem:[%s3280 + $0x40] sm:$0xff]
    %v3290 = vld [vmem:[%s3280 + $0x48] sm:$0xff]
    %v3291 = vld [vmem:[%s3280 + $0x50] sm:$0xff]
    %v3292 = vld [vmem:[%s3280 + $0x58] sm:$0xff]
    %v3293 = vld [vmem:[%s3280 + $0x60] sm:$0xff]
    %v3294 = vld [vmem:[%s3280 + $0x68] sm:$0xff]
    %v3295 = vld [vmem:[%s3280 + $0x70] sm:$0xff]
    %v3296 = vld [vmem:[%s3280 + $0x78] sm:$0xff]
    %3297 = vmatprep.subr.mxu0 0.0
    %3298 = vmatpush1.msra.mxu0 %v3281
    %3299 = vmatprep.subr.mxu0 0.0
    %3300 = vmatpush1.msra.mxu0 %v3282
    %3301 = vmatprep.subr.mxu0 0.0
    %3302 = vmatpush1.msra.mxu0 %v3283
    %3303 = vmatprep.subr.mxu0 0.0
    %3304 = vmatpush1.msra.mxu0 %v3284
    %3305 = vmatprep.subr.mxu0 0.0
    %3306 = vmatpush1.msra.mxu0 %v3285
    %3307 = vmatprep.subr.mxu0 0.0
    %3308 = vmatpush1.msra.mxu0 %v3286
    %3309 = vmatprep.subr.mxu0 0.0
    %3310 = vmatpush1.msra.mxu0 %v3287
    %3311 = vmatprep.subr.mxu0 0.0
    %3312 = vmatpush1.msra.mxu0 %v3288
    %3313 = vmatprep.subr.mxu0 0.0
    %3314 = vmatpush1.msra.mxu0 %v3289
    %3315 = vmatprep.subr.mxu0 0.0
    %3316 = vmatpush1.msra.mxu0 %v3290
    %3317 = vmatprep.subr.mxu0 0.0
    %3318 = vmatpush1.msra.mxu0 %v3291
    %3319 = vmatprep.subr.mxu0 0.0
    %3320 = vmatpush1.msra.mxu0 %v3292
    %3321 = vmatprep.subr.mxu0 0.0
    %3322 = vmatpush1.msra.mxu0 %v3293
    %3323 = vmatprep.subr.mxu0 0.0
    %3324 = vmatpush1.msra.mxu0 %v3294
    %3325 = vmatprep.subr.mxu0 0.0
    %3326 = vmatpush1.msra.mxu0 %v3295
    %3327 = vmatprep.subr.mxu0 0.0
    %3328 = vmatpush1.msra.mxu0 %v3296
    %3329 = vmatprep.subr.mxu0 0.0
    %3330 = vmatpush1.msra.mxu0 0.0
    %3331 = vmatprep.subr.mxu0 0.0
    %3332 = vmatpush1.msra.mxu0 0.0
    %3333 = vmatprep.subr.mxu0 0.0
    %3334 = vmatpush1.msra.mxu0 0.0
    %3335 = vmatprep.subr.mxu0 0.0
    %3336 = vmatpush1.msra.mxu0 0.0
    %3337 = vmatprep.subr.mxu0 0.0
    %3338 = vmatpush1.msra.mxu0 0.0
    %3339 = vmatprep.subr.mxu0 0.0
    %3340 = vmatpush1.msra.mxu0 0.0
    %3341 = vmatprep.subr.mxu0 0.0
    %3342 = vmatpush1.msra.mxu0 0.0
    %3343 = vmatprep.subr.mxu0 0.0
    %3344 = vmatpush1.msra.mxu0 0.0
    %3345 = vmatprep.subr.mxu0 0.0
    %3346 = vmatpush1.msra.mxu0 0.0
    %3347 = vmatprep.subr.mxu0 0.0
    %3348 = vmatpush1.msra.mxu0 0.0
    %3349 = vmatprep.subr.mxu0 0.0
    %3350 = vmatpush1.msra.mxu0 0.0
    %3351 = vmatprep.subr.mxu0 0.0
    %3352 = vmatpush1.msra.mxu0 0.0
    %3353 = vmatprep.subr.mxu0 0.0
    %3354 = vmatpush1.msra.mxu0 0.0
    %3355 = vmatprep.subr.mxu0 0.0
    %3356 = vmatpush1.msra.mxu0 0.0
    %3357 = vmatprep.subr.mxu0 0.0
    %3358 = vmatpush1.msra.mxu0 0.0
    %3359 = vmatprep.subr.mxu0 0.0
    %3360 = vmatpush1.msra.mxu0 0.0
    %3361 = vmatprep.mubr.f32.mxu0 0.0
    %3362 = vmatmul.mubr.f32.gmra.mrb[0].mxu0 %v3278
    %v3363 = vpop.f32.mrb[0].mxu0
    %v3364 = vadd.f32 0.0, %v3363
    %v3365 = vpop.f32.mrb[0].mxu0
    %3366 = vmatprep.mubr.f32.mxu0 0.0
    %3367 = vmatmul.mubr.f32.gmra.mrb[0].mxu0 %v3279
    %v3368 = vpop.f32.mrb[0].mxu0
    %v3369 = vadd.f32 0.0, %v3368
    %v3370 = vpop.f32.mrb[0].mxu0
    %3371 = vdwg.mxu0
    %v3372 = vadd.f32 %v3132, %v3364
    %v3373 = vadd.f32 %v3133, %v3369
    %v3374 = vlaneseq
    %v3375 = vshrl.u32 %v3374, 7
    %v3376 = vsub.s32 7, %v3375
    %v3377 = vrot.slane %v1765, %v3376
    %v3378 = vadd.f32 %v3372, %v3377
    %v3379 = vadd.f32 %v3373, %v3377
    %v3381 = vrot.slane %v3378, 7
    %v3384 = vrot.slane %v3379, 6
    %vm3386 = vcmask 1040384
    %v3387 = vsel %vm3386, %v3381, %v3384
    %v3388 = vld [vmem:[%s6] sm:$0x1]
    %v3389 = vld [vmem:[%s6 + $0x1] sm:$0x1]
    %vm3390 = vcmask 254976
    %v3391 = vsel %vm3390, %v3387, 0.0
    %3392 = vadd.xlane.f32.xlu0 %v3391
    %v3393 = vpop.xlane.xlu0 %3392
    %v3394 = vmul.f32 %v3393, %v155
    %v3395 = vsub.f32 %v3387, %v3394
    %v3396 = vmul.f32 %v3395, %v3395
    %v3397 = vsel %vm3390, %v3396, 0.0
    %3398 = vadd.xlane.f32.xlu0 %v3397
    %v3399 = vpop.xlane.xlu0 %3398
    %v3400 = vmul.f32 %v3399, %v155
    %v3401 = vadd.f32 %v3400, 1e-05
    %v3402 = vrsqrt.pop %v3401
    %v3403 = vmul.f32 %v3395, %v3402
    %v3404 = vlaneseq
    %v3405 = vshrl.u32 %v3404, 7
    %v3406 = vsub.s32 0, %v3405
    %v3407 = vrot.slane %v3388, %v3406
    %v3408 = vmul.f32 %v3403, %v3407
    %v3409 = vlaneseq
    %v3410 = vshrl.u32 %v3409, 7
    %v3411 = vsub.s32 0, %v3410
    %v3412 = vrot.slane %v3389, %v3411
    %v3413 = vadd.f32 %v3408, %v3412
    %v3414 = vld [vmem:[%s8] sm:$0xff]
    %v3415 = vld [vmem:[%s8 + $0x8] sm:$0xff]
    %v3416 = vld [vmem:[%s8 + $0x10] sm:$0xff]
    %v3417 = vld [vmem:[%s8 + $0x18] sm:$0xff]
    %v3419 = vsel %vm148, %v3413, 0
    %3421 = vmatprep.subr.mxu0 0.0
    %3422 = vmatpush1.msra.mxu0 %v3414
    %3423 = vmatprep.subr.mxu0 0.0
    %3424 = vmatpush1.msra.mxu0 %v3415
    %3425 = vmatprep.subr.mxu0 0.0
    %3426 = vmatpush1.msra.mxu0 %v3416
    %3427 = vmatprep.subr.mxu0 0.0
    %3428 = vmatpush1.msra.mxu0 %v3417
    %3429 = vmatprep.subr.mxu0 0.0
    %3430 = vmatpush1.msra.mxu0 0.0
    %3431 = vmatprep.subr.mxu0 0.0
    %3432 = vmatpush1.msra.mxu0 0.0
    %3433 = vmatprep.subr.mxu0 0.0
    %3434 = vmatpush1.msra.mxu0 0.0
    %3435 = vmatprep.subr.mxu0 0.0
    %3436 = vmatpush1.msra.mxu0 0.0
    %3437 = vmatprep.subr.mxu0 0.0
    %3438 = vmatpush1.msra.mxu0 0.0
    %3439 = vmatprep.subr.mxu0 0.0
    %3440 = vmatpush1.msra.mxu0 0.0
    %3441 = vmatprep.subr.mxu0 0.0
    %3442 = vmatpush1.msra.mxu0 0.0
    %3443 = vmatprep.subr.mxu0 0.0
    %3444 = vmatpush1.msra.mxu0 0.0
    %3445 = vmatprep.subr.mxu0 0.0
    %3446 = vmatpush1.msra.mxu0 0.0
    %3447 = vmatprep.subr.mxu0 0.0
    %3448 = vmatpush1.msra.mxu0 0.0
    %3449 = vmatprep.subr.mxu0 0.0
    %3450 = vmatpush1.msra.mxu0 0.0
    %3451 = vmatprep.subr.mxu0 0.0
    %3452 = vmatpush1.msra.mxu0 0.0
    %3453 = vmatprep.subr.mxu0 0.0
    %3454 = vmatpush1.msra.mxu0 0.0
    %3455 = vmatprep.subr.mxu0 0.0
    %3456 = vmatpush1.msra.mxu0 0.0
    %3457 = vmatprep.subr.mxu0 0.0
    %3458 = vmatpush1.msra.mxu0 0.0
    %3459 = vmatprep.subr.mxu0 0.0
    %3460 = vmatpush1.msra.mxu0 0.0
    %3461 = vmatprep.subr.mxu0 0.0
    %3462 = vmatpush1.msra.mxu0 0.0
    %3463 = vmatprep.subr.mxu0 0.0
    %3464 = vmatpush1.msra.mxu0 0.0
    %3465 = vmatprep.subr.mxu0 0.0
    %3466 = vmatpush1.msra.mxu0 0.0
    %3467 = vmatprep.subr.mxu0 0.0
    %3468 = vmatpush1.msra.mxu0 0.0
    %3469 = vmatprep.subr.mxu0 0.0
    %3470 = vmatpush1.msra.mxu0 0.0
    %3471 = vmatprep.subr.mxu0 0.0
    %3472 = vmatpush1.msra.mxu0 0.0
    %3473 = vmatprep.subr.mxu0 0.0
    %3474 = vmatpush1.msra.mxu0 0.0
    %3475 = vmatprep.subr.mxu0 0.0
    %3476 = vmatpush1.msra.mxu0 0.0
    %3477 = vmatprep.subr.mxu0 0.0
    %3478 = vmatpush1.msra.mxu0 0.0
    %3479 = vmatprep.subr.mxu0 0.0
    %3480 = vmatpush1.msra.mxu0 0.0
    %3481 = vmatprep.subr.mxu0 0.0
    %3482 = vmatpush1.msra.mxu0 0.0
    %3483 = vmatprep.subr.mxu0 0.0
    %3484 = vmatpush1.msra.mxu0 0.0
    %3485 = vmatprep.mubr.f32.mxu0 0.0
    %3486 = vmatmul.mubr.f32.gmra.mrb[0].mxu0 %v3419
    %v3487 = vpop.f32.mrb[0].mxu0
    %v3488 = vadd.f32 0.0, %v3487
    %v3489 = vpop.f32.mrb[0].mxu0
    %3490 = vdwg.mxu0
    %3491 = vst [vmem:[#allocation2] sm:$0x3] %v3488
    // Predicated region
    $region42: #{gpt_forward.1} parent=1 // pred_check
      _
    $region43: #{gpt_forward.1} parent=1 // pred_check_branch
      %3493 = sbr.rel (0) target = $region45
    $region44: #{gpt_forward.1} parent=1 // pred_region
      %s3495 = ssub.s32 32, 32
      %3496 = vsyncadd [#allocation3], %s3495
      %s3498 = sshll.u32 [#allocation2], 4
      %s3499 = int_to_ptr.vmem [resolvable:$true] %s3498
      %3501 = dma.vmem_to_hbm [thread:$0]  %s3499, 32, %s10, [#allocation3]
    $region45: #{gpt_forward.1} parent=1 // pred_fallthru
      _
    // Predicated region
    $region46: #{gpt_forward.1} parent=1 // pred_check
      _
    $region47: #{gpt_forward.1} parent=1 // pred_check_branch
      %3503 = sbr.rel (0) target = $region49
    $region48: #{gpt_forward.1} parent=1 // pred_region
      %3504 = dma.done [#allocation3], 32
    $region49: #{gpt_forward.1} parent=1 // pred_fallthru
      _
    %3505 = vsyncpa [#allocation3], 1

</llo_original>
